<compile_context>
chip_gen: v7x
topology: tpu7x:2x2x1
jax: 0.10.0
libtpu: 0.0.40
codegen_flags: <defaults>
</compile_context>

<pallas_src>
import jax
import jax.numpy as jnp
from jax import lax
from jax.experimental import pallas as pl
from jax.experimental.pallas import tpu as pltpu


# ------------------------------ fused kernel --------------------------------

def _make_fused_kernel(num_layers):
    n_upper = num_layers - 1

    def kernel(*refs):
        (rid_ref, rval_ref, uid_ref, ufeat_ref,
         gx_tab_ref, gx_val_ref, gx_b_ref, whh0_ref) = refs[:8]
        idx = 8
        upper_refs = [refs[idx + 2 * l: idx + 2 * l + 2] for l in range(n_upper)]
        idx += 2 * n_upper
        rw1_ref, rb1_ref, rw2_ref, rb2_ref = refs[idx:idx + 4]; idx += 4
        u_tab_ref, uw1f_ref, ub1_ref, uw2_ref, ub2_ref = refs[idx:idx + 5]; idx += 5
        ew1u_ref, ew1r_ref, eb1_ref, ew2_ref, eb2_ref = refs[idx:idx + 5]; idx += 5
        out_ref = refs[idx]

        f32 = jnp.float32
        T, Bb = rid_ref.shape
        NE = gx_tab_ref.shape[0]
        H = whh0_ref.shape[0]
        H4 = 4 * H

        # ---- RatingsEmbedder (id gather + value projection) folded with the
        #      LSTM layer-0 input matmul: one-hot @ fused [NE, 4H] table gives
        #      the hoisted layer-0 gate pre-activations, time-major rows.
        ids = rid_ref[...]                                          # [T, Bb] int32
        onehot = (lax.broadcasted_iota(jnp.int32, (T, Bb, NE), 2)
                  == ids[:, :, None]).astype(f32)                   # [T, Bb, NE]
        gx0 = jnp.dot(onehot.reshape(T * Bb, NE), gx_tab_ref[...],
                      preferred_element_type=f32)                   # [T*Bb, 4H]
        vals = rval_ref[...][:, :, None]                            # [T, Bb, 1]
        gx0 = (gx0
               + (vals * gx_val_ref[...].reshape(1, 1, H4)).reshape(T * Bb, H4)
               + gx_b_ref[...])

        whh0 = whh0_ref[...]
        wcombs = [w_ref[...] for (w_ref, _) in upper_refs]          # [2H, 4H]
        bups = [b_ref[...] for (_, b_ref) in upper_refs]            # [1, 4H]

        # Gate order after host-side reorder is (i, f, o, g): one contiguous
        # sigmoid slab [0:3H], tanh on [3H:4H].
        def cell(gates, c_prev):
            sig = jax.nn.sigmoid(gates[:, :3 * H])
            g = jnp.tanh(gates[:, 3 * H:])
            c_new = sig[:, H:2 * H] * c_prev + sig[:, :H] * g
            h_new = sig[:, 2 * H:] * jnp.tanh(c_new)
            return h_new, c_new

        # ---- LSTM stack, wavefront order (step-major, fully unrolled, T and
        #      num_layers are static).  Hidden/cell state stays in registers;
        #      no VMEM sequence scratch and no intermediate-layer writeback.
        zero = jnp.zeros((Bb, H), f32)
        h = [zero] * num_layers
        c = [zero] * num_layers
        for t in range(T):
            gates0 = (gx0[t * Bb:(t + 1) * Bb, :]                   # contiguous rows
                      + jnp.dot(h[0], whh0, preferred_element_type=f32))
            h[0], c[0] = cell(gates0, c[0])
            for l in range(1, num_layers):
                xin = jnp.concatenate([h[l - 1], h[l]], axis=-1)    # [Bb, 2H]
                gates = (jnp.dot(xin, wcombs[l - 1], preferred_element_type=f32)
                         + bups[l - 1])
                h[l], c[l] = cell(gates, c[l])
        h_last = h[num_layers - 1]                                  # [Bb, H]

        # ---- ratings MLP: Linear -> ReLU -> Linear
        rh = jnp.maximum(jnp.dot(h_last, rw1_ref[...],
                                 preferred_element_type=f32) + rb1_ref[...], 0.0)
        ratings_embedding = (jnp.dot(rh, rw2_ref[...],
                                     preferred_element_type=f32) + rb2_ref[...])

        # ---- UserEmbedder: embedding gather folded with the first MLP layer.
        uoh = (lax.broadcasted_iota(jnp.int32, (Bb, u_tab_ref.shape[0]), 1)
               == uid_ref[...]).astype(f32)                         # [Bb, NEu]
        uh = jnp.maximum(
            jnp.dot(uoh, u_tab_ref[...], preferred_element_type=f32)
            + jnp.dot(ufeat_ref[...], uw1f_ref[...], preferred_element_type=f32)
            + ub1_ref[...], 0.0)
        user_embedding = (jnp.dot(uh, uw2_ref[...],
                                  preferred_element_type=f32) + ub2_ref[...])

        # ---- experts: concat([user_emb, ratings_emb]) @ W1 as a split matmul.
        eh = jnp.maximum(
            jnp.dot(user_embedding, ew1u_ref[...], preferred_element_type=f32)
            + jnp.dot(ratings_embedding, ew1r_ref[...], preferred_element_type=f32)
            + eb1_ref[...], 0.0)
        out_ref[...] = (jnp.dot(eh, ew2_ref[...], preferred_element_type=f32)
                        + eb2_ref[...]).astype(out_ref.dtype)

    return kernel


# ---------------------- host-side parameter fusion ---------------------------

def _reorder_gates(m, H):
    # PyTorch LSTM gate column order (i, f, g, o) -> kernel order (i, f, o, g)
    return jnp.concatenate([m[:, :2 * H], m[:, 3 * H:], m[:, 2 * H:3 * H]], axis=-1)


def _fuse_params(p):
    """Fold embedding/projection/bias structure into the flat kernel weights."""
    H = p["r_lstm"][0][1].shape[0]
    E = p["r_emb"].shape[1]
    proj_w, proj_b = p["r_proj_w"], p["r_proj_b"]

    wih0, whh0, bih0, bhh0 = p["r_lstm"][0]
    wih0r = _reorder_gates(wih0, H)
    whh0r = _reorder_gates(whh0, H)
    # gx0 = onehot @ (emb @ projW[:E] @ Wih0) + val * (projW[E] @ Wih0)
    #       + (projB @ Wih0 + bih0 + bhh0)
    gx_tab = p["r_emb"] @ (proj_w[:E] @ wih0r)                 # [NE, 4H]
    gx_val = proj_w[E:E + 1] @ wih0r                           # [1, 4H]
    gx_b = proj_b @ wih0r + _reorder_gates(bih0 + bhh0, H)     # [1, 4H]

    weights = [gx_tab, gx_val, gx_b, whh0r]
    for (wih, whh, bih, bhh) in p["r_lstm"][1:]:
        wcomb = jnp.concatenate([_reorder_gates(wih, H),
                                 _reorder_gates(whh, H)], axis=0)   # [2H, 4H]
        weights.append(wcomb)
        weights.append(_reorder_gates(bih + bhh, H))                # [1, 4H]

    weights.extend(p["r_mlp"])                                      # rw1, rb1, rw2, rb2

    Eu = p["u_emb"].shape[1]
    uw1, ub1, uw2, ub2 = p["u_mlp"]
    weights.extend([p["u_emb"] @ uw1[:Eu],                          # fused user table
                    uw1[Eu:], ub1, uw2, ub2])

    uo = uw2.shape[1]
    ew1, eb1, ew2, eb2 = p["e_mlp"]
    weights.extend([ew1[:uo], ew1[uo:], eb1, ew2, eb2])             # split expert W1
    return weights


# ------------------------------ forward wrapper ------------------------------

def recommender2_forward(params, ratings_tensor, user_tensor, block_b=None):
    B, T, _ = ratings_tensor.shape
    num_layers = len(params["r_lstm"])
    out_dim = params["e_mlp"][2].shape[1]

    weights = _fuse_params(params)

    # Pre-split + time-major transpose (free in surrounding XLA); jnp.round
    # instead of +0.5 truncation so fractionally perturbed ids still map right.
    r_ids = jnp.round(ratings_tensor[:, :, 0]).astype(jnp.int32).T      # [T, B]
    r_vals = ratings_tensor[:, :, 1].astype(jnp.float32).T              # [T, B]
    u_ids = jnp.round(user_tensor[:, 0:1]).astype(jnp.int32)            # [B, 1]
    u_feat = user_tensor[:, 1:].astype(jnp.float32)                     # [B, Du]

    if block_b is None:
        # 256 rows fill the v6e/v7x MXU; pass 128 on v5e, or a smaller block
        # so grid >= 2 when both v7x TensorCores should share the batch.
        block_b = B if B <= 256 else 256
    grid = (pl.cdiv(B, block_b),)
    # NOTE: when B % block_b != 0 the padded tail rows run the id compare /
    # matmuls on stale block data; those rows are dropped on writeback, so the
    # result for valid rows is unaffected.

    in_specs = [
        pl.BlockSpec((T, block_b), lambda i: (0, i)),                   # r_ids  [T, B]
        pl.BlockSpec((T, block_b), lambda i: (0, i)),                   # r_vals [T, B]
        pl.BlockSpec((block_b, 1), lambda i: (i, 0)),                   # u_ids  [B, 1]
        pl.BlockSpec((block_b, u_feat.shape[1]), lambda i: (i, 0)),     # u_feat [B, Du]
    ] + [pl.BlockSpec(w.shape, lambda i: (0, 0)) for w in weights]      # weights resident

    return pl.pallas_call(
        _make_fused_kernel(num_layers),
        out_shape=jax.ShapeDtypeStruct((B, out_dim), jnp.float32),
        grid=grid,
        in_specs=in_specs,
        out_specs=pl.BlockSpec((block_b, out_dim), lambda i: (i, 0)),
        compiler_params=pltpu.CompilerParams(dimension_semantics=("parallel",)),
    )(r_ids, r_vals, u_ids, u_feat, *weights)


# --------------------------- parameter construction --------------------------

def _init_linear(key, fan_in, fan_out, bound=None):
    k1, k2 = jax.random.split(key)
    if bound is None:
        bound = 1.0 / (fan_in ** 0.5)
    w = jax.random.uniform(k1, (fan_in, fan_out), jnp.float32, -bound, bound)
    b = jax.random.uniform(k2, (1, fan_out), jnp.float32, -bound, bound)
    return w, b


def init_params(key, cfg):
    """PyTorch-layout parameters (gate order i,f,g,o; separate bih/bhh)."""
    ks = iter(jax.random.split(key, 64))
    p = {}

    # --- RatingsEmbedder ---
    E = cfg["ratings_embedding_dim"]
    H = cfg["ratings_lstm_hidden_size"]
    W = cfg["ratings_word_size"]
    p["r_emb"] = jax.random.normal(next(ks), (cfg["ratings_num_embeddings"], E), jnp.float32)
    p["r_proj_w"], p["r_proj_b"] = _init_linear(next(ks), E + 1, W)
    lstm = []
    lstm_bound = 1.0 / (H ** 0.5)                 # PyTorch nn.LSTM init bound
    for layer in range(cfg["ratings_lstm_num_layers"]):
        d_in = W if layer == 0 else H
        wih, bih = _init_linear(next(ks), d_in, 4 * H, bound=lstm_bound)
        whh, bhh = _init_linear(next(ks), H, 4 * H, bound=lstm_bound)
        lstm.append((wih, whh, bih, bhh))
    p["r_lstm"] = lstm
    hid = H * cfg["ratings_final_mlp_factor"]
    w1, b1 = _init_linear(next(ks), H, hid)
    w2, b2 = _init_linear(next(ks), hid, cfg["ratings_embedding_output"])
    p["r_mlp"] = (w1, b1, w2, b2)

    # --- UserEmbedder ---
    Eu = cfg["user_embedding_dim"]
    p["u_emb"] = jax.random.normal(next(ks), (cfg["user_num_embeddings"], Eu), jnp.float32)
    u_in = Eu + cfg["user_data_input_dim"]
    u_hid = u_in * cfg["user_factor"]
    w1, b1 = _init_linear(next(ks), u_in, u_hid)
    w2, b2 = _init_linear(next(ks), u_hid, cfg["user_embedding_output"])
    p["u_mlp"] = (w1, b1, w2, b2)

    # --- experts (VeryBasicMLP) ---
    e_in = cfg["ratings_embedding_output"] + cfg["user_embedding_output"]
    e_hid = e_in * cfg["expert_factor"]
    w1, b1 = _init_linear(next(ks), e_in, e_hid)
    w2, b2 = _init_linear(next(ks), e_hid, cfg["final_output_size"])
    p["e_mlp"] = (w1, b1, w2, b2)
    return p


# ------------------------------ pure-JAX reference ---------------------------

def _reference_forward(p, ratings, user):
    f32 = jnp.float32
    B, T, _ = ratings.shape
    H = p["r_lstm"][0][1].shape[0]
    ids = jnp.round(ratings[:, :, 0]).astype(jnp.int32)
    vals = ratings[:, :, 1:2]
    emb = p["r_emb"][ids]                                            # [B, T, E]
    x = jnp.concatenate([emb, vals], axis=-1) @ p["r_proj_w"] + p["r_proj_b"]
    inp = x
    h = jnp.zeros((B, H), f32)
    for (wih, whh, bih, bhh) in p["r_lstm"]:
        h = jnp.zeros((B, H), f32)
        c = jnp.zeros((B, H), f32)
        outs = []
        for t in range(T):
            g = inp[:, t, :] @ wih + bih + h @ whh + bhh
            i_, f_, g_, o_ = jnp.split(g, 4, axis=-1)
            c = jax.nn.sigmoid(f_) * c + jax.nn.sigmoid(i_) * jnp.tanh(g_)
            h = jax.nn.sigmoid(o_) * jnp.tanh(c)
            outs.append(h)
        inp = jnp.stack(outs, axis=1)
    rw1, rb1, rw2, rb2 = p["r_mlp"]
    r_out = jnp.maximum(h @ rw1 + rb1, 0.0) @ rw2 + rb2
    uid = jnp.round(user[:, 0]).astype(jnp.int32)
    uw1, ub1, uw2, ub2 = p["u_mlp"]
    u_in = jnp.concatenate([p["u_emb"][uid], user[:, 1:]], axis=-1)
    u_out = jnp.maximum(u_in @ uw1 + ub1, 0.0) @ uw2 + ub2
    ew1, eb1, ew2, eb2 = p["e_mlp"]
    xcat = jnp.concatenate([u_out, r_out], axis=-1)
    return jnp.maximum(xcat @ ew1 + eb1, 0.0) @ ew2 + eb2


# ------------------------------------ main -----------------------------------

if __name__ == "__main__":
    cfg = dict(
        ratings_num_embeddings=50,
        ratings_embedding_dim=15,
        ratings_num_ratings=8,
        ratings_lstm_hidden_size=32,
        ratings_lstm_num_layers=2,
        ratings_word_size=16,
        ratings_final_mlp_factor=2,
        ratings_embedding_output=32,
        user_num_embeddings=20,
        user_embedding_dim=16,
        user_embedding_output=32,
        user_data_input_dim=8,
        user_factor=2,
        final_output_size=8,
        expert_factor=2,
    )
    key = jax.random.PRNGKey(0)
    k_param, k_rid, k_rval, k_uid, k_ufeat = jax.random.split(key, 5)
    params = init_params(k_param, cfg)

    B, T = 2, cfg["ratings_num_ratings"]
    r_ids = jax.random.randint(k_rid, (B, T), 0, cfg["ratings_num_embeddings"]).astype(jnp.float32)
    r_vals = jax.random.uniform(k_rval, (B, T), jnp.float32, 0.0, 5.0)
    ratings_tensor = jnp.stack([r_ids, r_vals], axis=-1)             # [2, 8, 2]

    u_ids = jax.random.randint(k_uid, (B, 1), 0, cfg["user_num_embeddings"]).astype(jnp.float32)
    u_feat = jax.random.normal(k_ufeat, (B, cfg["user_data_input_dim"]), jnp.float32)
    user_tensor = jnp.concatenate([u_ids, u_feat], axis=-1)          # [2, 9]

    out = recommender2_forward(params, ratings_tensor, user_tensor)
    out = jax.block_until_ready(out)
    assert out.shape == (B, cfg["final_output_size"])

    ref = _reference_forward(params, ratings_tensor, user_tensor)
    assert bool(jnp.allclose(out, ref, atol=1e-3, rtol=1e-3)), "kernel/reference mismatch"
    print("KERNEL_OK")
</pallas_src>

<mosaic_0001>
module attributes {stable_mosaic.version = 11 : i64} {
  func.func @kernel(%arg0: i32, %arg1: memref<8x2xi32, #tpu.memory_space<vmem>>, %arg2: memref<8x2xf32, #tpu.memory_space<vmem>>, %arg3: memref<2x1xi32, #tpu.memory_space<vmem>>, %arg4: memref<2x8xf32, #tpu.memory_space<vmem>>, %arg5: memref<50x128xf32, #tpu.memory_space<vmem>>, %arg6: memref<1x128xf32, #tpu.memory_space<vmem>>, %arg7: memref<1x128xf32, #tpu.memory_space<vmem>>, %arg8: memref<32x128xf32, #tpu.memory_space<vmem>>, %arg9: memref<64x128xf32, #tpu.memory_space<vmem>>, %arg10: memref<1x128xf32, #tpu.memory_space<vmem>>, %arg11: memref<32x64xf32, #tpu.memory_space<vmem>>, %arg12: memref<1x64xf32, #tpu.memory_space<vmem>>, %arg13: memref<64x32xf32, #tpu.memory_space<vmem>>, %arg14: memref<1x32xf32, #tpu.memory_space<vmem>>, %arg15: memref<20x48xf32, #tpu.memory_space<vmem>>, %arg16: memref<8x48xf32, #tpu.memory_space<vmem>>, %arg17: memref<1x48xf32, #tpu.memory_space<vmem>>, %arg18: memref<48x32xf32, #tpu.memory_space<vmem>>, %arg19: memref<1x32xf32, #tpu.memory_space<vmem>>, %arg20: memref<32x128xf32, #tpu.memory_space<vmem>>, %arg21: memref<32x128xf32, #tpu.memory_space<vmem>>, %arg22: memref<1x128xf32, #tpu.memory_space<vmem>>, %arg23: memref<128x8xf32, #tpu.memory_space<vmem>>, %arg24: memref<1x8xf32, #tpu.memory_space<vmem>>, %arg25: memref<2x8xf32, #tpu.memory_space<vmem>>) attributes {dimension_semantics = [#tpu.dimension_semantics<parallel>], iteration_bounds = array<i64: 1>, scalar_prefetch = 0 : i64, scratch_operands = 0 : i64, tpu.core_type = #tpu.core_type<tc>, window_params = [{transform_indices = @transform_0, window_bounds = array<i64: 8, 2>}, {transform_indices = @transform_1, window_bounds = array<i64: 8, 2>}, {transform_indices = @transform_2, window_bounds = array<i64: 2, 1>}, {transform_indices = @transform_3, window_bounds = array<i64: 2, 8>}, {pipeline_mode = #tpu.pipeline_mode<synchronous>, transform_indices = @transform_4, window_bounds = array<i64: 50, 128>}, {pipeline_mode = #tpu.pipeline_mode<synchronous>, transform_indices = @transform_5, window_bounds = array<i64: 1, 128>}, {pipeline_mode = #tpu.pipeline_mode<synchronous>, transform_indices = @transform_6, window_bounds = array<i64: 1, 128>}, {pipeline_mode = #tpu.pipeline_mode<synchronous>, transform_indices = @transform_7, window_bounds = array<i64: 32, 128>}, {pipeline_mode = #tpu.pipeline_mode<synchronous>, transform_indices = @transform_8, window_bounds = array<i64: 64, 128>}, {pipeline_mode = #tpu.pipeline_mode<synchronous>, transform_indices = @transform_9, window_bounds = array<i64: 1, 128>}, {pipeline_mode = #tpu.pipeline_mode<synchronous>, transform_indices = @transform_10, window_bounds = array<i64: 32, 64>}, {pipeline_mode = #tpu.pipeline_mode<synchronous>, transform_indices = @transform_11, window_bounds = array<i64: 1, 64>}, {pipeline_mode = #tpu.pipeline_mode<synchronous>, transform_indices = @transform_12, window_bounds = array<i64: 64, 32>}, {pipeline_mode = #tpu.pipeline_mode<synchronous>, transform_indices = @transform_13, window_bounds = array<i64: 1, 32>}, {pipeline_mode = #tpu.pipeline_mode<synchronous>, transform_indices = @transform_14, window_bounds = array<i64: 20, 48>}, {pipeline_mode = #tpu.pipeline_mode<synchronous>, transform_indices = @transform_15, window_bounds = array<i64: 8, 48>}, {pipeline_mode = #tpu.pipeline_mode<synchronous>, transform_indices = @transform_16, window_bounds = array<i64: 1, 48>}, {pipeline_mode = #tpu.pipeline_mode<synchronous>, transform_indices = @transform_17, window_bounds = array<i64: 48, 32>}, {pipeline_mode = #tpu.pipeline_mode<synchronous>, transform_indices = @transform_18, window_bounds = array<i64: 1, 32>}, {pipeline_mode = #tpu.pipeline_mode<synchronous>, transform_indices = @transform_19, window_bounds = array<i64: 32, 128>}, {pipeline_mode = #tpu.pipeline_mode<synchronous>, transform_indices = @transform_20, window_bounds = array<i64: 32, 128>}, {pipeline_mode = #tpu.pipeline_mode<synchronous>, transform_indices = @transform_21, window_bounds = array<i64: 1, 128>}, {pipeline_mode = #tpu.pipeline_mode<synchronous>, transform_indices = @transform_22, window_bounds = array<i64: 128, 8>}, {pipeline_mode = #tpu.pipeline_mode<synchronous>, transform_indices = @transform_23, window_bounds = array<i64: 1, 8>}, {transform_indices = @transform_24, window_bounds = array<i64: 2, 8>}]} {
    %c0 = arith.constant 0 : index
    %c0_0 = arith.constant 0 : index
    %0 = vector.load %arg1[%c0, %c0_0] : memref<8x2xi32, #tpu.memory_space<vmem>>, vector<8x2xi32>
    %1 = tpu.iota {dimensions = array<i32: 2>} : vector<8x2x50xi32>
    %2 = vector.shape_cast %0 : vector<8x2xi32> to vector<8x2x1xi32>
    %3 = vector.broadcast %2 : vector<8x2x1xi32> to vector<8x2x50xi32>
    %4 = arith.cmpi eq, %1, %3 : vector<8x2x50xi32>
    %5 = arith.extui %4 : vector<8x2x50xi1> to vector<8x2x50xi32>
    %6 = arith.sitofp %5 : vector<8x2x50xi32> to vector<8x2x50xf32>
    %7 = vector.shape_cast %6 : vector<8x2x50xf32> to vector<16x50xf32>
    %c0_1 = arith.constant 0 : index
    %c0_2 = arith.constant 0 : index
    %8 = vector.load %arg5[%c0_1, %c0_2] : memref<50x128xf32, #tpu.memory_space<vmem>>, vector<50x128xf32>
    %cst = arith.constant dense<0.000000e+00> : vector<16x128xf32>
    %9 = tpu.matmul %7, %8, %cst {dimension_numbers = #tpu.dot_dimension_numbers<[1], [0], [0], [1], [0, 0, 1, 1], [], []>} : vector<16x50xf32>, vector<50x128xf32>, vector<16x128xf32> -> vector<16x128xf32>
    %c0_3 = arith.constant 0 : index
    %c0_4 = arith.constant 0 : index
    %10 = vector.load %arg2[%c0_3, %c0_4] : memref<8x2xf32, #tpu.memory_space<vmem>>, vector<8x2xf32>
    %11 = vector.shape_cast %10 : vector<8x2xf32> to vector<8x2x1xf32>
    %c0_5 = arith.constant 0 : index
    %c0_6 = arith.constant 0 : index
    %12 = vector.load %arg6[%c0_5, %c0_6] : memref<1x128xf32, #tpu.memory_space<vmem>>, vector<1x128xf32>
    %13 = vector.shape_cast %12 : vector<1x128xf32> to vector<1x1x128xf32>
    %14 = vector.broadcast %11 : vector<8x2x1xf32> to vector<8x2x128xf32>
    %15 = vector.broadcast %13 : vector<1x1x128xf32> to vector<8x2x128xf32>
    %16 = arith.mulf %14, %15 : vector<8x2x128xf32>
    %17 = vector.shape_cast %16 : vector<8x2x128xf32> to vector<16x128xf32>
    %18 = arith.addf %9, %17 : vector<16x128xf32>
    %c0_7 = arith.constant 0 : index
    %c0_8 = arith.constant 0 : index
    %19 = vector.load %arg7[%c0_7, %c0_8] : memref<1x128xf32, #tpu.memory_space<vmem>>, vector<1x128xf32>
    %20 = vector.broadcast %19 : vector<1x128xf32> to vector<16x128xf32>
    %21 = arith.addf %18, %20 : vector<16x128xf32>
    %c0_9 = arith.constant 0 : index
    %c0_10 = arith.constant 0 : index
    %22 = vector.load %arg8[%c0_9, %c0_10] : memref<32x128xf32, #tpu.memory_space<vmem>>, vector<32x128xf32>
    %c0_11 = arith.constant 0 : index
    %c0_12 = arith.constant 0 : index
    %23 = vector.load %arg9[%c0_11, %c0_12] : memref<64x128xf32, #tpu.memory_space<vmem>>, vector<64x128xf32>
    %c0_13 = arith.constant 0 : index
    %c0_14 = arith.constant 0 : index
    %24 = vector.load %arg10[%c0_13, %c0_14] : memref<1x128xf32, #tpu.memory_space<vmem>>, vector<1x128xf32>
    %cst_15 = arith.constant 0.000000e+00 : f32
    %25 = vector.broadcast %cst_15 : f32 to vector<2x32xf32>
    %26 = vector.extract_strided_slice %21 {offsets = [0, 0], sizes = [2, 128], strides = [1, 1]} : vector<16x128xf32> to vector<2x128xf32>
    %cst_16 = arith.constant dense<0.000000e+00> : vector<2x128xf32>
    %27 = tpu.matmul %25, %22, %cst_16 {dimension_numbers = #tpu.dot_dimension_numbers<[1], [0], [0], [1], [0, 0, 1, 1], [], []>} : vector<2x32xf32>, vector<32x128xf32>, vector<2x128xf32> -> vector<2x128xf32>
    %28 = arith.addf %26, %27 : vector<2x128xf32>
    %29 = vector.extract_strided_slice %28 {offsets = [0, 0], sizes = [2, 96], strides = [1, 1]} : vector<2x128xf32> to vector<2x96xf32>
    %30 = arith.negf %29 : vector<2x96xf32>
    %31 = math.exp %30 : vector<2x96xf32>
    %cst_17 = arith.constant 1.000000e+00 : f32
    %32 = vector.broadcast %cst_17 : f32 to vector<2x96xf32>
    %33 = arith.addf %32, %31 : vector<2x96xf32>
    %34 = arith.divf %32, %33 : vector<2x96xf32>
    %35 = vector.extract_strided_slice %28 {offsets = [0, 96], sizes = [2, 32], strides = [1, 1]} : vector<2x128xf32> to vector<2x32xf32>
    %36 = math.tanh %35 : vector<2x32xf32>
    %37 = vector.extract_strided_slice %34 {offsets = [0, 32], sizes = [2, 32], strides = [1, 1]} : vector<2x96xf32> to vector<2x32xf32>
    %38 = arith.mulf %37, %25 : vector<2x32xf32>
    %39 = vector.extract_strided_slice %34 {offsets = [0, 0], sizes = [2, 32], strides = [1, 1]} : vector<2x96xf32> to vector<2x32xf32>
    %40 = arith.mulf %39, %36 : vector<2x32xf32>
    %41 = arith.addf %38, %40 : vector<2x32xf32>
    %42 = vector.extract_strided_slice %34 {offsets = [0, 64], sizes = [2, 32], strides = [1, 1]} : vector<2x96xf32> to vector<2x32xf32>
    %43 = math.tanh %41 : vector<2x32xf32>
    %44 = arith.mulf %42, %43 : vector<2x32xf32>
    %45 = tpu.concatenate %44, %25 in 1 : vector<2x32xf32>, vector<2x32xf32> -> vector<2x64xf32>
    %cst_18 = arith.constant dense<0.000000e+00> : vector<2x128xf32>
    %46 = tpu.matmul %45, %23, %cst_18 {dimension_numbers = #tpu.dot_dimension_numbers<[1], [0], [0], [1], [0, 0, 1, 1], [], []>} : vector<2x64xf32>, vector<64x128xf32>, vector<2x128xf32> -> vector<2x128xf32>
    %47 = vector.broadcast %24 : vector<1x128xf32> to vector<2x128xf32>
    %48 = arith.addf %46, %47 : vector<2x128xf32>
    %49 = vector.extract_strided_slice %48 {offsets = [0, 0], sizes = [2, 96], strides = [1, 1]} : vector<2x128xf32> to vector<2x96xf32>
    %50 = arith.negf %49 : vector<2x96xf32>
    %51 = math.exp %50 : vector<2x96xf32>
    %cst_19 = arith.constant 1.000000e+00 : f32
    %52 = vector.broadcast %cst_19 : f32 to vector<2x96xf32>
    %53 = arith.addf %52, %51 : vector<2x96xf32>
    %54 = arith.divf %52, %53 : vector<2x96xf32>
    %55 = vector.extract_strided_slice %48 {offsets = [0, 96], sizes = [2, 32], strides = [1, 1]} : vector<2x128xf32> to vector<2x32xf32>
    %56 = math.tanh %55 : vector<2x32xf32>
    %57 = vector.extract_strided_slice %54 {offsets = [0, 32], sizes = [2, 32], strides = [1, 1]} : vector<2x96xf32> to vector<2x32xf32>
    %58 = arith.mulf %57, %25 : vector<2x32xf32>
    %59 = vector.extract_strided_slice %54 {offsets = [0, 0], sizes = [2, 32], strides = [1, 1]} : vector<2x96xf32> to vector<2x32xf32>
    %60 = arith.mulf %59, %56 : vector<2x32xf32>
    %61 = arith.addf %58, %60 : vector<2x32xf32>
    %62 = vector.extract_strided_slice %54 {offsets = [0, 64], sizes = [2, 32], strides = [1, 1]} : vector<2x96xf32> to vector<2x32xf32>
    %63 = math.tanh %61 : vector<2x32xf32>
    %64 = arith.mulf %62, %63 : vector<2x32xf32>
    %65 = vector.extract_strided_slice %21 {offsets = [2, 0], sizes = [2, 128], strides = [1, 1]} : vector<16x128xf32> to vector<2x128xf32>
    %cst_20 = arith.constant dense<0.000000e+00> : vector<2x128xf32>
    %66 = tpu.matmul %44, %22, %cst_20 {dimension_numbers = #tpu.dot_dimension_numbers<[1], [0], [0], [1], [0, 0, 1, 1], [], []>} : vector<2x32xf32>, vector<32x128xf32>, vector<2x128xf32> -> vector<2x128xf32>
    %67 = arith.addf %65, %66 : vector<2x128xf32>
    %68 = vector.extract_strided_slice %67 {offsets = [0, 0], sizes = [2, 96], strides = [1, 1]} : vector<2x128xf32> to vector<2x96xf32>
    %69 = arith.negf %68 : vector<2x96xf32>
    %70 = math.exp %69 : vector<2x96xf32>
    %cst_21 = arith.constant 1.000000e+00 : f32
    %71 = vector.broadcast %cst_21 : f32 to vector<2x96xf32>
    %72 = arith.addf %71, %70 : vector<2x96xf32>
    %73 = arith.divf %71, %72 : vector<2x96xf32>
    %74 = vector.extract_strided_slice %67 {offsets = [0, 96], sizes = [2, 32], strides = [1, 1]} : vector<2x128xf32> to vector<2x32xf32>
    %75 = math.tanh %74 : vector<2x32xf32>
    %76 = vector.extract_strided_slice %73 {offsets = [0, 32], sizes = [2, 32], strides = [1, 1]} : vector<2x96xf32> to vector<2x32xf32>
    %77 = arith.mulf %76, %41 : vector<2x32xf32>
    %78 = vector.extract_strided_slice %73 {offsets = [0, 0], sizes = [2, 32], strides = [1, 1]} : vector<2x96xf32> to vector<2x32xf32>
    %79 = arith.mulf %78, %75 : vector<2x32xf32>
    %80 = arith.addf %77, %79 : vector<2x32xf32>
    %81 = vector.extract_strided_slice %73 {offsets = [0, 64], sizes = [2, 32], strides = [1, 1]} : vector<2x96xf32> to vector<2x32xf32>
    %82 = math.tanh %80 : vector<2x32xf32>
    %83 = arith.mulf %81, %82 : vector<2x32xf32>
    %84 = tpu.concatenate %83, %64 in 1 : vector<2x32xf32>, vector<2x32xf32> -> vector<2x64xf32>
    %cst_22 = arith.constant dense<0.000000e+00> : vector<2x128xf32>
    %85 = tpu.matmul %84, %23, %cst_22 {dimension_numbers = #tpu.dot_dimension_numbers<[1], [0], [0], [1], [0, 0, 1, 1], [], []>} : vector<2x64xf32>, vector<64x128xf32>, vector<2x128xf32> -> vector<2x128xf32>
    %86 = vector.broadcast %24 : vector<1x128xf32> to vector<2x128xf32>
    %87 = arith.addf %85, %86 : vector<2x128xf32>
    %88 = vector.extract_strided_slice %87 {offsets = [0, 0], sizes = [2, 96], strides = [1, 1]} : vector<2x128xf32> to vector<2x96xf32>
    %89 = arith.negf %88 : vector<2x96xf32>
    %90 = math.exp %89 : vector<2x96xf32>
    %cst_23 = arith.constant 1.000000e+00 : f32
    %91 = vector.broadcast %cst_23 : f32 to vector<2x96xf32>
    %92 = arith.addf %91, %90 : vector<2x96xf32>
    %93 = arith.divf %91, %92 : vector<2x96xf32>
    %94 = vector.extract_strided_slice %87 {offsets = [0, 96], sizes = [2, 32], strides = [1, 1]} : vector<2x128xf32> to vector<2x32xf32>
    %95 = math.tanh %94 : vector<2x32xf32>
    %96 = vector.extract_strided_slice %93 {offsets = [0, 32], sizes = [2, 32], strides = [1, 1]} : vector<2x96xf32> to vector<2x32xf32>
    %97 = arith.mulf %96, %61 : vector<2x32xf32>
    %98 = vector.extract_strided_slice %93 {offsets = [0, 0], sizes = [2, 32], strides = [1, 1]} : vector<2x96xf32> to vector<2x32xf32>
    %99 = arith.mulf %98, %95 : vector<2x32xf32>
    %100 = arith.addf %97, %99 : vector<2x32xf32>
    %101 = vector.extract_strided_slice %93 {offsets = [0, 64], sizes = [2, 32], strides = [1, 1]} : vector<2x96xf32> to vector<2x32xf32>
    %102 = math.tanh %100 : vector<2x32xf32>
    %103 = arith.mulf %101, %102 : vector<2x32xf32>
    %104 = vector.extract_strided_slice %21 {offsets = [4, 0], sizes = [2, 128], strides = [1, 1]} : vector<16x128xf32> to vector<2x128xf32>
    %cst_24 = arith.constant dense<0.000000e+00> : vector<2x128xf32>
    %105 = tpu.matmul %83, %22, %cst_24 {dimension_numbers = #tpu.dot_dimension_numbers<[1], [0], [0], [1], [0, 0, 1, 1], [], []>} : vector<2x32xf32>, vector<32x128xf32>, vector<2x128xf32> -> vector<2x128xf32>
    %106 = arith.addf %104, %105 : vector<2x128xf32>
    %107 = vector.extract_strided_slice %106 {offsets = [0, 0], sizes = [2, 96], strides = [1, 1]} : vector<2x128xf32> to vector<2x96xf32>
    %108 = arith.negf %107 : vector<2x96xf32>
    %109 = math.exp %108 : vector<2x96xf32>
    %cst_25 = arith.constant 1.000000e+00 : f32
    %110 = vector.broadcast %cst_25 : f32 to vector<2x96xf32>
    %111 = arith.addf %110, %109 : vector<2x96xf32>
    %112 = arith.divf %110, %111 : vector<2x96xf32>
    %113 = vector.extract_strided_slice %106 {offsets = [0, 96], sizes = [2, 32], strides = [1, 1]} : vector<2x128xf32> to vector<2x32xf32>
    %114 = math.tanh %113 : vector<2x32xf32>
    %115 = vector.extract_strided_slice %112 {offsets = [0, 32], sizes = [2, 32], strides = [1, 1]} : vector<2x96xf32> to vector<2x32xf32>
    %116 = arith.mulf %115, %80 : vector<2x32xf32>
    %117 = vector.extract_strided_slice %112 {offsets = [0, 0], sizes = [2, 32], strides = [1, 1]} : vector<2x96xf32> to vector<2x32xf32>
    %118 = arith.mulf %117, %114 : vector<2x32xf32>
    %119 = arith.addf %116, %118 : vector<2x32xf32>
    %120 = vector.extract_strided_slice %112 {offsets = [0, 64], sizes = [2, 32], strides = [1, 1]} : vector<2x96xf32> to vector<2x32xf32>
    %121 = math.tanh %119 : vector<2x32xf32>
    %122 = arith.mulf %120, %121 : vector<2x32xf32>
    %123 = tpu.concatenate %122, %103 in 1 : vector<2x32xf32>, vector<2x32xf32> -> vector<2x64xf32>
    %cst_26 = arith.constant dense<0.000000e+00> : vector<2x128xf32>
    %124 = tpu.matmul %123, %23, %cst_26 {dimension_numbers = #tpu.dot_dimension_numbers<[1], [0], [0], [1], [0, 0, 1, 1], [], []>} : vector<2x64xf32>, vector<64x128xf32>, vector<2x128xf32> -> vector<2x128xf32>
    %125 = vector.broadcast %24 : vector<1x128xf32> to vector<2x128xf32>
    %126 = arith.addf %124, %125 : vector<2x128xf32>
    %127 = vector.extract_strided_slice %126 {offsets = [0, 0], sizes = [2, 96], strides = [1, 1]} : vector<2x128xf32> to vector<2x96xf32>
    %128 = arith.negf %127 : vector<2x96xf32>
    %129 = math.exp %128 : vector<2x96xf32>
    %cst_27 = arith.constant 1.000000e+00 : f32
    %130 = vector.broadcast %cst_27 : f32 to vector<2x96xf32>
    %131 = arith.addf %130, %129 : vector<2x96xf32>
    %132 = arith.divf %130, %131 : vector<2x96xf32>
    %133 = vector.extract_strided_slice %126 {offsets = [0, 96], sizes = [2, 32], strides = [1, 1]} : vector<2x128xf32> to vector<2x32xf32>
    %134 = math.tanh %133 : vector<2x32xf32>
    %135 = vector.extract_strided_slice %132 {offsets = [0, 32], sizes = [2, 32], strides = [1, 1]} : vector<2x96xf32> to vector<2x32xf32>
    %136 = arith.mulf %135, %100 : vector<2x32xf32>
    %137 = vector.extract_strided_slice %132 {offsets = [0, 0], sizes = [2, 32], strides = [1, 1]} : vector<2x96xf32> to vector<2x32xf32>
    %138 = arith.mulf %137, %134 : vector<2x32xf32>
    %139 = arith.addf %136, %138 : vector<2x32xf32>
    %140 = vector.extract_strided_slice %132 {offsets = [0, 64], sizes = [2, 32], strides = [1, 1]} : vector<2x96xf32> to vector<2x32xf32>
    %141 = math.tanh %139 : vector<2x32xf32>
    %142 = arith.mulf %140, %141 : vector<2x32xf32>
    %143 = vector.extract_strided_slice %21 {offsets = [6, 0], sizes = [2, 128], strides = [1, 1]} : vector<16x128xf32> to vector<2x128xf32>
    %cst_28 = arith.constant dense<0.000000e+00> : vector<2x128xf32>
    %144 = tpu.matmul %122, %22, %cst_28 {dimension_numbers = #tpu.dot_dimension_numbers<[1], [0], [0], [1], [0, 0, 1, 1], [], []>} : vector<2x32xf32>, vector<32x128xf32>, vector<2x128xf32> -> vector<2x128xf32>
    %145 = arith.addf %143, %144 : vector<2x128xf32>
    %146 = vector.extract_strided_slice %145 {offsets = [0, 0], sizes = [2, 96], strides = [1, 1]} : vector<2x128xf32> to vector<2x96xf32>
    %147 = arith.negf %146 : vector<2x96xf32>
    %148 = math.exp %147 : vector<2x96xf32>
    %cst_29 = arith.constant 1.000000e+00 : f32
    %149 = vector.broadcast %cst_29 : f32 to vector<2x96xf32>
    %150 = arith.addf %149, %148 : vector<2x96xf32>
    %151 = arith.divf %149, %150 : vector<2x96xf32>
    %152 = vector.extract_strided_slice %145 {offsets = [0, 96], sizes = [2, 32], strides = [1, 1]} : vector<2x128xf32> to vector<2x32xf32>
    %153 = math.tanh %152 : vector<2x32xf32>
    %154 = vector.extract_strided_slice %151 {offsets = [0, 32], sizes = [2, 32], strides = [1, 1]} : vector<2x96xf32> to vector<2x32xf32>
    %155 = arith.mulf %154, %119 : vector<2x32xf32>
    %156 = vector.extract_strided_slice %151 {offsets = [0, 0], sizes = [2, 32], strides = [1, 1]} : vector<2x96xf32> to vector<2x32xf32>
    %157 = arith.mulf %156, %153 : vector<2x32xf32>
    %158 = arith.addf %155, %157 : vector<2x32xf32>
    %159 = vector.extract_strided_slice %151 {offsets = [0, 64], sizes = [2, 32], strides = [1, 1]} : vector<2x96xf32> to vector<2x32xf32>
    %160 = math.tanh %158 : vector<2x32xf32>
    %161 = arith.mulf %159, %160 : vector<2x32xf32>
    %162 = tpu.concatenate %161, %142 in 1 : vector<2x32xf32>, vector<2x32xf32> -> vector<2x64xf32>
    %cst_30 = arith.constant dense<0.000000e+00> : vector<2x128xf32>
    %163 = tpu.matmul %162, %23, %cst_30 {dimension_numbers = #tpu.dot_dimension_numbers<[1], [0], [0], [1], [0, 0, 1, 1], [], []>} : vector<2x64xf32>, vector<64x128xf32>, vector<2x128xf32> -> vector<2x128xf32>
    %164 = vector.broadcast %24 : vector<1x128xf32> to vector<2x128xf32>
    %165 = arith.addf %163, %164 : vector<2x128xf32>
    %166 = vector.extract_strided_slice %165 {offsets = [0, 0], sizes = [2, 96], strides = [1, 1]} : vector<2x128xf32> to vector<2x96xf32>
    %167 = arith.negf %166 : vector<2x96xf32>
    %168 = math.exp %167 : vector<2x96xf32>
    %cst_31 = arith.constant 1.000000e+00 : f32
    %169 = vector.broadcast %cst_31 : f32 to vector<2x96xf32>
    %170 = arith.addf %169, %168 : vector<2x96xf32>
    %171 = arith.divf %169, %170 : vector<2x96xf32>
    %172 = vector.extract_strided_slice %165 {offsets = [0, 96], sizes = [2, 32], strides = [1, 1]} : vector<2x128xf32> to vector<2x32xf32>
    %173 = math.tanh %172 : vector<2x32xf32>
    %174 = vector.extract_strided_slice %171 {offsets = [0, 32], sizes = [2, 32], strides = [1, 1]} : vector<2x96xf32> to vector<2x32xf32>
    %175 = arith.mulf %174, %139 : vector<2x32xf32>
    %176 = vector.extract_strided_slice %171 {offsets = [0, 0], sizes = [2, 32], strides = [1, 1]} : vector<2x96xf32> to vector<2x32xf32>
    %177 = arith.mulf %176, %173 : vector<2x32xf32>
    %178 = arith.addf %175, %177 : vector<2x32xf32>
    %179 = vector.extract_strided_slice %171 {offsets = [0, 64], sizes = [2, 32], strides = [1, 1]} : vector<2x96xf32> to vector<2x32xf32>
    %180 = math.tanh %178 : vector<2x32xf32>
    %181 = arith.mulf %179, %180 : vector<2x32xf32>
    %182 = vector.extract_strided_slice %21 {offsets = [8, 0], sizes = [2, 128], strides = [1, 1]} : vector<16x128xf32> to vector<2x128xf32>
    %cst_32 = arith.constant dense<0.000000e+00> : vector<2x128xf32>
    %183 = tpu.matmul %161, %22, %cst_32 {dimension_numbers = #tpu.dot_dimension_numbers<[1], [0], [0], [1], [0, 0, 1, 1], [], []>} : vector<2x32xf32>, vector<32x128xf32>, vector<2x128xf32> -> vector<2x128xf32>
    %184 = arith.addf %182, %183 : vector<2x128xf32>
    %185 = vector.extract_strided_slice %184 {offsets = [0, 0], sizes = [2, 96], strides = [1, 1]} : vector<2x128xf32> to vector<2x96xf32>
    %186 = arith.negf %185 : vector<2x96xf32>
    %187 = math.exp %186 : vector<2x96xf32>
    %cst_33 = arith.constant 1.000000e+00 : f32
    %188 = vector.broadcast %cst_33 : f32 to vector<2x96xf32>
    %189 = arith.addf %188, %187 : vector<2x96xf32>
    %190 = arith.divf %188, %189 : vector<2x96xf32>
    %191 = vector.extract_strided_slice %184 {offsets = [0, 96], sizes = [2, 32], strides = [1, 1]} : vector<2x128xf32> to vector<2x32xf32>
    %192 = math.tanh %191 : vector<2x32xf32>
    %193 = vector.extract_strided_slice %190 {offsets = [0, 32], sizes = [2, 32], strides = [1, 1]} : vector<2x96xf32> to vector<2x32xf32>
    %194 = arith.mulf %193, %158 : vector<2x32xf32>
    %195 = vector.extract_strided_slice %190 {offsets = [0, 0], sizes = [2, 32], strides = [1, 1]} : vector<2x96xf32> to vector<2x32xf32>
    %196 = arith.mulf %195, %192 : vector<2x32xf32>
    %197 = arith.addf %194, %196 : vector<2x32xf32>
    %198 = vector.extract_strided_slice %190 {offsets = [0, 64], sizes = [2, 32], strides = [1, 1]} : vector<2x96xf32> to vector<2x32xf32>
    %199 = math.tanh %197 : vector<2x32xf32>
    %200 = arith.mulf %198, %199 : vector<2x32xf32>
    %201 = tpu.concatenate %200, %181 in 1 : vector<2x32xf32>, vector<2x32xf32> -> vector<2x64xf32>
    %cst_34 = arith.constant dense<0.000000e+00> : vector<2x128xf32>
    %202 = tpu.matmul %201, %23, %cst_34 {dimension_numbers = #tpu.dot_dimension_numbers<[1], [0], [0], [1], [0, 0, 1, 1], [], []>} : vector<2x64xf32>, vector<64x128xf32>, vector<2x128xf32> -> vector<2x128xf32>
    %203 = vector.broadcast %24 : vector<1x128xf32> to vector<2x128xf32>
    %204 = arith.addf %202, %203 : vector<2x128xf32>
    %205 = vector.extract_strided_slice %204 {offsets = [0, 0], sizes = [2, 96], strides = [1, 1]} : vector<2x128xf32> to vector<2x96xf32>
    %206 = arith.negf %205 : vector<2x96xf32>
    %207 = math.exp %206 : vector<2x96xf32>
    %cst_35 = arith.constant 1.000000e+00 : f32
    %208 = vector.broadcast %cst_35 : f32 to vector<2x96xf32>
    %209 = arith.addf %208, %207 : vector<2x96xf32>
    %210 = arith.divf %208, %209 : vector<2x96xf32>
    %211 = vector.extract_strided_slice %204 {offsets = [0, 96], sizes = [2, 32], strides = [1, 1]} : vector<2x128xf32> to vector<2x32xf32>
    %212 = math.tanh %211 : vector<2x32xf32>
    %213 = vector.extract_strided_slice %210 {offsets = [0, 32], sizes = [2, 32], strides = [1, 1]} : vector<2x96xf32> to vector<2x32xf32>
    %214 = arith.mulf %213, %178 : vector<2x32xf32>
    %215 = vector.extract_strided_slice %210 {offsets = [0, 0], sizes = [2, 32], strides = [1, 1]} : vector<2x96xf32> to vector<2x32xf32>
    %216 = arith.mulf %215, %212 : vector<2x32xf32>
    %217 = arith.addf %214, %216 : vector<2x32xf32>
    %218 = vector.extract_strided_slice %210 {offsets = [0, 64], sizes = [2, 32], strides = [1, 1]} : vector<2x96xf32> to vector<2x32xf32>
    %219 = math.tanh %217 : vector<2x32xf32>
    %220 = arith.mulf %218, %219 : vector<2x32xf32>
    %221 = vector.extract_strided_slice %21 {offsets = [10, 0], sizes = [2, 128], strides = [1, 1]} : vector<16x128xf32> to vector<2x128xf32>
    %cst_36 = arith.constant dense<0.000000e+00> : vector<2x128xf32>
    %222 = tpu.matmul %200, %22, %cst_36 {dimension_numbers = #tpu.dot_dimension_numbers<[1], [0], [0], [1], [0, 0, 1, 1], [], []>} : vector<2x32xf32>, vector<32x128xf32>, vector<2x128xf32> -> vector<2x128xf32>
    %223 = arith.addf %221, %222 : vector<2x128xf32>
    %224 = vector.extract_strided_slice %223 {offsets = [0, 0], sizes = [2, 96], strides = [1, 1]} : vector<2x128xf32> to vector<2x96xf32>
    %225 = arith.negf %224 : vector<2x96xf32>
    %226 = math.exp %225 : vector<2x96xf32>
    %cst_37 = arith.constant 1.000000e+00 : f32
    %227 = vector.broadcast %cst_37 : f32 to vector<2x96xf32>
    %228 = arith.addf %227, %226 : vector<2x96xf32>
    %229 = arith.divf %227, %228 : vector<2x96xf32>
    %230 = vector.extract_strided_slice %223 {offsets = [0, 96], sizes = [2, 32], strides = [1, 1]} : vector<2x128xf32> to vector<2x32xf32>
    %231 = math.tanh %230 : vector<2x32xf32>
    %232 = vector.extract_strided_slice %229 {offsets = [0, 32], sizes = [2, 32], strides = [1, 1]} : vector<2x96xf32> to vector<2x32xf32>
    %233 = arith.mulf %232, %197 : vector<2x32xf32>
    %234 = vector.extract_strided_slice %229 {offsets = [0, 0], sizes = [2, 32], strides = [1, 1]} : vector<2x96xf32> to vector<2x32xf32>
    %235 = arith.mulf %234, %231 : vector<2x32xf32>
    %236 = arith.addf %233, %235 : vector<2x32xf32>
    %237 = vector.extract_strided_slice %229 {offsets = [0, 64], sizes = [2, 32], strides = [1, 1]} : vector<2x96xf32> to vector<2x32xf32>
    %238 = math.tanh %236 : vector<2x32xf32>
    %239 = arith.mulf %237, %238 : vector<2x32xf32>
    %240 = tpu.concatenate %239, %220 in 1 : vector<2x32xf32>, vector<2x32xf32> -> vector<2x64xf32>
    %cst_38 = arith.constant dense<0.000000e+00> : vector<2x128xf32>
    %241 = tpu.matmul %240, %23, %cst_38 {dimension_numbers = #tpu.dot_dimension_numbers<[1], [0], [0], [1], [0, 0, 1, 1], [], []>} : vector<2x64xf32>, vector<64x128xf32>, vector<2x128xf32> -> vector<2x128xf32>
    %242 = vector.broadcast %24 : vector<1x128xf32> to vector<2x128xf32>
    %243 = arith.addf %241, %242 : vector<2x128xf32>
    %244 = vector.extract_strided_slice %243 {offsets = [0, 0], sizes = [2, 96], strides = [1, 1]} : vector<2x128xf32> to vector<2x96xf32>
    %245 = arith.negf %244 : vector<2x96xf32>
    %246 = math.exp %245 : vector<2x96xf32>
    %cst_39 = arith.constant 1.000000e+00 : f32
    %247 = vector.broadcast %cst_39 : f32 to vector<2x96xf32>
    %248 = arith.addf %247, %246 : vector<2x96xf32>
    %249 = arith.divf %247, %248 : vector<2x96xf32>
    %250 = vector.extract_strided_slice %243 {offsets = [0, 96], sizes = [2, 32], strides = [1, 1]} : vector<2x128xf32> to vector<2x32xf32>
    %251 = math.tanh %250 : vector<2x32xf32>
    %252 = vector.extract_strided_slice %249 {offsets = [0, 32], sizes = [2, 32], strides = [1, 1]} : vector<2x96xf32> to vector<2x32xf32>
    %253 = arith.mulf %252, %217 : vector<2x32xf32>
    %254 = vector.extract_strided_slice %249 {offsets = [0, 0], sizes = [2, 32], strides = [1, 1]} : vector<2x96xf32> to vector<2x32xf32>
    %255 = arith.mulf %254, %251 : vector<2x32xf32>
    %256 = arith.addf %253, %255 : vector<2x32xf32>
    %257 = vector.extract_strided_slice %249 {offsets = [0, 64], sizes = [2, 32], strides = [1, 1]} : vector<2x96xf32> to vector<2x32xf32>
    %258 = math.tanh %256 : vector<2x32xf32>
    %259 = arith.mulf %257, %258 : vector<2x32xf32>
    %260 = vector.extract_strided_slice %21 {offsets = [12, 0], sizes = [2, 128], strides = [1, 1]} : vector<16x128xf32> to vector<2x128xf32>
    %cst_40 = arith.constant dense<0.000000e+00> : vector<2x128xf32>
    %261 = tpu.matmul %239, %22, %cst_40 {dimension_numbers = #tpu.dot_dimension_numbers<[1], [0], [0], [1], [0, 0, 1, 1], [], []>} : vector<2x32xf32>, vector<32x128xf32>, vector<2x128xf32> -> vector<2x128xf32>
    %262 = arith.addf %260, %261 : vector<2x128xf32>
    %263 = vector.extract_strided_slice %262 {offsets = [0, 0], sizes = [2, 96], strides = [1, 1]} : vector<2x128xf32> to vector<2x96xf32>
    %264 = arith.negf %263 : vector<2x96xf32>
    %265 = math.exp %264 : vector<2x96xf32>
    %cst_41 = arith.constant 1.000000e+00 : f32
    %266 = vector.broadcast %cst_41 : f32 to vector<2x96xf32>
    %267 = arith.addf %266, %265 : vector<2x96xf32>
    %268 = arith.divf %266, %267 : vector<2x96xf32>
    %269 = vector.extract_strided_slice %262 {offsets = [0, 96], sizes = [2, 32], strides = [1, 1]} : vector<2x128xf32> to vector<2x32xf32>
    %270 = math.tanh %269 : vector<2x32xf32>
    %271 = vector.extract_strided_slice %268 {offsets = [0, 32], sizes = [2, 32], strides = [1, 1]} : vector<2x96xf32> to vector<2x32xf32>
    %272 = arith.mulf %271, %236 : vector<2x32xf32>
    %273 = vector.extract_strided_slice %268 {offsets = [0, 0], sizes = [2, 32], strides = [1, 1]} : vector<2x96xf32> to vector<2x32xf32>
    %274 = arith.mulf %273, %270 : vector<2x32xf32>
    %275 = arith.addf %272, %274 : vector<2x32xf32>
    %276 = vector.extract_strided_slice %268 {offsets = [0, 64], sizes = [2, 32], strides = [1, 1]} : vector<2x96xf32> to vector<2x32xf32>
    %277 = math.tanh %275 : vector<2x32xf32>
    %278 = arith.mulf %276, %277 : vector<2x32xf32>
    %279 = tpu.concatenate %278, %259 in 1 : vector<2x32xf32>, vector<2x32xf32> -> vector<2x64xf32>
    %cst_42 = arith.constant dense<0.000000e+00> : vector<2x128xf32>
    %280 = tpu.matmul %279, %23, %cst_42 {dimension_numbers = #tpu.dot_dimension_numbers<[1], [0], [0], [1], [0, 0, 1, 1], [], []>} : vector<2x64xf32>, vector<64x128xf32>, vector<2x128xf32> -> vector<2x128xf32>
    %281 = vector.broadcast %24 : vector<1x128xf32> to vector<2x128xf32>
    %282 = arith.addf %280, %281 : vector<2x128xf32>
    %283 = vector.extract_strided_slice %282 {offsets = [0, 0], sizes = [2, 96], strides = [1, 1]} : vector<2x128xf32> to vector<2x96xf32>
    %284 = arith.negf %283 : vector<2x96xf32>
    %285 = math.exp %284 : vector<2x96xf32>
    %cst_43 = arith.constant 1.000000e+00 : f32
    %286 = vector.broadcast %cst_43 : f32 to vector<2x96xf32>
    %287 = arith.addf %286, %285 : vector<2x96xf32>
    %288 = arith.divf %286, %287 : vector<2x96xf32>
    %289 = vector.extract_strided_slice %282 {offsets = [0, 96], sizes = [2, 32], strides = [1, 1]} : vector<2x128xf32> to vector<2x32xf32>
    %290 = math.tanh %289 : vector<2x32xf32>
    %291 = vector.extract_strided_slice %288 {offsets = [0, 32], sizes = [2, 32], strides = [1, 1]} : vector<2x96xf32> to vector<2x32xf32>
    %292 = arith.mulf %291, %256 : vector<2x32xf32>
    %293 = vector.extract_strided_slice %288 {offsets = [0, 0], sizes = [2, 32], strides = [1, 1]} : vector<2x96xf32> to vector<2x32xf32>
    %294 = arith.mulf %293, %290 : vector<2x32xf32>
    %295 = arith.addf %292, %294 : vector<2x32xf32>
    %296 = vector.extract_strided_slice %288 {offsets = [0, 64], sizes = [2, 32], strides = [1, 1]} : vector<2x96xf32> to vector<2x32xf32>
    %297 = math.tanh %295 : vector<2x32xf32>
    %298 = arith.mulf %296, %297 : vector<2x32xf32>
    %299 = vector.extract_strided_slice %21 {offsets = [14, 0], sizes = [2, 128], strides = [1, 1]} : vector<16x128xf32> to vector<2x128xf32>
    %cst_44 = arith.constant dense<0.000000e+00> : vector<2x128xf32>
    %300 = tpu.matmul %278, %22, %cst_44 {dimension_numbers = #tpu.dot_dimension_numbers<[1], [0], [0], [1], [0, 0, 1, 1], [], []>} : vector<2x32xf32>, vector<32x128xf32>, vector<2x128xf32> -> vector<2x128xf32>
    %301 = arith.addf %299, %300 : vector<2x128xf32>
    %302 = vector.extract_strided_slice %301 {offsets = [0, 0], sizes = [2, 96], strides = [1, 1]} : vector<2x128xf32> to vector<2x96xf32>
    %303 = arith.negf %302 : vector<2x96xf32>
    %304 = math.exp %303 : vector<2x96xf32>
    %cst_45 = arith.constant 1.000000e+00 : f32
    %305 = vector.broadcast %cst_45 : f32 to vector<2x96xf32>
    %306 = arith.addf %305, %304 : vector<2x96xf32>
    %307 = arith.divf %305, %306 : vector<2x96xf32>
    %308 = vector.extract_strided_slice %301 {offsets = [0, 96], sizes = [2, 32], strides = [1, 1]} : vector<2x128xf32> to vector<2x32xf32>
    %309 = math.tanh %308 : vector<2x32xf32>
    %310 = vector.extract_strided_slice %307 {offsets = [0, 32], sizes = [2, 32], strides = [1, 1]} : vector<2x96xf32> to vector<2x32xf32>
    %311 = arith.mulf %310, %275 : vector<2x32xf32>
    %312 = vector.extract_strided_slice %307 {offsets = [0, 0], sizes = [2, 32], strides = [1, 1]} : vector<2x96xf32> to vector<2x32xf32>
    %313 = arith.mulf %312, %309 : vector<2x32xf32>
    %314 = arith.addf %311, %313 : vector<2x32xf32>
    %315 = vector.extract_strided_slice %307 {offsets = [0, 64], sizes = [2, 32], strides = [1, 1]} : vector<2x96xf32> to vector<2x32xf32>
    %316 = math.tanh %314 : vector<2x32xf32>
    %317 = arith.mulf %315, %316 : vector<2x32xf32>
    %318 = tpu.concatenate %317, %298 in 1 : vector<2x32xf32>, vector<2x32xf32> -> vector<2x64xf32>
    %cst_46 = arith.constant dense<0.000000e+00> : vector<2x128xf32>
    %319 = tpu.matmul %318, %23, %cst_46 {dimension_numbers = #tpu.dot_dimension_numbers<[1], [0], [0], [1], [0, 0, 1, 1], [], []>} : vector<2x64xf32>, vector<64x128xf32>, vector<2x128xf32> -> vector<2x128xf32>
    %320 = vector.broadcast %24 : vector<1x128xf32> to vector<2x128xf32>
    %321 = arith.addf %319, %320 : vector<2x128xf32>
    %322 = vector.extract_strided_slice %321 {offsets = [0, 0], sizes = [2, 96], strides = [1, 1]} : vector<2x128xf32> to vector<2x96xf32>
    %323 = arith.negf %322 : vector<2x96xf32>
    %324 = math.exp %323 : vector<2x96xf32>
    %cst_47 = arith.constant 1.000000e+00 : f32
    %325 = vector.broadcast %cst_47 : f32 to vector<2x96xf32>
    %326 = arith.addf %325, %324 : vector<2x96xf32>
    %327 = arith.divf %325, %326 : vector<2x96xf32>
    %328 = vector.extract_strided_slice %321 {offsets = [0, 96], sizes = [2, 32], strides = [1, 1]} : vector<2x128xf32> to vector<2x32xf32>
    %329 = math.tanh %328 : vector<2x32xf32>
    %330 = vector.extract_strided_slice %327 {offsets = [0, 32], sizes = [2, 32], strides = [1, 1]} : vector<2x96xf32> to vector<2x32xf32>
    %331 = arith.mulf %330, %295 : vector<2x32xf32>
    %332 = vector.extract_strided_slice %327 {offsets = [0, 0], sizes = [2, 32], strides = [1, 1]} : vector<2x96xf32> to vector<2x32xf32>
    %333 = arith.mulf %332, %329 : vector<2x32xf32>
    %334 = arith.addf %331, %333 : vector<2x32xf32>
    %335 = vector.extract_strided_slice %327 {offsets = [0, 64], sizes = [2, 32], strides = [1, 1]} : vector<2x96xf32> to vector<2x32xf32>
    %336 = math.tanh %334 : vector<2x32xf32>
    %337 = arith.mulf %335, %336 : vector<2x32xf32>
    %c0_48 = arith.constant 0 : index
    %c0_49 = arith.constant 0 : index
    %338 = vector.load %arg11[%c0_48, %c0_49] : memref<32x64xf32, #tpu.memory_space<vmem>>, vector<32x64xf32>
    %cst_50 = arith.constant dense<0.000000e+00> : vector<2x64xf32>
    %339 = tpu.matmul %337, %338, %cst_50 {dimension_numbers = #tpu.dot_dimension_numbers<[1], [0], [0], [1], [0, 0, 1, 1], [], []>} : vector<2x32xf32>, vector<32x64xf32>, vector<2x64xf32> -> vector<2x64xf32>
    %c0_51 = arith.constant 0 : index
    %c0_52 = arith.constant 0 : index
    %340 = vector.load %arg12[%c0_51, %c0_52] : memref<1x64xf32, #tpu.memory_space<vmem>>, vector<1x64xf32>
    %341 = vector.broadcast %340 : vector<1x64xf32> to vector<2x64xf32>
    %342 = arith.addf %339, %341 : vector<2x64xf32>
    %cst_53 = arith.constant 0.000000e+00 : f32
    %343 = vector.broadcast %cst_53 : f32 to vector<2x64xf32>
    %344 = arith.maximumf %342, %343 : vector<2x64xf32>
    %c0_54 = arith.constant 0 : index
    %c0_55 = arith.constant 0 : index
    %345 = vector.load %arg13[%c0_54, %c0_55] : memref<64x32xf32, #tpu.memory_space<vmem>>, vector<64x32xf32>
    %cst_56 = arith.constant dense<0.000000e+00> : vector<2x32xf32>
    %346 = tpu.matmul %344, %345, %cst_56 {dimension_numbers = #tpu.dot_dimension_numbers<[1], [0], [0], [1], [0, 0, 1, 1], [], []>} : vector<2x64xf32>, vector<64x32xf32>, vector<2x32xf32> -> vector<2x32xf32>
    %c0_57 = arith.constant 0 : index
    %c0_58 = arith.constant 0 : index
    %347 = vector.load %arg14[%c0_57, %c0_58] : memref<1x32xf32, #tpu.memory_space<vmem>>, vector<1x32xf32>
    %348 = vector.broadcast %347 : vector<1x32xf32> to vector<2x32xf32>
    %349 = arith.addf %346, %348 : vector<2x32xf32>
    %350 = tpu.iota {dimensions = array<i32: 1>} : vector<2x20xi32>
    %c0_59 = arith.constant 0 : index
    %c0_60 = arith.constant 0 : index
    %351 = vector.load %arg3[%c0_59, %c0_60] : memref<2x1xi32, #tpu.memory_space<vmem>>, vector<2x1xi32>
    %352 = vector.broadcast %351 : vector<2x1xi32> to vector<2x20xi32>
    %353 = arith.cmpi eq, %350, %352 : vector<2x20xi32>
    %354 = arith.extui %353 : vector<2x20xi1> to vector<2x20xi32>
    %355 = arith.sitofp %354 : vector<2x20xi32> to vector<2x20xf32>
    %c0_61 = arith.constant 0 : index
    %c0_62 = arith.constant 0 : index
    %356 = vector.load %arg15[%c0_61, %c0_62] : memref<20x48xf32, #tpu.memory_space<vmem>>, vector<20x48xf32>
    %cst_63 = arith.constant dense<0.000000e+00> : vector<2x48xf32>
    %357 = tpu.matmul %355, %356, %cst_63 {dimension_numbers = #tpu.dot_dimension_numbers<[1], [0], [0], [1], [0, 0, 1, 1], [], []>} : vector<2x20xf32>, vector<20x48xf32>, vector<2x48xf32> -> vector<2x48xf32>
    %c0_64 = arith.constant 0 : index
    %c0_65 = arith.constant 0 : index
    %358 = vector.load %arg4[%c0_64, %c0_65] : memref<2x8xf32, #tpu.memory_space<vmem>>, vector<2x8xf32>
    %c0_66 = arith.constant 0 : index
    %c0_67 = arith.constant 0 : index
    %359 = vector.load %arg16[%c0_66, %c0_67] : memref<8x48xf32, #tpu.memory_space<vmem>>, vector<8x48xf32>
    %cst_68 = arith.constant dense<0.000000e+00> : vector<2x48xf32>
    %360 = tpu.matmul %358, %359, %cst_68 {dimension_numbers = #tpu.dot_dimension_numbers<[1], [0], [0], [1], [0, 0, 1, 1], [], []>} : vector<2x8xf32>, vector<8x48xf32>, vector<2x48xf32> -> vector<2x48xf32>
    %361 = arith.addf %357, %360 : vector<2x48xf32>
    %c0_69 = arith.constant 0 : index
    %c0_70 = arith.constant 0 : index
    %362 = vector.load %arg17[%c0_69, %c0_70] : memref<1x48xf32, #tpu.memory_space<vmem>>, vector<1x48xf32>
    %363 = vector.broadcast %362 : vector<1x48xf32> to vector<2x48xf32>
    %364 = arith.addf %361, %363 : vector<2x48xf32>
    %cst_71 = arith.constant 0.000000e+00 : f32
    %365 = vector.broadcast %cst_71 : f32 to vector<2x48xf32>
    %366 = arith.maximumf %364, %365 : vector<2x48xf32>
    %c0_72 = arith.constant 0 : index
    %c0_73 = arith.constant 0 : index
    %367 = vector.load %arg18[%c0_72, %c0_73] : memref<48x32xf32, #tpu.memory_space<vmem>>, vector<48x32xf32>
    %cst_74 = arith.constant dense<0.000000e+00> : vector<2x32xf32>
    %368 = tpu.matmul %366, %367, %cst_74 {dimension_numbers = #tpu.dot_dimension_numbers<[1], [0], [0], [1], [0, 0, 1, 1], [], []>} : vector<2x48xf32>, vector<48x32xf32>, vector<2x32xf32> -> vector<2x32xf32>
    %c0_75 = arith.constant 0 : index
    %c0_76 = arith.constant 0 : index
    %369 = vector.load %arg19[%c0_75, %c0_76] : memref<1x32xf32, #tpu.memory_space<vmem>>, vector<1x32xf32>
    %370 = vector.broadcast %369 : vector<1x32xf32> to vector<2x32xf32>
    %371 = arith.addf %368, %370 : vector<2x32xf32>
    %c0_77 = arith.constant 0 : index
    %c0_78 = arith.constant 0 : index
    %372 = vector.load %arg20[%c0_77, %c0_78] : memref<32x128xf32, #tpu.memory_space<vmem>>, vector<32x128xf32>
    %cst_79 = arith.constant dense<0.000000e+00> : vector<2x128xf32>
    %373 = tpu.matmul %371, %372, %cst_79 {dimension_numbers = #tpu.dot_dimension_numbers<[1], [0], [0], [1], [0, 0, 1, 1], [], []>} : vector<2x32xf32>, vector<32x128xf32>, vector<2x128xf32> -> vector<2x128xf32>
    %c0_80 = arith.constant 0 : index
    %c0_81 = arith.constant 0 : index
    %374 = vector.load %arg21[%c0_80, %c0_81] : memref<32x128xf32, #tpu.memory_space<vmem>>, vector<32x128xf32>
    %cst_82 = arith.constant dense<0.000000e+00> : vector<2x128xf32>
    %375 = tpu.matmul %349, %374, %cst_82 {dimension_numbers = #tpu.dot_dimension_numbers<[1], [0], [0], [1], [0, 0, 1, 1], [], []>} : vector<2x32xf32>, vector<32x128xf32>, vector<2x128xf32> -> vector<2x128xf32>
    %376 = arith.addf %373, %375 : vector<2x128xf32>
    %c0_83 = arith.constant 0 : index
    %c0_84 = arith.constant 0 : index
    %377 = vector.load %arg22[%c0_83, %c0_84] : memref<1x128xf32, #tpu.memory_space<vmem>>, vector<1x128xf32>
    %378 = vector.broadcast %377 : vector<1x128xf32> to vector<2x128xf32>
    %379 = arith.addf %376, %378 : vector<2x128xf32>
    %cst_85 = arith.constant 0.000000e+00 : f32
    %380 = vector.broadcast %cst_85 : f32 to vector<2x128xf32>
    %381 = arith.maximumf %379, %380 : vector<2x128xf32>
    %c0_86 = arith.constant 0 : index
    %c0_87 = arith.constant 0 : index
    %382 = vector.load %arg23[%c0_86, %c0_87] : memref<128x8xf32, #tpu.memory_space<vmem>>, vector<128x8xf32>
    %cst_88 = arith.constant dense<0.000000e+00> : vector<2x8xf32>
    %383 = tpu.matmul %381, %382, %cst_88 {dimension_numbers = #tpu.dot_dimension_numbers<[1], [0], [0], [1], [0, 0, 1, 1], [], []>} : vector<2x128xf32>, vector<128x8xf32>, vector<2x8xf32> -> vector<2x8xf32>
    %c0_89 = arith.constant 0 : index
    %c0_90 = arith.constant 0 : index
    %384 = vector.load %arg24[%c0_89, %c0_90] : memref<1x8xf32, #tpu.memory_space<vmem>>, vector<1x8xf32>
    %385 = vector.broadcast %384 : vector<1x8xf32> to vector<2x8xf32>
    %386 = arith.addf %383, %385 : vector<2x8xf32>
    %c0_91 = arith.constant 0 : index
    %c0_92 = arith.constant 0 : index
    %387 = vector.load %arg25[%c0_91, %c0_92] : memref<2x8xf32, #tpu.memory_space<vmem>>, vector<2x8xf32>
    tpu.vector_store %arg25[%c0_91, %c0_92], %386 {strides = array<i32>} : memref<2x8xf32, #tpu.memory_space<vmem>>, vector<2x8xf32>,
    return
  }
  func.func @transform_0(%arg0: i32) -> (i32, i32) {
    %c0_i32 = arith.constant 0 : i32
    %c0_i32_0 = arith.constant 0 : i32
    return %c0_i32, %arg0 : i32, i32
  }
  func.func @transform_1(%arg0: i32) -> (i32, i32) {
    %c0_i32 = arith.constant 0 : i32
    %c0_i32_0 = arith.constant 0 : i32
    return %c0_i32, %arg0 : i32, i32
  }
  func.func @transform_2(%arg0: i32) -> (i32, i32) {
    %c0_i32 = arith.constant 0 : i32
    %c0_i32_0 = arith.constant 0 : i32
    return %arg0, %c0_i32 : i32, i32
  }
  func.func @transform_3(%arg0: i32) -> (i32, i32) {
    %c0_i32 = arith.constant 0 : i32
    %c0_i32_0 = arith.constant 0 : i32
    return %arg0, %c0_i32 : i32, i32
  }
  func.func @transform_4(%arg0: i32) -> (i32, i32) {
    %c0_i32 = arith.constant 0 : i32
    %c0_i32_0 = arith.constant 0 : i32
    %c0_i32_1 = arith.constant 0 : i32
    return %c0_i32, %c0_i32_0 : i32, i32
  }
  func.func @transform_5(%arg0: i32) -> (i32, i32) {
    %c0_i32 = arith.constant 0 : i32
    %c0_i32_0 = arith.constant 0 : i32
    %c0_i32_1 = arith.constant 0 : i32
    return %c0_i32, %c0_i32_0 : i32, i32
  }
  func.func @transform_6(%arg0: i32) -> (i32, i32) {
    %c0_i32 = arith.constant 0 : i32
    %c0_i32_0 = arith.constant 0 : i32
    %c0_i32_1 = arith.constant 0 : i32
    return %c0_i32, %c0_i32_0 : i32, i32
  }
  func.func @transform_7(%arg0: i32) -> (i32, i32) {
    %c0_i32 = arith.constant 0 : i32
    %c0_i32_0 = arith.constant 0 : i32
    %c0_i32_1 = arith.constant 0 : i32
    return %c0_i32, %c0_i32_0 : i32, i32
  }
  func.func @transform_8(%arg0: i32) -> (i32, i32) {
    %c0_i32 = arith.constant 0 : i32
    %c0_i32_0 = arith.constant 0 : i32
    %c0_i32_1 = arith.constant 0 : i32
    return %c0_i32, %c0_i32_0 : i32, i32
  }
  func.func @transform_9(%arg0: i32) -> (i32, i32) {
    %c0_i32 = arith.constant 0 : i32
    %c0_i32_0 = arith.constant 0 : i32
    %c0_i32_1 = arith.constant 0 : i32
    return %c0_i32, %c0_i32_0 : i32, i32
  }
  func.func @transform_10(%arg0: i32) -> (i32, i32) {
    %c0_i32 = arith.constant 0 : i32
    %c0_i32_0 = arith.constant 0 : i32
    %c0_i32_1 = arith.constant 0 : i32
    return %c0_i32, %c0_i32_0 : i32, i32
  }
  func.func @transform_11(%arg0: i32) -> (i32, i32) {
    %c0_i32 = arith.constant 0 : i32
    %c0_i32_0 = arith.constant 0 : i32
    %c0_i32_1 = arith.constant 0 : i32
    return %c0_i32, %c0_i32_0 : i32, i32
  }
  func.func @transform_12(%arg0: i32) -> (i32, i32) {
    %c0_i32 = arith.constant 0 : i32
    %c0_i32_0 = arith.constant 0 : i32
    %c0_i32_1 = arith.constant 0 : i32
    return %c0_i32, %c0_i32_0 : i32, i32
  }
  func.func @transform_13(%arg0: i32) -> (i32, i32) {
    %c0_i32 = arith.constant 0 : i32
    %c0_i32_0 = arith.constant 0 : i32
    %c0_i32_1 = arith.constant 0 : i32
    return %c0_i32, %c0_i32_0 : i32, i32
  }
  func.func @transform_14(%arg0: i32) -> (i32, i32) {
    %c0_i32 = arith.constant 0 : i32
    %c0_i32_0 = arith.constant 0 : i32
    %c0_i32_1 = arith.constant 0 : i32
    return %c0_i32, %c0_i32_0 : i32, i32
  }
  func.func @transform_15(%arg0: i32) -> (i32, i32) {
    %c0_i32 = arith.constant 0 : i32
    %c0_i32_0 = arith.constant 0 : i32
    %c0_i32_1 = arith.constant 0 : i32
    return %c0_i32, %c0_i32_0 : i32, i32
  }
  func.func @transform_16(%arg0: i32) -> (i32, i32) {
    %c0_i32 = arith.constant 0 : i32
    %c0_i32_0 = arith.constant 0 : i32
    %c0_i32_1 = arith.constant 0 : i32
    return %c0_i32, %c0_i32_0 : i32, i32
  }
  func.func @transform_17(%arg0: i32) -> (i32, i32) {
    %c0_i32 = arith.constant 0 : i32
    %c0_i32_0 = arith.constant 0 : i32
    %c0_i32_1 = arith.constant 0 : i32
    return %c0_i32, %c0_i32_0 : i32, i32
  }
  func.func @transform_18(%arg0: i32) -> (i32, i32) {
    %c0_i32 = arith.constant 0 : i32
    %c0_i32_0 = arith.constant 0 : i32
    %c0_i32_1 = arith.constant 0 : i32
    return %c0_i32, %c0_i32_0 : i32, i32
  }
  func.func @transform_19(%arg0: i32) -> (i32, i32) {
    %c0_i32 = arith.constant 0 : i32
    %c0_i32_0 = arith.constant 0 : i32
    %c0_i32_1 = arith.constant 0 : i32
    return %c0_i32, %c0_i32_0 : i32, i32
  }
  func.func @transform_20(%arg0: i32) -> (i32, i32) {
    %c0_i32 = arith.constant 0 : i32
    %c0_i32_0 = arith.constant 0 : i32
    %c0_i32_1 = arith.constant 0 : i32
    return %c0_i32, %c0_i32_0 : i32, i32
  }
  func.func @transform_21(%arg0: i32) -> (i32, i32) {
    %c0_i32 = arith.constant 0 : i32
    %c0_i32_0 = arith.constant 0 : i32
    %c0_i32_1 = arith.constant 0 : i32
    return %c0_i32, %c0_i32_0 : i32, i32
  }
  func.func @transform_22(%arg0: i32) -> (i32, i32) {
    %c0_i32 = arith.constant 0 : i32
    %c0_i32_0 = arith.constant 0 : i32
    %c0_i32_1 = arith.constant 0 : i32
    return %c0_i32, %c0_i32_0 : i32, i32
  }
  func.func @transform_23(%arg0: i32) -> (i32, i32) {
    %c0_i32 = arith.constant 0 : i32
    %c0_i32_0 = arith.constant 0 : i32
    %c0_i32_1 = arith.constant 0 : i32
    return %c0_i32, %c0_i32_0 : i32, i32
  }
  func.func @transform_24(%arg0: i32) -> (i32, i32) {
    %c0_i32 = arith.constant 0 : i32
    %c0_i32_0 = arith.constant 0 : i32
    return %arg0, %c0_i32 : i32, i32
  }
}

</mosaic_0001>

<llo_original>
// kernel: tpu_custom_call.1
$region0: #{tpu_custom_call.1}
  #allocation0 [shape = 'u32[]', space=smem, size = 0x4, offset = 0x4, fixed_abs, tag = 'smem constant byte address 0x4 - core index']
  #allocation1 [shape = 'u32[144,128]{1,0:T(1,128)}', space=vmem, size = 0x12000, scoped, tag = 'internal scratch']
  %s0 = inlined_call_operand.vmem [shape: s32[8,2], index: 0, kind: input, shape index: {}]
  %s1 = inlined_call_operand.vmem [shape: f32[8,2], index: 1, kind: input, shape index: {}]
  %s2 = inlined_call_operand.vmem [shape: s32[2,1], index: 2, kind: input, shape index: {}]
  %s3 = inlined_call_operand.vmem [shape: f32[2,8], index: 3, kind: input, shape index: {}]
  %s4 = inlined_call_operand.vmem [shape: f32[50,128], index: 4, kind: input, shape index: {}]
  %s5 = inlined_call_operand.vmem [shape: f32[1,128], index: 5, kind: input, shape index: {}]
  %s6 = inlined_call_operand.vmem [shape: f32[1,128], index: 6, kind: input, shape index: {}]
  %s7 = inlined_call_operand.vmem [shape: f32[32,128], index: 7, kind: input, shape index: {}]
  %s8 = inlined_call_operand.vmem [shape: f32[64,128], index: 8, kind: input, shape index: {}]
  %s9 = inlined_call_operand.vmem [shape: f32[1,128], index: 9, kind: input, shape index: {}]
  %s10 = inlined_call_operand.vmem [shape: f32[32,64], index: 10, kind: input, shape index: {}]
  %s11 = inlined_call_operand.vmem [shape: f32[1,64], index: 11, kind: input, shape index: {}]
  %s12 = inlined_call_operand.vmem [shape: f32[64,32], index: 12, kind: input, shape index: {}]
  %s13 = inlined_call_operand.vmem [shape: f32[1,32], index: 13, kind: input, shape index: {}]
  %s14 = inlined_call_operand.vmem [shape: f32[20,48], index: 14, kind: input, shape index: {}]
  %s15 = inlined_call_operand.vmem [shape: f32[8,48], index: 15, kind: input, shape index: {}]
  %s16 = inlined_call_operand.vmem [shape: f32[1,48], index: 16, kind: input, shape index: {}]
  %s17 = inlined_call_operand.vmem [shape: f32[48,32], index: 17, kind: input, shape index: {}]
  %s18 = inlined_call_operand.vmem [shape: f32[1,32], index: 18, kind: input, shape index: {}]
  %s19 = inlined_call_operand.vmem [shape: f32[32,128], index: 19, kind: input, shape index: {}]
  %s20 = inlined_call_operand.vmem [shape: f32[32,128], index: 20, kind: input, shape index: {}]
  %s21 = inlined_call_operand.vmem [shape: f32[1,128], index: 21, kind: input, shape index: {}]
  %s22 = inlined_call_operand.vmem [shape: f32[128,8], index: 22, kind: input, shape index: {}]
  %s23 = inlined_call_operand.vmem [shape: f32[1,8], index: 23, kind: input, shape index: {}]
  %s24 = inlined_call_operand.hbm [shape: f32[2,8], index: 24, kind: output, shape index: {}]
  %s25 = sld [smem:[#allocation0]]
  $region106: #{tpu_custom_call.1} parent=0
    _
  %s27 = ssub.s32 1, %s25
  %s28 = scalar_select 0, %s27, %s25
  $region1: #{tpu_custom_call.1} parent=0
    #allocation2 [shape = 'u8[1024]{0}', space=vmem, size = 0x400, scoped, tag = 'output window, operand 0, single buffered']
    #allocation3 [shape = 's32[1]{0}', space=sflag, size = 0x4, scoped, tag = 'scoped memory for tpu_custom_call.1']
    %29 = vsyncpa [#allocation3], 0
    // Predicated region
    $region2: #{tpu_custom_call.1} parent=1 // pred_check
      _
    $region3: #{tpu_custom_call.1} parent=1 // pred_check_branch
      %31 = sbr.rel (0) target = $region5
    $region4: #{tpu_custom_call.1} parent=1 // pred_region
      _
    $region5: #{tpu_custom_call.1} parent=1 // pred_fallthru
      _
    // Predicated region
    $region6: #{tpu_custom_call.1} parent=1 // pred_check
      _
    $region7: #{tpu_custom_call.1} parent=1 // pred_check_branch
      %33 = sbr.rel (0) target = $region9
    $region8: #{tpu_custom_call.1} parent=1 // pred_region
      _
    $region9: #{tpu_custom_call.1} parent=1 // pred_fallthru
      _
    // Predicated region
    $region10: #{tpu_custom_call.1} parent=1 // pred_check
      _
    $region11: #{tpu_custom_call.1} parent=1 // pred_check_branch
      %35 = sbr.rel (0) target = $region13
    $region12: #{tpu_custom_call.1} parent=1 // pred_region
      _
    $region13: #{tpu_custom_call.1} parent=1 // pred_fallthru
      _
    // Predicated region
    $region14: #{tpu_custom_call.1} parent=1 // pred_check
      _
    $region15: #{tpu_custom_call.1} parent=1 // pred_check_branch
      %37 = sbr.rel (0) target = $region17
    $region16: #{tpu_custom_call.1} parent=1 // pred_region
      _
    $region17: #{tpu_custom_call.1} parent=1 // pred_fallthru
      _
    // Predicated region
    $region18: #{tpu_custom_call.1} parent=1 // pred_check
      _
    $region19: #{tpu_custom_call.1} parent=1 // pred_check_branch
      %39 = sbr.rel (0) target = $region21
    $region20: #{tpu_custom_call.1} parent=1 // pred_region
      _
    $region21: #{tpu_custom_call.1} parent=1 // pred_fallthru
      _
    // Predicated region
    $region22: #{tpu_custom_call.1} parent=1 // pred_check
      _
    $region23: #{tpu_custom_call.1} parent=1 // pred_check_branch
      %41 = sbr.rel (0) target = $region25
    $region24: #{tpu_custom_call.1} parent=1 // pred_region
      _
    $region25: #{tpu_custom_call.1} parent=1 // pred_fallthru
      _
    // Predicated region
    $region26: #{tpu_custom_call.1} parent=1 // pred_check
      _
    $region27: #{tpu_custom_call.1} parent=1 // pred_check_branch
      %43 = sbr.rel (0) target = $region29
    $region28: #{tpu_custom_call.1} parent=1 // pred_region
      _
    $region29: #{tpu_custom_call.1} parent=1 // pred_fallthru
      _
    // Predicated region
    $region30: #{tpu_custom_call.1} parent=1 // pred_check
      _
    $region31: #{tpu_custom_call.1} parent=1 // pred_check_branch
      %45 = sbr.rel (0) target = $region33
    $region32: #{tpu_custom_call.1} parent=1 // pred_region
      _
    $region33: #{tpu_custom_call.1} parent=1 // pred_fallthru
      _
    // Predicated region
    $region34: #{tpu_custom_call.1} parent=1 // pred_check
      _
    $region35: #{tpu_custom_call.1} parent=1 // pred_check_branch
      %47 = sbr.rel (0) target = $region37
    $region36: #{tpu_custom_call.1} parent=1 // pred_region
      _
    $region37: #{tpu_custom_call.1} parent=1 // pred_fallthru
      _
    // Predicated region
    $region38: #{tpu_custom_call.1} parent=1 // pred_check
      _
    $region39: #{tpu_custom_call.1} parent=1 // pred_check_branch
      %49 = sbr.rel (0) target = $region41
    $region40: #{tpu_custom_call.1} parent=1 // pred_region
      _
    $region41: #{tpu_custom_call.1} parent=1 // pred_fallthru
      _
    // Predicated region
    $region42: #{tpu_custom_call.1} parent=1 // pred_check
      _
    $region43: #{tpu_custom_call.1} parent=1 // pred_check_branch
      %51 = sbr.rel (0) target = $region45
    $region44: #{tpu_custom_call.1} parent=1 // pred_region
      _
    $region45: #{tpu_custom_call.1} parent=1 // pred_fallthru
      _
    // Predicated region
    $region46: #{tpu_custom_call.1} parent=1 // pred_check
      _
    $region47: #{tpu_custom_call.1} parent=1 // pred_check_branch
      %53 = sbr.rel (0) target = $region49
    $region48: #{tpu_custom_call.1} parent=1 // pred_region
      _
    $region49: #{tpu_custom_call.1} parent=1 // pred_fallthru
      _
    // Predicated region
    $region50: #{tpu_custom_call.1} parent=1 // pred_check
      _
    $region51: #{tpu_custom_call.1} parent=1 // pred_check_branch
      %55 = sbr.rel (0) target = $region53
    $region52: #{tpu_custom_call.1} parent=1 // pred_region
      _
    $region53: #{tpu_custom_call.1} parent=1 // pred_fallthru
      _
    // Predicated region
    $region54: #{tpu_custom_call.1} parent=1 // pred_check
      _
    $region55: #{tpu_custom_call.1} parent=1 // pred_check_branch
      %57 = sbr.rel (0) target = $region57
    $region56: #{tpu_custom_call.1} parent=1 // pred_region
      _
    $region57: #{tpu_custom_call.1} parent=1 // pred_fallthru
      _
    // Predicated region
    $region58: #{tpu_custom_call.1} parent=1 // pred_check
      _
    $region59: #{tpu_custom_call.1} parent=1 // pred_check_branch
      %59 = sbr.rel (0) target = $region61
    $region60: #{tpu_custom_call.1} parent=1 // pred_region
      _
    $region61: #{tpu_custom_call.1} parent=1 // pred_fallthru
      _
    // Predicated region
    $region62: #{tpu_custom_call.1} parent=1 // pred_check
      _
    $region63: #{tpu_custom_call.1} parent=1 // pred_check_branch
      %61 = sbr.rel (0) target = $region65
    $region64: #{tpu_custom_call.1} parent=1 // pred_region
      _
    $region65: #{tpu_custom_call.1} parent=1 // pred_fallthru
      _
    // Predicated region
    $region66: #{tpu_custom_call.1} parent=1 // pred_check
      _
    $region67: #{tpu_custom_call.1} parent=1 // pred_check_branch
      %63 = sbr.rel (0) target = $region69
    $region68: #{tpu_custom_call.1} parent=1 // pred_region
      _
    $region69: #{tpu_custom_call.1} parent=1 // pred_fallthru
      _
    // Predicated region
    $region70: #{tpu_custom_call.1} parent=1 // pred_check
      _
    $region71: #{tpu_custom_call.1} parent=1 // pred_check_branch
      %65 = sbr.rel (0) target = $region73
    $region72: #{tpu_custom_call.1} parent=1 // pred_region
      _
    $region73: #{tpu_custom_call.1} parent=1 // pred_fallthru
      _
    // Predicated region
    $region74: #{tpu_custom_call.1} parent=1 // pred_check
      _
    $region75: #{tpu_custom_call.1} parent=1 // pred_check_branch
      %67 = sbr.rel (0) target = $region77
    $region76: #{tpu_custom_call.1} parent=1 // pred_region
      _
    $region77: #{tpu_custom_call.1} parent=1 // pred_fallthru
      _
    // Predicated region
    $region78: #{tpu_custom_call.1} parent=1 // pred_check
      _
    $region79: #{tpu_custom_call.1} parent=1 // pred_check_branch
      %69 = sbr.rel (0) target = $region81
    $region80: #{tpu_custom_call.1} parent=1 // pred_region
      _
    $region81: #{tpu_custom_call.1} parent=1 // pred_fallthru
      _
    // Predicated region
    $region82: #{tpu_custom_call.1} parent=1 // pred_check
      _
    $region83: #{tpu_custom_call.1} parent=1 // pred_check_branch
      %71 = sbr.rel (0) target = $region85
    $region84: #{tpu_custom_call.1} parent=1 // pred_region
      _
    $region85: #{tpu_custom_call.1} parent=1 // pred_fallthru
      _
    // Predicated region
    $region86: #{tpu_custom_call.1} parent=1 // pred_check
      _
    $region87: #{tpu_custom_call.1} parent=1 // pred_check_branch
      %73 = sbr.rel (0) target = $region89
    $region88: #{tpu_custom_call.1} parent=1 // pred_region
      _
    $region89: #{tpu_custom_call.1} parent=1 // pred_fallthru
      _
    // Predicated region
    $region90: #{tpu_custom_call.1} parent=1 // pred_check
      _
    $region91: #{tpu_custom_call.1} parent=1 // pred_check_branch
      %75 = sbr.rel (0) target = $region93
    $region92: #{tpu_custom_call.1} parent=1 // pred_region
      _
    $region93: #{tpu_custom_call.1} parent=1 // pred_fallthru
      _
    // Predicated region
    $region94: #{tpu_custom_call.1} parent=1 // pred_check
      _
    $region95: #{tpu_custom_call.1} parent=1 // pred_check_branch
      %77 = sbr.rel (0) target = $region97
    $region96: #{tpu_custom_call.1} parent=1 // pred_region
      _
    $region97: #{tpu_custom_call.1} parent=1 // pred_fallthru
      _
    %v78 = vld [vmem:[%s0] sm:$0xff]
    %v79 = vlaneseq
    %v80 = vand.u32 %v79, 127
    %v81 = vlaneseq
    %v82 = vshrl.u32 %v81, 7
    %v83 = vsub.s32 0, %v82
    %v84 = vrot.slane %v78, %v83
    %86 = vbcast.lane.b32.xlu0 %v84, 256
    %v87 = vpop.permute.xlu0 %86
    %v88 = vlaneseq
    %v89 = vshrl.u32 %v88, 7
    %v90 = vsub.s32 1, %v89
    %v91 = vrot.slane %v78, %v90
    %93 = vbcast.lane.b32.xlu0 %v91, 256
    %v94 = vpop.permute.xlu0 %93
    %v95 = vlaneseq
    %v96 = vshrl.u32 %v95, 7
    %v97 = vsub.s32 2, %v96
    %v98 = vrot.slane %v78, %v97
    %100 = vbcast.lane.b32.xlu0 %v98, 256
    %v101 = vpop.permute.xlu0 %100
    %v102 = vlaneseq
    %v103 = vshrl.u32 %v102, 7
    %v104 = vsub.s32 3, %v103
    %v105 = vrot.slane %v78, %v104
    %107 = vbcast.lane.b32.xlu0 %v105, 256
    %v108 = vpop.permute.xlu0 %107
    %v109 = vlaneseq
    %v110 = vshrl.u32 %v109, 7
    %v111 = vsub.s32 4, %v110
    %v112 = vrot.slane %v78, %v111
    %114 = vbcast.lane.b32.xlu0 %v112, 256
    %v115 = vpop.permute.xlu0 %114
    %v116 = vlaneseq
    %v117 = vshrl.u32 %v116, 7
    %v118 = vsub.s32 5, %v117
    %v119 = vrot.slane %v78, %v118
    %121 = vbcast.lane.b32.xlu0 %v119, 256
    %v122 = vpop.permute.xlu0 %121
    %v123 = vlaneseq
    %v124 = vshrl.u32 %v123, 7
    %v125 = vsub.s32 6, %v124
    %v126 = vrot.slane %v78, %v125
    %128 = vbcast.lane.b32.xlu0 %v126, 256
    %v129 = vpop.permute.xlu0 %128
    %v130 = vlaneseq
    %v131 = vshrl.u32 %v130, 7
    %v132 = vsub.s32 7, %v131
    %v133 = vrot.slane %v78, %v132
    %135 = vbcast.lane.b32.xlu0 %v133, 256
    %v136 = vpop.permute.xlu0 %135
    %vm137 = vcmp.eq.s32.totalorder %v80, %v87
    %vm138 = vcmp.eq.s32.totalorder %v80, %v94
    %vm139 = vcmp.eq.s32.totalorder %v80, %v101
    %vm140 = vcmp.eq.s32.totalorder %v80, %v108
    %vm141 = vcmp.eq.s32.totalorder %v80, %v115
    %vm142 = vcmp.eq.s32.totalorder %v80, %v122
    %vm143 = vcmp.eq.s32.totalorder %v80, %v129
    %vm144 = vcmp.eq.s32.totalorder %v80, %v136
    %v145 = vsel %vm137, 1, 0
    %v146 = vsel %vm138, 1, 0
    %v147 = vsel %vm139, 1, 0
    %v148 = vsel %vm140, 1, 0
    %v149 = vsel %vm141, 1, 0
    %v150 = vsel %vm142, 1, 0
    %v151 = vsel %vm143, 1, 0
    %v152 = vsel %vm144, 1, 0
    %v153 = vcvt.s32.f32 %v145
    %v154 = vcvt.s32.f32 %v146
    %v155 = vcvt.s32.f32 %v147
    %v156 = vcvt.s32.f32 %v148
    %v157 = vcvt.s32.f32 %v149
    %v158 = vcvt.s32.f32 %v150
    %v159 = vcvt.s32.f32 %v151
    %v160 = vcvt.s32.f32 %v152
    %v161 = vld [vmem:[%s4] sm:$0xff]
    %v162 = vld [vmem:[%s4 + $0x8] sm:$0xff]
    %v163 = vld [vmem:[%s4 + $0x10] sm:$0xff]
    %v164 = vld [vmem:[%s4 + $0x18] sm:$0xff]
    %v165 = vld [vmem:[%s4 + $0x20] sm:$0xff]
    %v166 = vld [vmem:[%s4 + $0x28] sm:$0xff]
    %v167 = vld [vmem:[%s4 + $0x30] sm:$0x3]
    %v168 = vld [vmem:[%s1] sm:$0xff]
    %v169 = vlaneseq
    %v170 = vshrl.u32 %v169, 7
    %v171 = vsub.s32 0, %v170
    %v172 = vrot.slane %v168, %v171
    %174 = vbcast.lane.b32.xlu0 %v172, 256
    %v175 = vpop.permute.xlu0 %174
    %v176 = vlaneseq
    %v177 = vshrl.u32 %v176, 7
    %v178 = vsub.s32 1, %v177
    %v179 = vrot.slane %v168, %v178
    %181 = vbcast.lane.b32.xlu0 %v179, 256
    %v182 = vpop.permute.xlu0 %181
    %v183 = vlaneseq
    %v184 = vshrl.u32 %v183, 7
    %v185 = vsub.s32 2, %v184
    %v186 = vrot.slane %v168, %v185
    %188 = vbcast.lane.b32.xlu0 %v186, 256
    %v189 = vpop.permute.xlu0 %188
    %v190 = vlaneseq
    %v191 = vshrl.u32 %v190, 7
    %v192 = vsub.s32 3, %v191
    %v193 = vrot.slane %v168, %v192
    %195 = vbcast.lane.b32.xlu0 %v193, 256
    %v196 = vpop.permute.xlu0 %195
    %v197 = vlaneseq
    %v198 = vshrl.u32 %v197, 7
    %v199 = vsub.s32 4, %v198
    %v200 = vrot.slane %v168, %v199
    %202 = vbcast.lane.b32.xlu0 %v200, 256
    %v203 = vpop.permute.xlu0 %202
    %v204 = vlaneseq
    %v205 = vshrl.u32 %v204, 7
    %v206 = vsub.s32 5, %v205
    %v207 = vrot.slane %v168, %v206
    %209 = vbcast.lane.b32.xlu0 %v207, 256
    %v210 = vpop.permute.xlu0 %209
    %v211 = vlaneseq
    %v212 = vshrl.u32 %v211, 7
    %v213 = vsub.s32 6, %v212
    %v214 = vrot.slane %v168, %v213
    %216 = vbcast.lane.b32.xlu0 %v214, 256
    %v217 = vpop.permute.xlu0 %216
    %v218 = vlaneseq
    %v219 = vshrl.u32 %v218, 7
    %v220 = vsub.s32 7, %v219
    %v221 = vrot.slane %v168, %v220
    %223 = vbcast.lane.b32.xlu0 %v221, 256
    %v224 = vpop.permute.xlu0 %223
    %v225 = vld [vmem:[%s5] sm:$0x1]
    %v227 = vlaneseq
    %v228 = vshrl.u32 %v227, 7
    %v229 = vsub.s32 0, %v228
    %v230 = vrot.slane %v225, %v229
    %v232 = vmul.f32 %v175, %v230
    %v233 = vmul.f32 %v182, %v230
    %v234 = vmul.f32 %v189, %v230
    %v235 = vmul.f32 %v196, %v230
    %v236 = vmul.f32 %v203, %v230
    %v237 = vmul.f32 %v210, %v230
    %v238 = vmul.f32 %v217, %v230
    %v239 = vmul.f32 %v224, %v230
    %v248 = vcombine.low %v153, %v154
    %v249 = vcombine.low %v155, %v156
    %v251 = vunpack.c.l.s4 1983009808
    %v252 = vunpack.c.0.s8 %v251
    %v253 = vlaneseq
    %v254 = vshrl.u32 %v253, 7
    %v255 = vsub.s32 %v252, %v254
    %v256 = vrot.slane %v248, %v255
    %v258 = vunpack.c.l.s4 1983009808
    %v259 = vunpack.c.0.s8 %v258
    %v260 = vlaneseq
    %v261 = vshrl.u32 %v260, 7
    %v262 = vsub.s32 %v259, %v261
    %v263 = vrot.slane %v249, %v262
    %v264 = vcombine.low %v256, %v263
    %v265 = vcombine.low %v157, %v158
    %v266 = vcombine.low %v159, %v160
    %v268 = vunpack.c.l.s4 1983009808
    %v269 = vunpack.c.0.s8 %v268
    %v270 = vlaneseq
    %v271 = vshrl.u32 %v270, 7
    %v272 = vsub.s32 %v269, %v271
    %v273 = vrot.slane %v265, %v272
    %v275 = vunpack.c.l.s4 1983009808
    %v276 = vunpack.c.0.s8 %v275
    %v277 = vlaneseq
    %v278 = vshrl.u32 %v277, 7
    %v279 = vsub.s32 %v276, %v278
    %v280 = vrot.slane %v266, %v279
    %v281 = vcombine.low %v273, %v280
    %v290 = vcombine.low %v232, %v233
    %v291 = vcombine.low %v234, %v235
    %v293 = vunpack.c.l.s4 1983009808
    %v294 = vunpack.c.0.s8 %v293
    %v295 = vlaneseq
    %v296 = vshrl.u32 %v295, 7
    %v297 = vsub.s32 %v294, %v296
    %v298 = vrot.slane %v290, %v297
    %v300 = vunpack.c.l.s4 1983009808
    %v301 = vunpack.c.0.s8 %v300
    %v302 = vlaneseq
    %v303 = vshrl.u32 %v302, 7
    %v304 = vsub.s32 %v301, %v303
    %v305 = vrot.slane %v291, %v304
    %v306 = vcombine.low %v298, %v305
    %v307 = vcombine.low %v236, %v237
    %v308 = vcombine.low %v238, %v239
    %v310 = vunpack.c.l.s4 1983009808
    %v311 = vunpack.c.0.s8 %v310
    %v312 = vlaneseq
    %v313 = vshrl.u32 %v312, 7
    %v314 = vsub.s32 %v311, %v313
    %v315 = vrot.slane %v307, %v314
    %v317 = vunpack.c.l.s4 1983009808
    %v318 = vunpack.c.0.s8 %v317
    %v319 = vlaneseq
    %v320 = vshrl.u32 %v319, 7
    %v321 = vsub.s32 %v318, %v320
    %v322 = vrot.slane %v308, %v321
    %v323 = vcombine.low %v315, %v322
    %vm326 = vcmask 408576
    %v327 = vsel %vm326, %v264, 0
    %v329 = vsel %vm326, %v281, 0
    %vm331 = vcmask 1041408
    %v333 = vsel %vm331, %v167, 0
    %335 = vmatprep.subr.mxu0 0.0
    %336 = vmatpush1.msra.mxu0 %v161
    %337 = vmatprep.subr.mxu0 0.0
    %338 = vmatpush1.msra.mxu0 %v162
    %339 = vmatprep.subr.mxu0 0.0
    %340 = vmatpush1.msra.mxu0 %v163
    %341 = vmatprep.subr.mxu0 0.0
    %342 = vmatpush1.msra.mxu0 %v164
    %343 = vmatprep.subr.mxu0 0.0
    %344 = vmatpush1.msra.mxu0 %v165
    %345 = vmatprep.subr.mxu0 0.0
    %346 = vmatpush1.msra.mxu0 %v166
    %347 = vmatprep.subr.mxu0 0.0
    %348 = vmatpush1.msra.mxu0 %v333
    %349 = vmatprep.subr.mxu0 0.0
    %350 = vmatpush1.msra.mxu0 0.0
    %351 = vmatprep.subr.mxu0 0.0
    %352 = vmatpush1.msra.mxu0 0.0
    %353 = vmatprep.subr.mxu0 0.0
    %354 = vmatpush1.msra.mxu0 0.0
    %355 = vmatprep.subr.mxu0 0.0
    %356 = vmatpush1.msra.mxu0 0.0
    %357 = vmatprep.subr.mxu0 0.0
    %358 = vmatpush1.msra.mxu0 0.0
    %359 = vmatprep.subr.mxu0 0.0
    %360 = vmatpush1.msra.mxu0 0.0
    %361 = vmatprep.subr.mxu0 0.0
    %362 = vmatpush1.msra.mxu0 0.0
    %363 = vmatprep.subr.mxu0 0.0
    %364 = vmatpush1.msra.mxu0 0.0
    %365 = vmatprep.subr.mxu0 0.0
    %366 = vmatpush1.msra.mxu0 0.0
    %367 = vmatprep.subr.mxu0 0.0
    %368 = vmatpush1.msra.mxu0 0.0
    %369 = vmatprep.subr.mxu0 0.0
    %370 = vmatpush1.msra.mxu0 0.0
    %371 = vmatprep.subr.mxu0 0.0
    %372 = vmatpush1.msra.mxu0 0.0
    %373 = vmatprep.subr.mxu0 0.0
    %374 = vmatpush1.msra.mxu0 0.0
    %375 = vmatprep.subr.mxu0 0.0
    %376 = vmatpush1.msra.mxu0 0.0
    %377 = vmatprep.subr.mxu0 0.0
    %378 = vmatpush1.msra.mxu0 0.0
    %379 = vmatprep.subr.mxu0 0.0
    %380 = vmatpush1.msra.mxu0 0.0
    %381 = vmatprep.subr.mxu0 0.0
    %382 = vmatpush1.msra.mxu0 0.0
    %383 = vmatprep.subr.mxu0 0.0
    %384 = vmatpush1.msra.mxu0 0.0
    %385 = vmatprep.subr.mxu0 0.0
    %386 = vmatpush1.msra.mxu0 0.0
    %387 = vmatprep.subr.mxu0 0.0
    %388 = vmatpush1.msra.mxu0 0.0
    %389 = vmatprep.subr.mxu0 0.0
    %390 = vmatpush1.msra.mxu0 0.0
    %391 = vmatprep.subr.mxu0 0.0
    %392 = vmatpush1.msra.mxu0 0.0
    %393 = vmatprep.subr.mxu0 0.0
    %394 = vmatpush1.msra.mxu0 0.0
    %395 = vmatprep.subr.mxu0 0.0
    %396 = vmatpush1.msra.mxu0 0.0
    %397 = vmatprep.subr.mxu0 0.0
    %398 = vmatpush1.msra.mxu0 0.0
    %399 = vmatprep.mubr.f32.mxu0 0.0
    %400 = vmatmul.mubr.f32.gmra.mrb[0].mxu0 %v327
    %v401 = vpop.f32.mrb[0].mxu0
    %v402 = vadd.f32 %v306, %v401
    %v403 = vpop.f32.mrb[0].mxu0
    %404 = vmatprep.mubr.f32.mxu0 0.0
    %405 = vmatmul.mubr.f32.gmra.mrb[0].mxu0 %v329
    %v406 = vpop.f32.mrb[0].mxu0
    %v407 = vadd.f32 %v323, %v406
    %v408 = vpop.f32.mrb[0].mxu0
    %409 = vdwg.mxu0
    %v410 = vld [vmem:[%s6] sm:$0x1]
    %v412 = vlaneseq
    %v413 = vshrl.u32 %v412, 7
    %v414 = vsub.s32 0, %v413
    %v415 = vrot.slane %v410, %v414
    %v417 = vadd.f32 %v402, %v415
    %v418 = vadd.f32 %v407, %v415
    %v419 = vld [vmem:[%s7] sm:$0xff]
    %v420 = vld [vmem:[%s7 + $0x8] sm:$0xff]
    %v421 = vld [vmem:[%s7 + $0x10] sm:$0xff]
    %v422 = vld [vmem:[%s7 + $0x18] sm:$0xff]
    %v423 = vld [vmem:[%s8] sm:$0xff]
    %v424 = vld [vmem:[%s8 + $0x8] sm:$0xff]
    %v425 = vld [vmem:[%s8 + $0x10] sm:$0xff]
    %v426 = vld [vmem:[%s8 + $0x18] sm:$0xff]
    %v427 = vld [vmem:[%s8 + $0x20] sm:$0xff]
    %v428 = vld [vmem:[%s8 + $0x28] sm:$0xff]
    %v429 = vld [vmem:[%s8 + $0x30] sm:$0xff]
    %v430 = vld [vmem:[%s8 + $0x38] sm:$0xff]
    %v431 = vld [vmem:[%s9] sm:$0x1]
    %vm432 = vcmask 261120
    %v434 = vsel %vm432, 0.0, 0
    %436 = vmatprep.subr.mxu0 0.0
    %437 = vmatpush1.msra.mxu0 %v419
    %438 = vmatprep.subr.mxu0 0.0
    %439 = vmatpush1.msra.mxu0 %v420
    %440 = vmatprep.subr.mxu0 0.0
    %441 = vmatpush1.msra.mxu0 %v421
    %442 = vmatprep.subr.mxu0 0.0
    %443 = vmatpush1.msra.mxu0 %v422
    %444 = vmatprep.subr.mxu0 0.0
    %445 = vmatpush1.msra.mxu0 0.0
    %446 = vmatprep.subr.mxu0 0.0
    %447 = vmatpush1.msra.mxu0 0.0
    %448 = vmatprep.subr.mxu0 0.0
    %449 = vmatpush1.msra.mxu0 0.0
    %450 = vmatprep.subr.mxu0 0.0
    %451 = vmatpush1.msra.mxu0 0.0
    %452 = vmatprep.subr.mxu0 0.0
    %453 = vmatpush1.msra.mxu0 0.0
    %454 = vmatprep.subr.mxu0 0.0
    %455 = vmatpush1.msra.mxu0 0.0
    %456 = vmatprep.subr.mxu0 0.0
    %457 = vmatpush1.msra.mxu0 0.0
    %458 = vmatprep.subr.mxu0 0.0
    %459 = vmatpush1.msra.mxu0 0.0
    %460 = vmatprep.subr.mxu0 0.0
    %461 = vmatpush1.msra.mxu0 0.0
    %462 = vmatprep.subr.mxu0 0.0
    %463 = vmatpush1.msra.mxu0 0.0
    %464 = vmatprep.subr.mxu0 0.0
    %465 = vmatpush1.msra.mxu0 0.0
    %466 = vmatprep.subr.mxu0 0.0
    %467 = vmatpush1.msra.mxu0 0.0
    %468 = vmatprep.subr.mxu0 0.0
    %469 = vmatpush1.msra.mxu0 0.0
    %470 = vmatprep.subr.mxu0 0.0
    %471 = vmatpush1.msra.mxu0 0.0
    %472 = vmatprep.subr.mxu0 0.0
    %473 = vmatpush1.msra.mxu0 0.0
    %474 = vmatprep.subr.mxu0 0.0
    %475 = vmatpush1.msra.mxu0 0.0
    %476 = vmatprep.subr.mxu0 0.0
    %477 = vmatpush1.msra.mxu0 0.0
    %478 = vmatprep.subr.mxu0 0.0
    %479 = vmatpush1.msra.mxu0 0.0
    %480 = vmatprep.subr.mxu0 0.0
    %481 = vmatpush1.msra.mxu0 0.0
    %482 = vmatprep.subr.mxu0 0.0
    %483 = vmatpush1.msra.mxu0 0.0
    %484 = vmatprep.subr.mxu0 0.0
    %485 = vmatpush1.msra.mxu0 0.0
    %486 = vmatprep.subr.mxu0 0.0
    %487 = vmatpush1.msra.mxu0 0.0
    %488 = vmatprep.subr.mxu0 0.0
    %489 = vmatpush1.msra.mxu0 0.0
    %490 = vmatprep.subr.mxu0 0.0
    %491 = vmatpush1.msra.mxu0 0.0
    %492 = vmatprep.subr.mxu0 0.0
    %493 = vmatpush1.msra.mxu0 0.0
    %494 = vmatprep.subr.mxu0 0.0
    %495 = vmatpush1.msra.mxu0 0.0
    %496 = vmatprep.subr.mxu0 0.0
    %497 = vmatpush1.msra.mxu0 0.0
    %498 = vmatprep.subr.mxu0 0.0
    %499 = vmatpush1.msra.mxu0 0.0
    %500 = vmatprep.mubr.f32.mxu0 0.0
    %501 = vmatmul.mubr.f32.gmra.mrb[0].mxu0 %v434
    %v502 = vpop.f32.mrb[0].mxu0
    %v503 = vadd.f32 0.0, %v502
    %v504 = vpop.f32.mrb[0].mxu0
    %505 = vdwg.mxu0
    %v506 = vadd.f32 %v417, %v503
    %v507 = vxor.u32 %v506, 2147483648
    %v508 = vmul.f32 %v507, 1.442695
    %v509 = vpow.pop %v508
    %v510 = vadd.f32 %v509, 1.0
    %v511 = vrcp.pop %v510
    %v512 = vmul.f32 1.0, %v511
    %v513 = vtanh.pop %v506
    %v514 = vmul.f32 %v512, 0.0
    %516 = vrot.lane.b32.xlu0 %v513, 32
    %v517 = vpop.permute.xlu0 %516
    %v519 = vmul.f32 %v512, %v517
    %521 = vrot.lane.b32.xlu0 %v519, 32
    %v522 = vpop.permute.xlu0 %521
    %v524 = vadd.f32 %v514, %v522
    %v525 = vtanh.pop %v524
    %527 = vrot.lane.b32.xlu0 %v525, 32
    %v528 = vpop.permute.xlu0 %527
    %v530 = vmul.f32 %v512, %v528
    %532 = vrot.lane.b32.xlu0 %v530, 64
    %v533 = vpop.permute.xlu0 %532
    %v535 = vsel %vm432, %v533, 0.0
    %v537 = vlaneseq
    %v538 = vshrl.u32 %v537, 7
    %v539 = vsub.s32 0, %v538
    %v540 = vrot.slane %v431, %v539
    %vm542 = vcmask 523264
    %v544 = vsel %vm542, %v535, 0
    %546 = vmatprep.subr.mxu0 0.0
    %547 = vmatpush1.msra.mxu0 %v423
    %548 = vmatprep.subr.mxu0 0.0
    %549 = vmatpush1.msra.mxu0 %v424
    %550 = vmatprep.subr.mxu0 0.0
    %551 = vmatpush1.msra.mxu0 %v425
    %552 = vmatprep.subr.mxu0 0.0
    %553 = vmatpush1.msra.mxu0 %v426
    %554 = vmatprep.subr.mxu0 0.0
    %555 = vmatpush1.msra.mxu0 %v427
    %556 = vmatprep.subr.mxu0 0.0
    %557 = vmatpush1.msra.mxu0 %v428
    %558 = vmatprep.subr.mxu0 0.0
    %559 = vmatpush1.msra.mxu0 %v429
    %560 = vmatprep.subr.mxu0 0.0
    %561 = vmatpush1.msra.mxu0 %v430
    %562 = vmatprep.subr.mxu0 0.0
    %563 = vmatpush1.msra.mxu0 0.0
    %564 = vmatprep.subr.mxu0 0.0
    %565 = vmatpush1.msra.mxu0 0.0
    %566 = vmatprep.subr.mxu0 0.0
    %567 = vmatpush1.msra.mxu0 0.0
    %568 = vmatprep.subr.mxu0 0.0
    %569 = vmatpush1.msra.mxu0 0.0
    %570 = vmatprep.subr.mxu0 0.0
    %571 = vmatpush1.msra.mxu0 0.0
    %572 = vmatprep.subr.mxu0 0.0
    %573 = vmatpush1.msra.mxu0 0.0
    %574 = vmatprep.subr.mxu0 0.0
    %575 = vmatpush1.msra.mxu0 0.0
    %576 = vmatprep.subr.mxu0 0.0
    %577 = vmatpush1.msra.mxu0 0.0
    %578 = vmatprep.subr.mxu0 0.0
    %579 = vmatpush1.msra.mxu0 0.0
    %580 = vmatprep.subr.mxu0 0.0
    %581 = vmatpush1.msra.mxu0 0.0
    %582 = vmatprep.subr.mxu0 0.0
    %583 = vmatpush1.msra.mxu0 0.0
    %584 = vmatprep.subr.mxu0 0.0
    %585 = vmatpush1.msra.mxu0 0.0
    %586 = vmatprep.subr.mxu0 0.0
    %587 = vmatpush1.msra.mxu0 0.0
    %588 = vmatprep.subr.mxu0 0.0
    %589 = vmatpush1.msra.mxu0 0.0
    %590 = vmatprep.subr.mxu0 0.0
    %591 = vmatpush1.msra.mxu0 0.0
    %592 = vmatprep.subr.mxu0 0.0
    %593 = vmatpush1.msra.mxu0 0.0
    %594 = vmatprep.subr.mxu0 0.0
    %595 = vmatpush1.msra.mxu0 0.0
    %596 = vmatprep.subr.mxu0 0.0
    %597 = vmatpush1.msra.mxu0 0.0
    %598 = vmatprep.subr.mxu0 0.0
    %599 = vmatpush1.msra.mxu0 0.0
    %600 = vmatprep.subr.mxu0 0.0
    %601 = vmatpush1.msra.mxu0 0.0
    %602 = vmatprep.subr.mxu0 0.0
    %603 = vmatpush1.msra.mxu0 0.0
    %604 = vmatprep.subr.mxu0 0.0
    %605 = vmatpush1.msra.mxu0 0.0
    %606 = vmatprep.subr.mxu0 0.0
    %607 = vmatpush1.msra.mxu0 0.0
    %608 = vmatprep.subr.mxu0 0.0
    %609 = vmatpush1.msra.mxu0 0.0
    %610 = vmatprep.mubr.f32.mxu0 0.0
    %611 = vmatmul.mubr.f32.gmra.mrb[0].mxu0 %v544
    %v612 = vpop.f32.mrb[0].mxu0
    %v613 = vadd.f32 %v540, %v612
    %v614 = vpop.f32.mrb[0].mxu0
    %615 = vdwg.mxu0
    %v616 = vxor.u32 %v613, 2147483648
    %v617 = vmul.f32 %v616, 1.442695
    %v618 = vpow.pop %v617
    %v619 = vadd.f32 %v618, 1.0
    %v620 = vrcp.pop %v619
    %v621 = vmul.f32 1.0, %v620
    %v622 = vtanh.pop %v613
    %v623 = vmul.f32 %v621, 0.0
    %625 = vrot.lane.b32.xlu0 %v622, 32
    %v626 = vpop.permute.xlu0 %625
    %v628 = vmul.f32 %v621, %v626
    %630 = vrot.lane.b32.xlu0 %v628, 32
    %v631 = vpop.permute.xlu0 %630
    %v633 = vadd.f32 %v623, %v631
    %v634 = vtanh.pop %v633
    %636 = vrot.lane.b32.xlu0 %v634, 32
    %v637 = vpop.permute.xlu0 %636
    %v639 = vmul.f32 %v621, %v637
    %v640 = vsel %vm432, %v533, 0
    %642 = vmatprep.subr.mxu0 0.0
    %643 = vmatpush1.msra.mxu0 %v419
    %644 = vmatprep.subr.mxu0 0.0
    %645 = vmatpush1.msra.mxu0 %v420
    %646 = vmatprep.subr.mxu0 0.0
    %647 = vmatpush1.msra.mxu0 %v421
    %648 = vmatprep.subr.mxu0 0.0
    %649 = vmatpush1.msra.mxu0 %v422
    %650 = vmatprep.subr.mxu0 0.0
    %651 = vmatpush1.msra.mxu0 0.0
    %652 = vmatprep.subr.mxu0 0.0
    %653 = vmatpush1.msra.mxu0 0.0
    %654 = vmatprep.subr.mxu0 0.0
    %655 = vmatpush1.msra.mxu0 0.0
    %656 = vmatprep.subr.mxu0 0.0
    %657 = vmatpush1.msra.mxu0 0.0
    %658 = vmatprep.subr.mxu0 0.0
    %659 = vmatpush1.msra.mxu0 0.0
    %660 = vmatprep.subr.mxu0 0.0
    %661 = vmatpush1.msra.mxu0 0.0
    %662 = vmatprep.subr.mxu0 0.0
    %663 = vmatpush1.msra.mxu0 0.0
    %664 = vmatprep.subr.mxu0 0.0
    %665 = vmatpush1.msra.mxu0 0.0
    %666 = vmatprep.subr.mxu0 0.0
    %667 = vmatpush1.msra.mxu0 0.0
    %668 = vmatprep.subr.mxu0 0.0
    %669 = vmatpush1.msra.mxu0 0.0
    %670 = vmatprep.subr.mxu0 0.0
    %671 = vmatpush1.msra.mxu0 0.0
    %672 = vmatprep.subr.mxu0 0.0
    %673 = vmatpush1.msra.mxu0 0.0
    %674 = vmatprep.subr.mxu0 0.0
    %675 = vmatpush1.msra.mxu0 0.0
    %676 = vmatprep.subr.mxu0 0.0
    %677 = vmatpush1.msra.mxu0 0.0
    %678 = vmatprep.subr.mxu0 0.0
    %679 = vmatpush1.msra.mxu0 0.0
    %680 = vmatprep.subr.mxu0 0.0
    %681 = vmatpush1.msra.mxu0 0.0
    %682 = vmatprep.subr.mxu0 0.0
    %683 = vmatpush1.msra.mxu0 0.0
    %684 = vmatprep.subr.mxu0 0.0
    %685 = vmatpush1.msra.mxu0 0.0
    %686 = vmatprep.subr.mxu0 0.0
    %687 = vmatpush1.msra.mxu0 0.0
    %688 = vmatprep.subr.mxu0 0.0
    %689 = vmatpush1.msra.mxu0 0.0
    %690 = vmatprep.subr.mxu0 0.0
    %691 = vmatpush1.msra.mxu0 0.0
    %692 = vmatprep.subr.mxu0 0.0
    %693 = vmatpush1.msra.mxu0 0.0
    %694 = vmatprep.subr.mxu0 0.0
    %695 = vmatpush1.msra.mxu0 0.0
    %696 = vmatprep.subr.mxu0 0.0
    %697 = vmatpush1.msra.mxu0 0.0
    %698 = vmatprep.subr.mxu0 0.0
    %699 = vmatpush1.msra.mxu0 0.0
    %700 = vmatprep.subr.mxu0 0.0
    %701 = vmatpush1.msra.mxu0 0.0
    %702 = vmatprep.subr.mxu0 0.0
    %703 = vmatpush1.msra.mxu0 0.0
    %704 = vmatprep.subr.mxu0 0.0
    %705 = vmatpush1.msra.mxu0 0.0
    %706 = vmatprep.mubr.f32.mxu0 0.0
    %707 = vmatmul.mubr.f32.gmra.mrb[0].mxu0 %v640
    %v708 = vpop.f32.mrb[0].mxu0
    %v709 = vadd.f32 0.0, %v708
    %v710 = vpop.f32.mrb[0].mxu0
    %711 = vdwg.mxu0
    %v713 = vrot.slane %v709, 6
    %v715 = vadd.f32 %v417, %v713
    %v716 = vxor.u32 %v715, 2147483648
    %v717 = vmul.f32 %v716, 1.442695
    %v718 = vpow.pop %v717
    %v719 = vadd.f32 %v718, 1.0
    %v720 = vrcp.pop %v719
    %v721 = vmul.f32 1.0, %v720
    %v722 = vtanh.pop %v715
    %v724 = vrot.slane %v524, 6
    %v726 = vmul.f32 %v721, %v724
    %728 = vrot.lane.b32.xlu0 %v722, 32
    %v729 = vpop.permute.xlu0 %728
    %v731 = vmul.f32 %v721, %v729
    %733 = vrot.lane.b32.xlu0 %v731, 32
    %v734 = vpop.permute.xlu0 %733
    %v736 = vadd.f32 %v726, %v734
    %v737 = vtanh.pop %v736
    %739 = vrot.lane.b32.xlu0 %v737, 32
    %v740 = vpop.permute.xlu0 %739
    %v742 = vmul.f32 %v721, %v740
    %744 = vrot.lane.b32.xlu0 %v742, 64
    %v745 = vpop.permute.xlu0 %744
    %v748 = vrot.slane %v639, 6
    %749 = vrot.lane.b32.xlu0 %v748, 96
    %v750 = vpop.permute.xlu0 %749
    %v752 = vsel %vm432, %v745, %v750
    %v754 = vrot.slane %v752, 2
    %v755 = vsel %vm542, %v754, 0
    %757 = vmatprep.subr.mxu0 0.0
    %758 = vmatpush1.msra.mxu0 %v423
    %759 = vmatprep.subr.mxu0 0.0
    %760 = vmatpush1.msra.mxu0 %v424
    %761 = vmatprep.subr.mxu0 0.0
    %762 = vmatpush1.msra.mxu0 %v425
    %763 = vmatprep.subr.mxu0 0.0
    %764 = vmatpush1.msra.mxu0 %v426
    %765 = vmatprep.subr.mxu0 0.0
    %766 = vmatpush1.msra.mxu0 %v427
    %767 = vmatprep.subr.mxu0 0.0
    %768 = vmatpush1.msra.mxu0 %v428
    %769 = vmatprep.subr.mxu0 0.0
    %770 = vmatpush1.msra.mxu0 %v429
    %771 = vmatprep.subr.mxu0 0.0
    %772 = vmatpush1.msra.mxu0 %v430
    %773 = vmatprep.subr.mxu0 0.0
    %774 = vmatpush1.msra.mxu0 0.0
    %775 = vmatprep.subr.mxu0 0.0
    %776 = vmatpush1.msra.mxu0 0.0
    %777 = vmatprep.subr.mxu0 0.0
    %778 = vmatpush1.msra.mxu0 0.0
    %779 = vmatprep.subr.mxu0 0.0
    %780 = vmatpush1.msra.mxu0 0.0
    %781 = vmatprep.subr.mxu0 0.0
    %782 = vmatpush1.msra.mxu0 0.0
    %783 = vmatprep.subr.mxu0 0.0
    %784 = vmatpush1.msra.mxu0 0.0
    %785 = vmatprep.subr.mxu0 0.0
    %786 = vmatpush1.msra.mxu0 0.0
    %787 = vmatprep.subr.mxu0 0.0
    %788 = vmatpush1.msra.mxu0 0.0
    %789 = vmatprep.subr.mxu0 0.0
    %790 = vmatpush1.msra.mxu0 0.0
    %791 = vmatprep.subr.mxu0 0.0
    %792 = vmatpush1.msra.mxu0 0.0
    %793 = vmatprep.subr.mxu0 0.0
    %794 = vmatpush1.msra.mxu0 0.0
    %795 = vmatprep.subr.mxu0 0.0
    %796 = vmatpush1.msra.mxu0 0.0
    %797 = vmatprep.subr.mxu0 0.0
    %798 = vmatpush1.msra.mxu0 0.0
    %799 = vmatprep.subr.mxu0 0.0
    %800 = vmatpush1.msra.mxu0 0.0
    %801 = vmatprep.subr.mxu0 0.0
    %802 = vmatpush1.msra.mxu0 0.0
    %803 = vmatprep.subr.mxu0 0.0
    %804 = vmatpush1.msra.mxu0 0.0
    %805 = vmatprep.subr.mxu0 0.0
    %806 = vmatpush1.msra.mxu0 0.0
    %807 = vmatprep.subr.mxu0 0.0
    %808 = vmatpush1.msra.mxu0 0.0
    %809 = vmatprep.subr.mxu0 0.0
    %810 = vmatpush1.msra.mxu0 0.0
    %811 = vmatprep.subr.mxu0 0.0
    %812 = vmatpush1.msra.mxu0 0.0
    %813 = vmatprep.subr.mxu0 0.0
    %814 = vmatpush1.msra.mxu0 0.0
    %815 = vmatprep.subr.mxu0 0.0
    %816 = vmatpush1.msra.mxu0 0.0
    %817 = vmatprep.subr.mxu0 0.0
    %818 = vmatpush1.msra.mxu0 0.0
    %819 = vmatprep.subr.mxu0 0.0
    %820 = vmatpush1.msra.mxu0 0.0
    %821 = vmatprep.mubr.f32.mxu0 0.0
    %822 = vmatmul.mubr.f32.gmra.mrb[0].mxu0 %v755
    %v823 = vpop.f32.mrb[0].mxu0
    %v824 = vadd.f32 %v540, %v823
    %v825 = vpop.f32.mrb[0].mxu0
    %826 = vdwg.mxu0
    %v827 = vxor.u32 %v824, 2147483648
    %v828 = vmul.f32 %v827, 1.442695
    %v829 = vpow.pop %v828
    %v830 = vadd.f32 %v829, 1.0
    %v831 = vrcp.pop %v830
    %v832 = vmul.f32 1.0, %v831
    %v833 = vtanh.pop %v824
    %v834 = vmul.f32 %v832, %v633
    %836 = vrot.lane.b32.xlu0 %v833, 32
    %v837 = vpop.permute.xlu0 %836
    %v839 = vmul.f32 %v832, %v837
    %841 = vrot.lane.b32.xlu0 %v839, 32
    %v842 = vpop.permute.xlu0 %841
    %v844 = vadd.f32 %v834, %v842
    %v845 = vtanh.pop %v844
    %847 = vrot.lane.b32.xlu0 %v845, 32
    %v848 = vpop.permute.xlu0 %847
    %v850 = vmul.f32 %v832, %v848
    %v851 = vrot.slane %v742, 2
    %852 = vrot.lane.b32.xlu0 %v851, 64
    %v853 = vpop.permute.xlu0 %852
    %v854 = vsel %vm432, %v853, 0
    %856 = vmatprep.subr.mxu0 0.0
    %857 = vmatpush1.msra.mxu0 %v419
    %858 = vmatprep.subr.mxu0 0.0
    %859 = vmatpush1.msra.mxu0 %v420
    %860 = vmatprep.subr.mxu0 0.0
    %861 = vmatpush1.msra.mxu0 %v421
    %862 = vmatprep.subr.mxu0 0.0
    %863 = vmatpush1.msra.mxu0 %v422
    %864 = vmatprep.subr.mxu0 0.0
    %865 = vmatpush1.msra.mxu0 0.0
    %866 = vmatprep.subr.mxu0 0.0
    %867 = vmatpush1.msra.mxu0 0.0
    %868 = vmatprep.subr.mxu0 0.0
    %869 = vmatpush1.msra.mxu0 0.0
    %870 = vmatprep.subr.mxu0 0.0
    %871 = vmatpush1.msra.mxu0 0.0
    %872 = vmatprep.subr.mxu0 0.0
    %873 = vmatpush1.msra.mxu0 0.0
    %874 = vmatprep.subr.mxu0 0.0
    %875 = vmatpush1.msra.mxu0 0.0
    %876 = vmatprep.subr.mxu0 0.0
    %877 = vmatpush1.msra.mxu0 0.0
    %878 = vmatprep.subr.mxu0 0.0
    %879 = vmatpush1.msra.mxu0 0.0
    %880 = vmatprep.subr.mxu0 0.0
    %881 = vmatpush1.msra.mxu0 0.0
    %882 = vmatprep.subr.mxu0 0.0
    %883 = vmatpush1.msra.mxu0 0.0
    %884 = vmatprep.subr.mxu0 0.0
    %885 = vmatpush1.msra.mxu0 0.0
    %886 = vmatprep.subr.mxu0 0.0
    %887 = vmatpush1.msra.mxu0 0.0
    %888 = vmatprep.subr.mxu0 0.0
    %889 = vmatpush1.msra.mxu0 0.0
    %890 = vmatprep.subr.mxu0 0.0
    %891 = vmatpush1.msra.mxu0 0.0
    %892 = vmatprep.subr.mxu0 0.0
    %893 = vmatpush1.msra.mxu0 0.0
    %894 = vmatprep.subr.mxu0 0.0
    %895 = vmatpush1.msra.mxu0 0.0
    %896 = vmatprep.subr.mxu0 0.0
    %897 = vmatpush1.msra.mxu0 0.0
    %898 = vmatprep.subr.mxu0 0.0
    %899 = vmatpush1.msra.mxu0 0.0
    %900 = vmatprep.subr.mxu0 0.0
    %901 = vmatpush1.msra.mxu0 0.0
    %902 = vmatprep.subr.mxu0 0.0
    %903 = vmatpush1.msra.mxu0 0.0
    %904 = vmatprep.subr.mxu0 0.0
    %905 = vmatpush1.msra.mxu0 0.0
    %906 = vmatprep.subr.mxu0 0.0
    %907 = vmatpush1.msra.mxu0 0.0
    %908 = vmatprep.subr.mxu0 0.0
    %909 = vmatpush1.msra.mxu0 0.0
    %910 = vmatprep.subr.mxu0 0.0
    %911 = vmatpush1.msra.mxu0 0.0
    %912 = vmatprep.subr.mxu0 0.0
    %913 = vmatpush1.msra.mxu0 0.0
    %914 = vmatprep.subr.mxu0 0.0
    %915 = vmatpush1.msra.mxu0 0.0
    %916 = vmatprep.subr.mxu0 0.0
    %917 = vmatpush1.msra.mxu0 0.0
    %918 = vmatprep.subr.mxu0 0.0
    %919 = vmatpush1.msra.mxu0 0.0
    %920 = vmatprep.mubr.f32.mxu0 0.0
    %921 = vmatmul.mubr.f32.gmra.mrb[0].mxu0 %v854
    %v922 = vpop.f32.mrb[0].mxu0
    %v923 = vadd.f32 0.0, %v922
    %v924 = vpop.f32.mrb[0].mxu0
    %925 = vdwg.mxu0
    %v927 = vrot.slane %v923, 4
    %v929 = vadd.f32 %v417, %v927
    %v930 = vxor.u32 %v929, 2147483648
    %v931 = vmul.f32 %v930, 1.442695
    %v932 = vpow.pop %v931
    %v933 = vadd.f32 %v932, 1.0
    %v934 = vrcp.pop %v933
    %v935 = vmul.f32 1.0, %v934
    %v936 = vtanh.pop %v929
    %v938 = vrot.slane %v736, 6
    %v940 = vmul.f32 %v935, %v938
    %942 = vrot.lane.b32.xlu0 %v936, 32
    %v943 = vpop.permute.xlu0 %942
    %v945 = vmul.f32 %v935, %v943
    %947 = vrot.lane.b32.xlu0 %v945, 32
    %v948 = vpop.permute.xlu0 %947
    %v950 = vadd.f32 %v940, %v948
    %v951 = vtanh.pop %v950
    %953 = vrot.lane.b32.xlu0 %v951, 32
    %v954 = vpop.permute.xlu0 %953
    %v956 = vmul.f32 %v935, %v954
    %958 = vrot.lane.b32.xlu0 %v956, 64
    %v959 = vpop.permute.xlu0 %958
    %v962 = vrot.slane %v850, 4
    %963 = vrot.lane.b32.xlu0 %v962, 96
    %v964 = vpop.permute.xlu0 %963
    %v966 = vsel %vm432, %v959, %v964
    %v968 = vrot.slane %v966, 4
    %v969 = vsel %vm542, %v968, 0
    %971 = vmatprep.subr.mxu0 0.0
    %972 = vmatpush1.msra.mxu0 %v423
    %973 = vmatprep.subr.mxu0 0.0
    %974 = vmatpush1.msra.mxu0 %v424
    %975 = vmatprep.subr.mxu0 0.0
    %976 = vmatpush1.msra.mxu0 %v425
    %977 = vmatprep.subr.mxu0 0.0
    %978 = vmatpush1.msra.mxu0 %v426
    %979 = vmatprep.subr.mxu0 0.0
    %980 = vmatpush1.msra.mxu0 %v427
    %981 = vmatprep.subr.mxu0 0.0
    %982 = vmatpush1.msra.mxu0 %v428
    %983 = vmatprep.subr.mxu0 0.0
    %984 = vmatpush1.msra.mxu0 %v429
    %985 = vmatprep.subr.mxu0 0.0
    %986 = vmatpush1.msra.mxu0 %v430
    %987 = vmatprep.subr.mxu0 0.0
    %988 = vmatpush1.msra.mxu0 0.0
    %989 = vmatprep.subr.mxu0 0.0
    %990 = vmatpush1.msra.mxu0 0.0
    %991 = vmatprep.subr.mxu0 0.0
    %992 = vmatpush1.msra.mxu0 0.0
    %993 = vmatprep.subr.mxu0 0.0
    %994 = vmatpush1.msra.mxu0 0.0
    %995 = vmatprep.subr.mxu0 0.0
    %996 = vmatpush1.msra.mxu0 0.0
    %997 = vmatprep.subr.mxu0 0.0
    %998 = vmatpush1.msra.mxu0 0.0
    %999 = vmatprep.subr.mxu0 0.0
    %1000 = vmatpush1.msra.mxu0 0.0
    %1001 = vmatprep.subr.mxu0 0.0
    %1002 = vmatpush1.msra.mxu0 0.0
    %1003 = vmatprep.subr.mxu0 0.0
    %1004 = vmatpush1.msra.mxu0 0.0
    %1005 = vmatprep.subr.mxu0 0.0
    %1006 = vmatpush1.msra.mxu0 0.0
    %1007 = vmatprep.subr.mxu0 0.0
    %1008 = vmatpush1.msra.mxu0 0.0
    %1009 = vmatprep.subr.mxu0 0.0
    %1010 = vmatpush1.msra.mxu0 0.0
    %1011 = vmatprep.subr.mxu0 0.0
    %1012 = vmatpush1.msra.mxu0 0.0
    %1013 = vmatprep.subr.mxu0 0.0
    %1014 = vmatpush1.msra.mxu0 0.0
    %1015 = vmatprep.subr.mxu0 0.0
    %1016 = vmatpush1.msra.mxu0 0.0
    %1017 = vmatprep.subr.mxu0 0.0
    %1018 = vmatpush1.msra.mxu0 0.0
    %1019 = vmatprep.subr.mxu0 0.0
    %1020 = vmatpush1.msra.mxu0 0.0
    %1021 = vmatprep.subr.mxu0 0.0
    %1022 = vmatpush1.msra.mxu0 0.0
    %1023 = vmatprep.subr.mxu0 0.0
    %1024 = vmatpush1.msra.mxu0 0.0
    %1025 = vmatprep.subr.mxu0 0.0
    %1026 = vmatpush1.msra.mxu0 0.0
    %1027 = vmatprep.subr.mxu0 0.0
    %1028 = vmatpush1.msra.mxu0 0.0
    %1029 = vmatprep.subr.mxu0 0.0
    %1030 = vmatpush1.msra.mxu0 0.0
    %1031 = vmatprep.subr.mxu0 0.0
    %1032 = vmatpush1.msra.mxu0 0.0
    %1033 = vmatprep.subr.mxu0 0.0
    %1034 = vmatpush1.msra.mxu0 0.0
    %1035 = vmatprep.mubr.f32.mxu0 0.0
    %1036 = vmatmul.mubr.f32.gmra.mrb[0].mxu0 %v969
    %v1037 = vpop.f32.mrb[0].mxu0
    %v1038 = vadd.f32 %v540, %v1037
    %v1039 = vpop.f32.mrb[0].mxu0
    %1040 = vdwg.mxu0
    %v1041 = vxor.u32 %v1038, 2147483648
    %v1042 = vmul.f32 %v1041, 1.442695
    %v1043 = vpow.pop %v1042
    %v1044 = vadd.f32 %v1043, 1.0
    %v1045 = vrcp.pop %v1044
    %v1046 = vmul.f32 1.0, %v1045
    %v1047 = vtanh.pop %v1038
    %v1048 = vmul.f32 %v1046, %v844
    %1050 = vrot.lane.b32.xlu0 %v1047, 32
    %v1051 = vpop.permute.xlu0 %1050
    %v1053 = vmul.f32 %v1046, %v1051
    %1055 = vrot.lane.b32.xlu0 %v1053, 32
    %v1056 = vpop.permute.xlu0 %1055
    %v1058 = vadd.f32 %v1048, %v1056
    %v1059 = vtanh.pop %v1058
    %1061 = vrot.lane.b32.xlu0 %v1059, 32
    %v1062 = vpop.permute.xlu0 %1061
    %v1064 = vmul.f32 %v1046, %v1062
    %v1065 = vrot.slane %v956, 4
    %1066 = vrot.lane.b32.xlu0 %v1065, 64
    %v1067 = vpop.permute.xlu0 %1066
    %v1068 = vsel %vm432, %v1067, 0
    %1070 = vmatprep.subr.mxu0 0.0
    %1071 = vmatpush1.msra.mxu0 %v419
    %1072 = vmatprep.subr.mxu0 0.0
    %1073 = vmatpush1.msra.mxu0 %v420
    %1074 = vmatprep.subr.mxu0 0.0
    %1075 = vmatpush1.msra.mxu0 %v421
    %1076 = vmatprep.subr.mxu0 0.0
    %1077 = vmatpush1.msra.mxu0 %v422
    %1078 = vmatprep.subr.mxu0 0.0
    %1079 = vmatpush1.msra.mxu0 0.0
    %1080 = vmatprep.subr.mxu0 0.0
    %1081 = vmatpush1.msra.mxu0 0.0
    %1082 = vmatprep.subr.mxu0 0.0
    %1083 = vmatpush1.msra.mxu0 0.0
    %1084 = vmatprep.subr.mxu0 0.0
    %1085 = vmatpush1.msra.mxu0 0.0
    %1086 = vmatprep.subr.mxu0 0.0
    %1087 = vmatpush1.msra.mxu0 0.0
    %1088 = vmatprep.subr.mxu0 0.0
    %1089 = vmatpush1.msra.mxu0 0.0
    %1090 = vmatprep.subr.mxu0 0.0
    %1091 = vmatpush1.msra.mxu0 0.0
    %1092 = vmatprep.subr.mxu0 0.0
    %1093 = vmatpush1.msra.mxu0 0.0
    %1094 = vmatprep.subr.mxu0 0.0
    %1095 = vmatpush1.msra.mxu0 0.0
    %1096 = vmatprep.subr.mxu0 0.0
    %1097 = vmatpush1.msra.mxu0 0.0
    %1098 = vmatprep.subr.mxu0 0.0
    %1099 = vmatpush1.msra.mxu0 0.0
    %1100 = vmatprep.subr.mxu0 0.0
    %1101 = vmatpush1.msra.mxu0 0.0
    %1102 = vmatprep.subr.mxu0 0.0
    %1103 = vmatpush1.msra.mxu0 0.0
    %1104 = vmatprep.subr.mxu0 0.0
    %1105 = vmatpush1.msra.mxu0 0.0
    %1106 = vmatprep.subr.mxu0 0.0
    %1107 = vmatpush1.msra.mxu0 0.0
    %1108 = vmatprep.subr.mxu0 0.0
    %1109 = vmatpush1.msra.mxu0 0.0
    %1110 = vmatprep.subr.mxu0 0.0
    %1111 = vmatpush1.msra.mxu0 0.0
    %1112 = vmatprep.subr.mxu0 0.0
    %1113 = vmatpush1.msra.mxu0 0.0
    %1114 = vmatprep.subr.mxu0 0.0
    %1115 = vmatpush1.msra.mxu0 0.0
    %1116 = vmatprep.subr.mxu0 0.0
    %1117 = vmatpush1.msra.mxu0 0.0
    %1118 = vmatprep.subr.mxu0 0.0
    %1119 = vmatpush1.msra.mxu0 0.0
    %1120 = vmatprep.subr.mxu0 0.0
    %1121 = vmatpush1.msra.mxu0 0.0
    %1122 = vmatprep.subr.mxu0 0.0
    %1123 = vmatpush1.msra.mxu0 0.0
    %1124 = vmatprep.subr.mxu0 0.0
    %1125 = vmatpush1.msra.mxu0 0.0
    %1126 = vmatprep.subr.mxu0 0.0
    %1127 = vmatpush1.msra.mxu0 0.0
    %1128 = vmatprep.subr.mxu0 0.0
    %1129 = vmatpush1.msra.mxu0 0.0
    %1130 = vmatprep.subr.mxu0 0.0
    %1131 = vmatpush1.msra.mxu0 0.0
    %1132 = vmatprep.subr.mxu0 0.0
    %1133 = vmatpush1.msra.mxu0 0.0
    %1134 = vmatprep.mubr.f32.mxu0 0.0
    %1135 = vmatmul.mubr.f32.gmra.mrb[0].mxu0 %v1068
    %v1136 = vpop.f32.mrb[0].mxu0
    %v1137 = vadd.f32 0.0, %v1136
    %v1138 = vpop.f32.mrb[0].mxu0
    %1139 = vdwg.mxu0
    %v1141 = vrot.slane %v1137, 2
    %v1143 = vadd.f32 %v417, %v1141
    %v1144 = vxor.u32 %v1143, 2147483648
    %v1145 = vmul.f32 %v1144, 1.442695
    %v1146 = vpow.pop %v1145
    %v1147 = vadd.f32 %v1146, 1.0
    %v1148 = vrcp.pop %v1147
    %v1149 = vmul.f32 1.0, %v1148
    %v1150 = vtanh.pop %v1143
    %v1152 = vrot.slane %v950, 6
    %v1154 = vmul.f32 %v1149, %v1152
    %1156 = vrot.lane.b32.xlu0 %v1150, 32
    %v1157 = vpop.permute.xlu0 %1156
    %v1159 = vmul.f32 %v1149, %v1157
    %1161 = vrot.lane.b32.xlu0 %v1159, 32
    %v1162 = vpop.permute.xlu0 %1161
    %v1164 = vadd.f32 %v1154, %v1162
    %v1165 = vtanh.pop %v1164
    %1167 = vrot.lane.b32.xlu0 %v1165, 32
    %v1168 = vpop.permute.xlu0 %1167
    %v1170 = vmul.f32 %v1149, %v1168
    %1172 = vrot.lane.b32.xlu0 %v1170, 64
    %v1173 = vpop.permute.xlu0 %1172
    %v1176 = vrot.slane %v1064, 2
    %1177 = vrot.lane.b32.xlu0 %v1176, 96
    %v1178 = vpop.permute.xlu0 %1177
    %v1180 = vsel %vm432, %v1173, %v1178
    %v1182 = vrot.slane %v1180, 6
    %v1183 = vsel %vm542, %v1182, 0
    %1185 = vmatprep.subr.mxu0 0.0
    %1186 = vmatpush1.msra.mxu0 %v423
    %1187 = vmatprep.subr.mxu0 0.0
    %1188 = vmatpush1.msra.mxu0 %v424
    %1189 = vmatprep.subr.mxu0 0.0
    %1190 = vmatpush1.msra.mxu0 %v425
    %1191 = vmatprep.subr.mxu0 0.0
    %1192 = vmatpush1.msra.mxu0 %v426
    %1193 = vmatprep.subr.mxu0 0.0
    %1194 = vmatpush1.msra.mxu0 %v427
    %1195 = vmatprep.subr.mxu0 0.0
    %1196 = vmatpush1.msra.mxu0 %v428
    %1197 = vmatprep.subr.mxu0 0.0
    %1198 = vmatpush1.msra.mxu0 %v429
    %1199 = vmatprep.subr.mxu0 0.0
    %1200 = vmatpush1.msra.mxu0 %v430
    %1201 = vmatprep.subr.mxu0 0.0
    %1202 = vmatpush1.msra.mxu0 0.0
    %1203 = vmatprep.subr.mxu0 0.0
    %1204 = vmatpush1.msra.mxu0 0.0
    %1205 = vmatprep.subr.mxu0 0.0
    %1206 = vmatpush1.msra.mxu0 0.0
    %1207 = vmatprep.subr.mxu0 0.0
    %1208 = vmatpush1.msra.mxu0 0.0
    %1209 = vmatprep.subr.mxu0 0.0
    %1210 = vmatpush1.msra.mxu0 0.0
    %1211 = vmatprep.subr.mxu0 0.0
    %1212 = vmatpush1.msra.mxu0 0.0
    %1213 = vmatprep.subr.mxu0 0.0
    %1214 = vmatpush1.msra.mxu0 0.0
    %1215 = vmatprep.subr.mxu0 0.0
    %1216 = vmatpush1.msra.mxu0 0.0
    %1217 = vmatprep.subr.mxu0 0.0
    %1218 = vmatpush1.msra.mxu0 0.0
    %1219 = vmatprep.subr.mxu0 0.0
    %1220 = vmatpush1.msra.mxu0 0.0
    %1221 = vmatprep.subr.mxu0 0.0
    %1222 = vmatpush1.msra.mxu0 0.0
    %1223 = vmatprep.subr.mxu0 0.0
    %1224 = vmatpush1.msra.mxu0 0.0
    %1225 = vmatprep.subr.mxu0 0.0
    %1226 = vmatpush1.msra.mxu0 0.0
    %1227 = vmatprep.subr.mxu0 0.0
    %1228 = vmatpush1.msra.mxu0 0.0
    %1229 = vmatprep.subr.mxu0 0.0
    %1230 = vmatpush1.msra.mxu0 0.0
    %1231 = vmatprep.subr.mxu0 0.0
    %1232 = vmatpush1.msra.mxu0 0.0
    %1233 = vmatprep.subr.mxu0 0.0
    %1234 = vmatpush1.msra.mxu0 0.0
    %1235 = vmatprep.subr.mxu0 0.0
    %1236 = vmatpush1.msra.mxu0 0.0
    %1237 = vmatprep.subr.mxu0 0.0
    %1238 = vmatpush1.msra.mxu0 0.0
    %1239 = vmatprep.subr.mxu0 0.0
    %1240 = vmatpush1.msra.mxu0 0.0
    %1241 = vmatprep.subr.mxu0 0.0
    %1242 = vmatpush1.msra.mxu0 0.0
    %1243 = vmatprep.subr.mxu0 0.0
    %1244 = vmatpush1.msra.mxu0 0.0
    %1245 = vmatprep.subr.mxu0 0.0
    %1246 = vmatpush1.msra.mxu0 0.0
    %1247 = vmatprep.subr.mxu0 0.0
    %1248 = vmatpush1.msra.mxu0 0.0
    %1249 = vmatprep.mubr.f32.mxu0 0.0
    %1250 = vmatmul.mubr.f32.gmra.mrb[0].mxu0 %v1183
    %v1251 = vpop.f32.mrb[0].mxu0
    %v1252 = vadd.f32 %v540, %v1251
    %v1253 = vpop.f32.mrb[0].mxu0
    %1254 = vdwg.mxu0
    %v1255 = vxor.u32 %v1252, 2147483648
    %v1256 = vmul.f32 %v1255, 1.442695
    %v1257 = vpow.pop %v1256
    %v1258 = vadd.f32 %v1257, 1.0
    %v1259 = vrcp.pop %v1258
    %v1260 = vmul.f32 1.0, %v1259
    %v1261 = vtanh.pop %v1252
    %v1262 = vmul.f32 %v1260, %v1058
    %1264 = vrot.lane.b32.xlu0 %v1261, 32
    %v1265 = vpop.permute.xlu0 %1264
    %v1267 = vmul.f32 %v1260, %v1265
    %1269 = vrot.lane.b32.xlu0 %v1267, 32
    %v1270 = vpop.permute.xlu0 %1269
    %v1272 = vadd.f32 %v1262, %v1270
    %v1273 = vtanh.pop %v1272
    %1275 = vrot.lane.b32.xlu0 %v1273, 32
    %v1276 = vpop.permute.xlu0 %1275
    %v1278 = vmul.f32 %v1260, %v1276
    %v1279 = vrot.slane %v1170, 6
    %1280 = vrot.lane.b32.xlu0 %v1279, 64
    %v1281 = vpop.permute.xlu0 %1280
    %v1282 = vsel %vm432, %v1281, 0
    %1284 = vmatprep.subr.mxu0 0.0
    %1285 = vmatpush1.msra.mxu0 %v419
    %1286 = vmatprep.subr.mxu0 0.0
    %1287 = vmatpush1.msra.mxu0 %v420
    %1288 = vmatprep.subr.mxu0 0.0
    %1289 = vmatpush1.msra.mxu0 %v421
    %1290 = vmatprep.subr.mxu0 0.0
    %1291 = vmatpush1.msra.mxu0 %v422
    %1292 = vmatprep.subr.mxu0 0.0
    %1293 = vmatpush1.msra.mxu0 0.0
    %1294 = vmatprep.subr.mxu0 0.0
    %1295 = vmatpush1.msra.mxu0 0.0
    %1296 = vmatprep.subr.mxu0 0.0
    %1297 = vmatpush1.msra.mxu0 0.0
    %1298 = vmatprep.subr.mxu0 0.0
    %1299 = vmatpush1.msra.mxu0 0.0
    %1300 = vmatprep.subr.mxu0 0.0
    %1301 = vmatpush1.msra.mxu0 0.0
    %1302 = vmatprep.subr.mxu0 0.0
    %1303 = vmatpush1.msra.mxu0 0.0
    %1304 = vmatprep.subr.mxu0 0.0
    %1305 = vmatpush1.msra.mxu0 0.0
    %1306 = vmatprep.subr.mxu0 0.0
    %1307 = vmatpush1.msra.mxu0 0.0
    %1308 = vmatprep.subr.mxu0 0.0
    %1309 = vmatpush1.msra.mxu0 0.0
    %1310 = vmatprep.subr.mxu0 0.0
    %1311 = vmatpush1.msra.mxu0 0.0
    %1312 = vmatprep.subr.mxu0 0.0
    %1313 = vmatpush1.msra.mxu0 0.0
    %1314 = vmatprep.subr.mxu0 0.0
    %1315 = vmatpush1.msra.mxu0 0.0
    %1316 = vmatprep.subr.mxu0 0.0
    %1317 = vmatpush1.msra.mxu0 0.0
    %1318 = vmatprep.subr.mxu0 0.0
    %1319 = vmatpush1.msra.mxu0 0.0
    %1320 = vmatprep.subr.mxu0 0.0
    %1321 = vmatpush1.msra.mxu0 0.0
    %1322 = vmatprep.subr.mxu0 0.0
    %1323 = vmatpush1.msra.mxu0 0.0
    %1324 = vmatprep.subr.mxu0 0.0
    %1325 = vmatpush1.msra.mxu0 0.0
    %1326 = vmatprep.subr.mxu0 0.0
    %1327 = vmatpush1.msra.mxu0 0.0
    %1328 = vmatprep.subr.mxu0 0.0
    %1329 = vmatpush1.msra.mxu0 0.0
    %1330 = vmatprep.subr.mxu0 0.0
    %1331 = vmatpush1.msra.mxu0 0.0
    %1332 = vmatprep.subr.mxu0 0.0
    %1333 = vmatpush1.msra.mxu0 0.0
    %1334 = vmatprep.subr.mxu0 0.0
    %1335 = vmatpush1.msra.mxu0 0.0
    %1336 = vmatprep.subr.mxu0 0.0
    %1337 = vmatpush1.msra.mxu0 0.0
    %1338 = vmatprep.subr.mxu0 0.0
    %1339 = vmatpush1.msra.mxu0 0.0
    %1340 = vmatprep.subr.mxu0 0.0
    %1341 = vmatpush1.msra.mxu0 0.0
    %1342 = vmatprep.subr.mxu0 0.0
    %1343 = vmatpush1.msra.mxu0 0.0
    %1344 = vmatprep.subr.mxu0 0.0
    %1345 = vmatpush1.msra.mxu0 0.0
    %1346 = vmatprep.subr.mxu0 0.0
    %1347 = vmatpush1.msra.mxu0 0.0
    %1348 = vmatprep.mubr.f32.mxu0 0.0
    %1349 = vmatmul.mubr.f32.gmra.mrb[0].mxu0 %v1282
    %v1350 = vpop.f32.mrb[0].mxu0
    %v1351 = vadd.f32 0.0, %v1350
    %v1352 = vpop.f32.mrb[0].mxu0
    %1353 = vdwg.mxu0
    %v1354 = vadd.f32 %v418, %v1351
    %v1355 = vxor.u32 %v1354, 2147483648
    %v1356 = vmul.f32 %v1355, 1.442695
    %v1357 = vpow.pop %v1356
    %v1358 = vadd.f32 %v1357, 1.0
    %v1359 = vrcp.pop %v1358
    %v1360 = vmul.f32 1.0, %v1359
    %v1361 = vtanh.pop %v1354
    %v1363 = vrot.slane %v1164, 6
    %v1365 = vmul.f32 %v1360, %v1363
    %1367 = vrot.lane.b32.xlu0 %v1361, 32
    %v1368 = vpop.permute.xlu0 %1367
    %v1370 = vmul.f32 %v1360, %v1368
    %1372 = vrot.lane.b32.xlu0 %v1370, 32
    %v1373 = vpop.permute.xlu0 %1372
    %v1375 = vadd.f32 %v1365, %v1373
    %v1376 = vtanh.pop %v1375
    %1378 = vrot.lane.b32.xlu0 %v1376, 32
    %v1379 = vpop.permute.xlu0 %1378
    %v1381 = vmul.f32 %v1360, %v1379
    %1383 = vrot.lane.b32.xlu0 %v1381, 64
    %v1384 = vpop.permute.xlu0 %1383
    %1387 = vrot.lane.b32.xlu0 %v1278, 96
    %v1388 = vpop.permute.xlu0 %1387
    %v1390 = vsel %vm432, %v1384, %v1388
    %v1392 = vsel %vm542, %v1390, 0
    %1394 = vmatprep.subr.mxu0 0.0
    %1395 = vmatpush1.msra.mxu0 %v423
    %1396 = vmatprep.subr.mxu0 0.0
    %1397 = vmatpush1.msra.mxu0 %v424
    %1398 = vmatprep.subr.mxu0 0.0
    %1399 = vmatpush1.msra.mxu0 %v425
    %1400 = vmatprep.subr.mxu0 0.0
    %1401 = vmatpush1.msra.mxu0 %v426
    %1402 = vmatprep.subr.mxu0 0.0
    %1403 = vmatpush1.msra.mxu0 %v427
    %1404 = vmatprep.subr.mxu0 0.0
    %1405 = vmatpush1.msra.mxu0 %v428
    %1406 = vmatprep.subr.mxu0 0.0
    %1407 = vmatpush1.msra.mxu0 %v429
    %1408 = vmatprep.subr.mxu0 0.0
    %1409 = vmatpush1.msra.mxu0 %v430
    %1410 = vmatprep.subr.mxu0 0.0
    %1411 = vmatpush1.msra.mxu0 0.0
    %1412 = vmatprep.subr.mxu0 0.0
    %1413 = vmatpush1.msra.mxu0 0.0
    %1414 = vmatprep.subr.mxu0 0.0
    %1415 = vmatpush1.msra.mxu0 0.0
    %1416 = vmatprep.subr.mxu0 0.0
    %1417 = vmatpush1.msra.mxu0 0.0
    %1418 = vmatprep.subr.mxu0 0.0
    %1419 = vmatpush1.msra.mxu0 0.0
    %1420 = vmatprep.subr.mxu0 0.0
    %1421 = vmatpush1.msra.mxu0 0.0
    %1422 = vmatprep.subr.mxu0 0.0
    %1423 = vmatpush1.msra.mxu0 0.0
    %1424 = vmatprep.subr.mxu0 0.0
    %1425 = vmatpush1.msra.mxu0 0.0
    %1426 = vmatprep.subr.mxu0 0.0
    %1427 = vmatpush1.msra.mxu0 0.0
    %1428 = vmatprep.subr.mxu0 0.0
    %1429 = vmatpush1.msra.mxu0 0.0
    %1430 = vmatprep.subr.mxu0 0.0
    %1431 = vmatpush1.msra.mxu0 0.0
    %1432 = vmatprep.subr.mxu0 0.0
    %1433 = vmatpush1.msra.mxu0 0.0
    %1434 = vmatprep.subr.mxu0 0.0
    %1435 = vmatpush1.msra.mxu0 0.0
    %1436 = vmatprep.subr.mxu0 0.0
    %1437 = vmatpush1.msra.mxu0 0.0
    %1438 = vmatprep.subr.mxu0 0.0
    %1439 = vmatpush1.msra.mxu0 0.0
    %1440 = vmatprep.subr.mxu0 0.0
    %1441 = vmatpush1.msra.mxu0 0.0
    %1442 = vmatprep.subr.mxu0 0.0
    %1443 = vmatpush1.msra.mxu0 0.0
    %1444 = vmatprep.subr.mxu0 0.0
    %1445 = vmatpush1.msra.mxu0 0.0
    %1446 = vmatprep.subr.mxu0 0.0
    %1447 = vmatpush1.msra.mxu0 0.0
    %1448 = vmatprep.subr.mxu0 0.0
    %1449 = vmatpush1.msra.mxu0 0.0
    %1450 = vmatprep.subr.mxu0 0.0
    %1451 = vmatpush1.msra.mxu0 0.0
    %1452 = vmatprep.subr.mxu0 0.0
    %1453 = vmatpush1.msra.mxu0 0.0
    %1454 = vmatprep.subr.mxu0 0.0
    %1455 = vmatpush1.msra.mxu0 0.0
    %1456 = vmatprep.subr.mxu0 0.0
    %1457 = vmatpush1.msra.mxu0 0.0
    %1458 = vmatprep.mubr.f32.mxu0 0.0
    %1459 = vmatmul.mubr.f32.gmra.mrb[0].mxu0 %v1392
    %v1460 = vpop.f32.mrb[0].mxu0
    %v1461 = vadd.f32 %v540, %v1460
    %v1462 = vpop.f32.mrb[0].mxu0
    %1463 = vdwg.mxu0
    %v1464 = vxor.u32 %v1461, 2147483648
    %v1465 = vmul.f32 %v1464, 1.442695
    %v1466 = vpow.pop %v1465
    %v1467 = vadd.f32 %v1466, 1.0
    %v1468 = vrcp.pop %v1467
    %v1469 = vmul.f32 1.0, %v1468
    %v1470 = vtanh.pop %v1461
    %v1471 = vmul.f32 %v1469, %v1272
    %1473 = vrot.lane.b32.xlu0 %v1470, 32
    %v1474 = vpop.permute.xlu0 %1473
    %v1476 = vmul.f32 %v1469, %v1474
    %1478 = vrot.lane.b32.xlu0 %v1476, 32
    %v1479 = vpop.permute.xlu0 %1478
    %v1481 = vadd.f32 %v1471, %v1479
    %v1482 = vtanh.pop %v1481
    %1484 = vrot.lane.b32.xlu0 %v1482, 32
    %v1485 = vpop.permute.xlu0 %1484
    %v1487 = vmul.f32 %v1469, %v1485
    %v1488 = vsel %vm432, %v1384, 0
    %1490 = vmatprep.subr.mxu0 0.0
    %1491 = vmatpush1.msra.mxu0 %v419
    %1492 = vmatprep.subr.mxu0 0.0
    %1493 = vmatpush1.msra.mxu0 %v420
    %1494 = vmatprep.subr.mxu0 0.0
    %1495 = vmatpush1.msra.mxu0 %v421
    %1496 = vmatprep.subr.mxu0 0.0
    %1497 = vmatpush1.msra.mxu0 %v422
    %1498 = vmatprep.subr.mxu0 0.0
    %1499 = vmatpush1.msra.mxu0 0.0
    %1500 = vmatprep.subr.mxu0 0.0
    %1501 = vmatpush1.msra.mxu0 0.0
    %1502 = vmatprep.subr.mxu0 0.0
    %1503 = vmatpush1.msra.mxu0 0.0
    %1504 = vmatprep.subr.mxu0 0.0
    %1505 = vmatpush1.msra.mxu0 0.0
    %1506 = vmatprep.subr.mxu0 0.0
    %1507 = vmatpush1.msra.mxu0 0.0
    %1508 = vmatprep.subr.mxu0 0.0
    %1509 = vmatpush1.msra.mxu0 0.0
    %1510 = vmatprep.subr.mxu0 0.0
    %1511 = vmatpush1.msra.mxu0 0.0
    %1512 = vmatprep.subr.mxu0 0.0
    %1513 = vmatpush1.msra.mxu0 0.0
    %1514 = vmatprep.subr.mxu0 0.0
    %1515 = vmatpush1.msra.mxu0 0.0
    %1516 = vmatprep.subr.mxu0 0.0
    %1517 = vmatpush1.msra.mxu0 0.0
    %1518 = vmatprep.subr.mxu0 0.0
    %1519 = vmatpush1.msra.mxu0 0.0
    %1520 = vmatprep.subr.mxu0 0.0
    %1521 = vmatpush1.msra.mxu0 0.0
    %1522 = vmatprep.subr.mxu0 0.0
    %1523 = vmatpush1.msra.mxu0 0.0
    %1524 = vmatprep.subr.mxu0 0.0
    %1525 = vmatpush1.msra.mxu0 0.0
    %1526 = vmatprep.subr.mxu0 0.0
    %1527 = vmatpush1.msra.mxu0 0.0
    %1528 = vmatprep.subr.mxu0 0.0
    %1529 = vmatpush1.msra.mxu0 0.0
    %1530 = vmatprep.subr.mxu0 0.0
    %1531 = vmatpush1.msra.mxu0 0.0
    %1532 = vmatprep.subr.mxu0 0.0
    %1533 = vmatpush1.msra.mxu0 0.0
    %1534 = vmatprep.subr.mxu0 0.0
    %1535 = vmatpush1.msra.mxu0 0.0
    %1536 = vmatprep.subr.mxu0 0.0
    %1537 = vmatpush1.msra.mxu0 0.0
    %1538 = vmatprep.subr.mxu0 0.0
    %1539 = vmatpush1.msra.mxu0 0.0
    %1540 = vmatprep.subr.mxu0 0.0
    %1541 = vmatpush1.msra.mxu0 0.0
    %1542 = vmatprep.subr.mxu0 0.0
    %1543 = vmatpush1.msra.mxu0 0.0
    %1544 = vmatprep.subr.mxu0 0.0
    %1545 = vmatpush1.msra.mxu0 0.0
    %1546 = vmatprep.subr.mxu0 0.0
    %1547 = vmatpush1.msra.mxu0 0.0
    %1548 = vmatprep.subr.mxu0 0.0
    %1549 = vmatpush1.msra.mxu0 0.0
    %1550 = vmatprep.subr.mxu0 0.0
    %1551 = vmatpush1.msra.mxu0 0.0
    %1552 = vmatprep.subr.mxu0 0.0
    %1553 = vmatpush1.msra.mxu0 0.0
    %1554 = vmatprep.mubr.f32.mxu0 0.0
    %1555 = vmatmul.mubr.f32.gmra.mrb[0].mxu0 %v1488
    %v1556 = vpop.f32.mrb[0].mxu0
    %v1557 = vadd.f32 0.0, %v1556
    %v1558 = vpop.f32.mrb[0].mxu0
    %1559 = vdwg.mxu0
    %v1561 = vrot.slane %v1557, 6
    %v1563 = vadd.f32 %v418, %v1561
    %v1564 = vxor.u32 %v1563, 2147483648
    %v1565 = vmul.f32 %v1564, 1.442695
    %v1566 = vpow.pop %v1565
    %v1567 = vadd.f32 %v1566, 1.0
    %v1568 = vrcp.pop %v1567
    %v1569 = vmul.f32 1.0, %v1568
    %v1570 = vtanh.pop %v1563
    %v1572 = vrot.slane %v1375, 6
    %v1574 = vmul.f32 %v1569, %v1572
    %1576 = vrot.lane.b32.xlu0 %v1570, 32
    %v1577 = vpop.permute.xlu0 %1576
    %v1579 = vmul.f32 %v1569, %v1577
    %1581 = vrot.lane.b32.xlu0 %v1579, 32
    %v1582 = vpop.permute.xlu0 %1581
    %v1584 = vadd.f32 %v1574, %v1582
    %v1585 = vtanh.pop %v1584
    %1587 = vrot.lane.b32.xlu0 %v1585, 32
    %v1588 = vpop.permute.xlu0 %1587
    %v1590 = vmul.f32 %v1569, %v1588
    %1592 = vrot.lane.b32.xlu0 %v1590, 64
    %v1593 = vpop.permute.xlu0 %1592
    %v1596 = vrot.slane %v1487, 6
    %1597 = vrot.lane.b32.xlu0 %v1596, 96
    %v1598 = vpop.permute.xlu0 %1597
    %v1600 = vsel %vm432, %v1593, %v1598
    %v1602 = vrot.slane %v1600, 2
    %v1603 = vsel %vm542, %v1602, 0
    %1605 = vmatprep.subr.mxu0 0.0
    %1606 = vmatpush1.msra.mxu0 %v423
    %1607 = vmatprep.subr.mxu0 0.0
    %1608 = vmatpush1.msra.mxu0 %v424
    %1609 = vmatprep.subr.mxu0 0.0
    %1610 = vmatpush1.msra.mxu0 %v425
    %1611 = vmatprep.subr.mxu0 0.0
    %1612 = vmatpush1.msra.mxu0 %v426
    %1613 = vmatprep.subr.mxu0 0.0
    %1614 = vmatpush1.msra.mxu0 %v427
    %1615 = vmatprep.subr.mxu0 0.0
    %1616 = vmatpush1.msra.mxu0 %v428
    %1617 = vmatprep.subr.mxu0 0.0
    %1618 = vmatpush1.msra.mxu0 %v429
    %1619 = vmatprep.subr.mxu0 0.0
    %1620 = vmatpush1.msra.mxu0 %v430
    %1621 = vmatprep.subr.mxu0 0.0
    %1622 = vmatpush1.msra.mxu0 0.0
    %1623 = vmatprep.subr.mxu0 0.0
    %1624 = vmatpush1.msra.mxu0 0.0
    %1625 = vmatprep.subr.mxu0 0.0
    %1626 = vmatpush1.msra.mxu0 0.0
    %1627 = vmatprep.subr.mxu0 0.0
    %1628 = vmatpush1.msra.mxu0 0.0
    %1629 = vmatprep.subr.mxu0 0.0
    %1630 = vmatpush1.msra.mxu0 0.0
    %1631 = vmatprep.subr.mxu0 0.0
    %1632 = vmatpush1.msra.mxu0 0.0
    %1633 = vmatprep.subr.mxu0 0.0
    %1634 = vmatpush1.msra.mxu0 0.0
    %1635 = vmatprep.subr.mxu0 0.0
    %1636 = vmatpush1.msra.mxu0 0.0
    %1637 = vmatprep.subr.mxu0 0.0
    %1638 = vmatpush1.msra.mxu0 0.0
    %1639 = vmatprep.subr.mxu0 0.0
    %1640 = vmatpush1.msra.mxu0 0.0
    %1641 = vmatprep.subr.mxu0 0.0
    %1642 = vmatpush1.msra.mxu0 0.0
    %1643 = vmatprep.subr.mxu0 0.0
    %1644 = vmatpush1.msra.mxu0 0.0
    %1645 = vmatprep.subr.mxu0 0.0
    %1646 = vmatpush1.msra.mxu0 0.0
    %1647 = vmatprep.subr.mxu0 0.0
    %1648 = vmatpush1.msra.mxu0 0.0
    %1649 = vmatprep.subr.mxu0 0.0
    %1650 = vmatpush1.msra.mxu0 0.0
    %1651 = vmatprep.subr.mxu0 0.0
    %1652 = vmatpush1.msra.mxu0 0.0
    %1653 = vmatprep.subr.mxu0 0.0
    %1654 = vmatpush1.msra.mxu0 0.0
    %1655 = vmatprep.subr.mxu0 0.0
    %1656 = vmatpush1.msra.mxu0 0.0
    %1657 = vmatprep.subr.mxu0 0.0
    %1658 = vmatpush1.msra.mxu0 0.0
    %1659 = vmatprep.subr.mxu0 0.0
    %1660 = vmatpush1.msra.mxu0 0.0
    %1661 = vmatprep.subr.mxu0 0.0
    %1662 = vmatpush1.msra.mxu0 0.0
    %1663 = vmatprep.subr.mxu0 0.0
    %1664 = vmatpush1.msra.mxu0 0.0
    %1665 = vmatprep.subr.mxu0 0.0
    %1666 = vmatpush1.msra.mxu0 0.0
    %1667 = vmatprep.subr.mxu0 0.0
    %1668 = vmatpush1.msra.mxu0 0.0
    %1669 = vmatprep.mubr.f32.mxu0 0.0
    %1670 = vmatmul.mubr.f32.gmra.mrb[0].mxu0 %v1603
    %v1671 = vpop.f32.mrb[0].mxu0
    %v1672 = vadd.f32 %v540, %v1671
    %v1673 = vpop.f32.mrb[0].mxu0
    %1674 = vdwg.mxu0
    %v1675 = vxor.u32 %v1672, 2147483648
    %v1676 = vmul.f32 %v1675, 1.442695
    %v1677 = vpow.pop %v1676
    %v1678 = vadd.f32 %v1677, 1.0
    %v1679 = vrcp.pop %v1678
    %v1680 = vmul.f32 1.0, %v1679
    %v1681 = vtanh.pop %v1672
    %v1682 = vmul.f32 %v1680, %v1481
    %1684 = vrot.lane.b32.xlu0 %v1681, 32
    %v1685 = vpop.permute.xlu0 %1684
    %v1687 = vmul.f32 %v1680, %v1685
    %1689 = vrot.lane.b32.xlu0 %v1687, 32
    %v1690 = vpop.permute.xlu0 %1689
    %v1692 = vadd.f32 %v1682, %v1690
    %v1693 = vtanh.pop %v1692
    %1695 = vrot.lane.b32.xlu0 %v1693, 32
    %v1696 = vpop.permute.xlu0 %1695
    %v1698 = vmul.f32 %v1680, %v1696
    %v1699 = vrot.slane %v1590, 2
    %1700 = vrot.lane.b32.xlu0 %v1699, 64
    %v1701 = vpop.permute.xlu0 %1700
    %v1702 = vsel %vm432, %v1701, 0
    %1704 = vmatprep.subr.mxu0 0.0
    %1705 = vmatpush1.msra.mxu0 %v419
    %1706 = vmatprep.subr.mxu0 0.0
    %1707 = vmatpush1.msra.mxu0 %v420
    %1708 = vmatprep.subr.mxu0 0.0
    %1709 = vmatpush1.msra.mxu0 %v421
    %1710 = vmatprep.subr.mxu0 0.0
    %1711 = vmatpush1.msra.mxu0 %v422
    %1712 = vmatprep.subr.mxu0 0.0
    %1713 = vmatpush1.msra.mxu0 0.0
    %1714 = vmatprep.subr.mxu0 0.0
    %1715 = vmatpush1.msra.mxu0 0.0
    %1716 = vmatprep.subr.mxu0 0.0
    %1717 = vmatpush1.msra.mxu0 0.0
    %1718 = vmatprep.subr.mxu0 0.0
    %1719 = vmatpush1.msra.mxu0 0.0
    %1720 = vmatprep.subr.mxu0 0.0
    %1721 = vmatpush1.msra.mxu0 0.0
    %1722 = vmatprep.subr.mxu0 0.0
    %1723 = vmatpush1.msra.mxu0 0.0
    %1724 = vmatprep.subr.mxu0 0.0
    %1725 = vmatpush1.msra.mxu0 0.0
    %1726 = vmatprep.subr.mxu0 0.0
    %1727 = vmatpush1.msra.mxu0 0.0
    %1728 = vmatprep.subr.mxu0 0.0
    %1729 = vmatpush1.msra.mxu0 0.0
    %1730 = vmatprep.subr.mxu0 0.0
    %1731 = vmatpush1.msra.mxu0 0.0
    %1732 = vmatprep.subr.mxu0 0.0
    %1733 = vmatpush1.msra.mxu0 0.0
    %1734 = vmatprep.subr.mxu0 0.0
    %1735 = vmatpush1.msra.mxu0 0.0
    %1736 = vmatprep.subr.mxu0 0.0
    %1737 = vmatpush1.msra.mxu0 0.0
    %1738 = vmatprep.subr.mxu0 0.0
    %1739 = vmatpush1.msra.mxu0 0.0
    %1740 = vmatprep.subr.mxu0 0.0
    %1741 = vmatpush1.msra.mxu0 0.0
    %1742 = vmatprep.subr.mxu0 0.0
    %1743 = vmatpush1.msra.mxu0 0.0
    %1744 = vmatprep.subr.mxu0 0.0
    %1745 = vmatpush1.msra.mxu0 0.0
    %1746 = vmatprep.subr.mxu0 0.0
    %1747 = vmatpush1.msra.mxu0 0.0
    %1748 = vmatprep.subr.mxu0 0.0
    %1749 = vmatpush1.msra.mxu0 0.0
    %1750 = vmatprep.subr.mxu0 0.0
    %1751 = vmatpush1.msra.mxu0 0.0
    %1752 = vmatprep.subr.mxu0 0.0
    %1753 = vmatpush1.msra.mxu0 0.0
    %1754 = vmatprep.subr.mxu0 0.0
    %1755 = vmatpush1.msra.mxu0 0.0
    %1756 = vmatprep.subr.mxu0 0.0
    %1757 = vmatpush1.msra.mxu0 0.0
    %1758 = vmatprep.subr.mxu0 0.0
    %1759 = vmatpush1.msra.mxu0 0.0
    %1760 = vmatprep.subr.mxu0 0.0
    %1761 = vmatpush1.msra.mxu0 0.0
    %1762 = vmatprep.subr.mxu0 0.0
    %1763 = vmatpush1.msra.mxu0 0.0
    %1764 = vmatprep.subr.mxu0 0.0
    %1765 = vmatpush1.msra.mxu0 0.0
    %1766 = vmatprep.subr.mxu0 0.0
    %1767 = vmatpush1.msra.mxu0 0.0
    %1768 = vmatprep.mubr.f32.mxu0 0.0
    %1769 = vmatmul.mubr.f32.gmra.mrb[0].mxu0 %v1702
    %v1770 = vpop.f32.mrb[0].mxu0
    %v1771 = vadd.f32 0.0, %v1770
    %v1772 = vpop.f32.mrb[0].mxu0
    %1773 = vdwg.mxu0
    %v1775 = vrot.slane %v1771, 4
    %v1777 = vadd.f32 %v418, %v1775
    %v1778 = vxor.u32 %v1777, 2147483648
    %v1779 = vmul.f32 %v1778, 1.442695
    %v1780 = vpow.pop %v1779
    %v1781 = vadd.f32 %v1780, 1.0
    %v1782 = vrcp.pop %v1781
    %v1783 = vmul.f32 1.0, %v1782
    %v1784 = vtanh.pop %v1777
    %v1786 = vrot.slane %v1584, 6
    %v1788 = vmul.f32 %v1783, %v1786
    %1790 = vrot.lane.b32.xlu0 %v1784, 32
    %v1791 = vpop.permute.xlu0 %1790
    %v1793 = vmul.f32 %v1783, %v1791
    %1795 = vrot.lane.b32.xlu0 %v1793, 32
    %v1796 = vpop.permute.xlu0 %1795
    %v1798 = vadd.f32 %v1788, %v1796
    %v1799 = vtanh.pop %v1798
    %1801 = vrot.lane.b32.xlu0 %v1799, 32
    %v1802 = vpop.permute.xlu0 %1801
    %v1804 = vmul.f32 %v1783, %v1802
    %1806 = vrot.lane.b32.xlu0 %v1804, 64
    %v1807 = vpop.permute.xlu0 %1806
    %v1810 = vrot.slane %v1698, 4
    %1811 = vrot.lane.b32.xlu0 %v1810, 96
    %v1812 = vpop.permute.xlu0 %1811
    %v1814 = vsel %vm432, %v1807, %v1812
    %v1816 = vrot.slane %v1814, 4
    %v1817 = vsel %vm542, %v1816, 0
    %1819 = vmatprep.subr.mxu0 0.0
    %1820 = vmatpush1.msra.mxu0 %v423
    %1821 = vmatprep.subr.mxu0 0.0
    %1822 = vmatpush1.msra.mxu0 %v424
    %1823 = vmatprep.subr.mxu0 0.0
    %1824 = vmatpush1.msra.mxu0 %v425
    %1825 = vmatprep.subr.mxu0 0.0
    %1826 = vmatpush1.msra.mxu0 %v426
    %1827 = vmatprep.subr.mxu0 0.0
    %1828 = vmatpush1.msra.mxu0 %v427
    %1829 = vmatprep.subr.mxu0 0.0
    %1830 = vmatpush1.msra.mxu0 %v428
    %1831 = vmatprep.subr.mxu0 0.0
    %1832 = vmatpush1.msra.mxu0 %v429
    %1833 = vmatprep.subr.mxu0 0.0
    %1834 = vmatpush1.msra.mxu0 %v430
    %1835 = vmatprep.subr.mxu0 0.0
    %1836 = vmatpush1.msra.mxu0 0.0
    %1837 = vmatprep.subr.mxu0 0.0
    %1838 = vmatpush1.msra.mxu0 0.0
    %1839 = vmatprep.subr.mxu0 0.0
    %1840 = vmatpush1.msra.mxu0 0.0
    %1841 = vmatprep.subr.mxu0 0.0
    %1842 = vmatpush1.msra.mxu0 0.0
    %1843 = vmatprep.subr.mxu0 0.0
    %1844 = vmatpush1.msra.mxu0 0.0
    %1845 = vmatprep.subr.mxu0 0.0
    %1846 = vmatpush1.msra.mxu0 0.0
    %1847 = vmatprep.subr.mxu0 0.0
    %1848 = vmatpush1.msra.mxu0 0.0
    %1849 = vmatprep.subr.mxu0 0.0
    %1850 = vmatpush1.msra.mxu0 0.0
    %1851 = vmatprep.subr.mxu0 0.0
    %1852 = vmatpush1.msra.mxu0 0.0
    %1853 = vmatprep.subr.mxu0 0.0
    %1854 = vmatpush1.msra.mxu0 0.0
    %1855 = vmatprep.subr.mxu0 0.0
    %1856 = vmatpush1.msra.mxu0 0.0
    %1857 = vmatprep.subr.mxu0 0.0
    %1858 = vmatpush1.msra.mxu0 0.0
    %1859 = vmatprep.subr.mxu0 0.0
    %1860 = vmatpush1.msra.mxu0 0.0
    %1861 = vmatprep.subr.mxu0 0.0
    %1862 = vmatpush1.msra.mxu0 0.0
    %1863 = vmatprep.subr.mxu0 0.0
    %1864 = vmatpush1.msra.mxu0 0.0
    %1865 = vmatprep.subr.mxu0 0.0
    %1866 = vmatpush1.msra.mxu0 0.0
    %1867 = vmatprep.subr.mxu0 0.0
    %1868 = vmatpush1.msra.mxu0 0.0
    %1869 = vmatprep.subr.mxu0 0.0
    %1870 = vmatpush1.msra.mxu0 0.0
    %1871 = vmatprep.subr.mxu0 0.0
    %1872 = vmatpush1.msra.mxu0 0.0
    %1873 = vmatprep.subr.mxu0 0.0
    %1874 = vmatpush1.msra.mxu0 0.0
    %1875 = vmatprep.subr.mxu0 0.0
    %1876 = vmatpush1.msra.mxu0 0.0
    %1877 = vmatprep.subr.mxu0 0.0
    %1878 = vmatpush1.msra.mxu0 0.0
    %1879 = vmatprep.subr.mxu0 0.0
    %1880 = vmatpush1.msra.mxu0 0.0
    %1881 = vmatprep.subr.mxu0 0.0
    %1882 = vmatpush1.msra.mxu0 0.0
    %1883 = vmatprep.mubr.f32.mxu0 0.0
    %1884 = vmatmul.mubr.f32.gmra.mrb[0].mxu0 %v1817
    %v1885 = vpop.f32.mrb[0].mxu0
    %v1886 = vadd.f32 %v540, %v1885
    %v1887 = vpop.f32.mrb[0].mxu0
    %1888 = vdwg.mxu0
    %v1889 = vxor.u32 %v1886, 2147483648
    %v1890 = vmul.f32 %v1889, 1.442695
    %v1891 = vpow.pop %v1890
    %v1892 = vadd.f32 %v1891, 1.0
    %v1893 = vrcp.pop %v1892
    %v1894 = vmul.f32 1.0, %v1893
    %v1895 = vtanh.pop %v1886
    %v1896 = vmul.f32 %v1894, %v1692
    %1898 = vrot.lane.b32.xlu0 %v1895, 32
    %v1899 = vpop.permute.xlu0 %1898
    %v1901 = vmul.f32 %v1894, %v1899
    %1903 = vrot.lane.b32.xlu0 %v1901, 32
    %v1904 = vpop.permute.xlu0 %1903
    %v1906 = vadd.f32 %v1896, %v1904
    %v1907 = vtanh.pop %v1906
    %1909 = vrot.lane.b32.xlu0 %v1907, 32
    %v1910 = vpop.permute.xlu0 %1909
    %v1912 = vmul.f32 %v1894, %v1910
    %v1913 = vrot.slane %v1804, 4
    %1914 = vrot.lane.b32.xlu0 %v1913, 64
    %v1915 = vpop.permute.xlu0 %1914
    %v1916 = vsel %vm432, %v1915, 0
    %1918 = vmatprep.subr.mxu0 0.0
    %1919 = vmatpush1.msra.mxu0 %v419
    %1920 = vmatprep.subr.mxu0 0.0
    %1921 = vmatpush1.msra.mxu0 %v420
    %1922 = vmatprep.subr.mxu0 0.0
    %1923 = vmatpush1.msra.mxu0 %v421
    %1924 = vmatprep.subr.mxu0 0.0
    %1925 = vmatpush1.msra.mxu0 %v422
    %1926 = vmatprep.subr.mxu0 0.0
    %1927 = vmatpush1.msra.mxu0 0.0
    %1928 = vmatprep.subr.mxu0 0.0
    %1929 = vmatpush1.msra.mxu0 0.0
    %1930 = vmatprep.subr.mxu0 0.0
    %1931 = vmatpush1.msra.mxu0 0.0
    %1932 = vmatprep.subr.mxu0 0.0
    %1933 = vmatpush1.msra.mxu0 0.0
    %1934 = vmatprep.subr.mxu0 0.0
    %1935 = vmatpush1.msra.mxu0 0.0
    %1936 = vmatprep.subr.mxu0 0.0
    %1937 = vmatpush1.msra.mxu0 0.0
    %1938 = vmatprep.subr.mxu0 0.0
    %1939 = vmatpush1.msra.mxu0 0.0
    %1940 = vmatprep.subr.mxu0 0.0
    %1941 = vmatpush1.msra.mxu0 0.0
    %1942 = vmatprep.subr.mxu0 0.0
    %1943 = vmatpush1.msra.mxu0 0.0
    %1944 = vmatprep.subr.mxu0 0.0
    %1945 = vmatpush1.msra.mxu0 0.0
    %1946 = vmatprep.subr.mxu0 0.0
    %1947 = vmatpush1.msra.mxu0 0.0
    %1948 = vmatprep.subr.mxu0 0.0
    %1949 = vmatpush1.msra.mxu0 0.0
    %1950 = vmatprep.subr.mxu0 0.0
    %1951 = vmatpush1.msra.mxu0 0.0
    %1952 = vmatprep.subr.mxu0 0.0
    %1953 = vmatpush1.msra.mxu0 0.0
    %1954 = vmatprep.subr.mxu0 0.0
    %1955 = vmatpush1.msra.mxu0 0.0
    %1956 = vmatprep.subr.mxu0 0.0
    %1957 = vmatpush1.msra.mxu0 0.0
    %1958 = vmatprep.subr.mxu0 0.0
    %1959 = vmatpush1.msra.mxu0 0.0
    %1960 = vmatprep.subr.mxu0 0.0
    %1961 = vmatpush1.msra.mxu0 0.0
    %1962 = vmatprep.subr.mxu0 0.0
    %1963 = vmatpush1.msra.mxu0 0.0
    %1964 = vmatprep.subr.mxu0 0.0
    %1965 = vmatpush1.msra.mxu0 0.0
    %1966 = vmatprep.subr.mxu0 0.0
    %1967 = vmatpush1.msra.mxu0 0.0
    %1968 = vmatprep.subr.mxu0 0.0
    %1969 = vmatpush1.msra.mxu0 0.0
    %1970 = vmatprep.subr.mxu0 0.0
    %1971 = vmatpush1.msra.mxu0 0.0
    %1972 = vmatprep.subr.mxu0 0.0
    %1973 = vmatpush1.msra.mxu0 0.0
    %1974 = vmatprep.subr.mxu0 0.0
    %1975 = vmatpush1.msra.mxu0 0.0
    %1976 = vmatprep.subr.mxu0 0.0
    %1977 = vmatpush1.msra.mxu0 0.0
    %1978 = vmatprep.subr.mxu0 0.0
    %1979 = vmatpush1.msra.mxu0 0.0
    %1980 = vmatprep.subr.mxu0 0.0
    %1981 = vmatpush1.msra.mxu0 0.0
    %1982 = vmatprep.mubr.f32.mxu0 0.0
    %1983 = vmatmul.mubr.f32.gmra.mrb[0].mxu0 %v1916
    %v1984 = vpop.f32.mrb[0].mxu0
    %v1985 = vadd.f32 0.0, %v1984
    %v1986 = vpop.f32.mrb[0].mxu0
    %1987 = vdwg.mxu0
    %v1989 = vrot.slane %v1985, 2
    %v1991 = vadd.f32 %v418, %v1989
    %v1992 = vxor.u32 %v1991, 2147483648
    %v1993 = vmul.f32 %v1992, 1.442695
    %v1994 = vpow.pop %v1993
    %v1995 = vadd.f32 %v1994, 1.0
    %v1996 = vrcp.pop %v1995
    %v1997 = vmul.f32 1.0, %v1996
    %v1998 = vtanh.pop %v1991
    %v2000 = vrot.slane %v1798, 6
    %v2002 = vmul.f32 %v1997, %v2000
    %2004 = vrot.lane.b32.xlu0 %v1998, 32
    %v2005 = vpop.permute.xlu0 %2004
    %v2007 = vmul.f32 %v1997, %v2005
    %2009 = vrot.lane.b32.xlu0 %v2007, 32
    %v2010 = vpop.permute.xlu0 %2009
    %v2012 = vadd.f32 %v2002, %v2010
    %v2013 = vtanh.pop %v2012
    %2015 = vrot.lane.b32.xlu0 %v2013, 32
    %v2016 = vpop.permute.xlu0 %2015
    %v2018 = vmul.f32 %v1997, %v2016
    %2020 = vrot.lane.b32.xlu0 %v2018, 64
    %v2021 = vpop.permute.xlu0 %2020
    %v2024 = vrot.slane %v1912, 2
    %2025 = vrot.lane.b32.xlu0 %v2024, 96
    %v2026 = vpop.permute.xlu0 %2025
    %v2028 = vsel %vm432, %v2021, %v2026
    %v2030 = vrot.slane %v2028, 6
    %v2031 = vsel %vm542, %v2030, 0
    %2033 = vmatprep.subr.mxu0 0.0
    %2034 = vmatpush1.msra.mxu0 %v423
    %2035 = vmatprep.subr.mxu0 0.0
    %2036 = vmatpush1.msra.mxu0 %v424
    %2037 = vmatprep.subr.mxu0 0.0
    %2038 = vmatpush1.msra.mxu0 %v425
    %2039 = vmatprep.subr.mxu0 0.0
    %2040 = vmatpush1.msra.mxu0 %v426
    %2041 = vmatprep.subr.mxu0 0.0
    %2042 = vmatpush1.msra.mxu0 %v427
    %2043 = vmatprep.subr.mxu0 0.0
    %2044 = vmatpush1.msra.mxu0 %v428
    %2045 = vmatprep.subr.mxu0 0.0
    %2046 = vmatpush1.msra.mxu0 %v429
    %2047 = vmatprep.subr.mxu0 0.0
    %2048 = vmatpush1.msra.mxu0 %v430
    %2049 = vmatprep.subr.mxu0 0.0
    %2050 = vmatpush1.msra.mxu0 0.0
    %2051 = vmatprep.subr.mxu0 0.0
    %2052 = vmatpush1.msra.mxu0 0.0
    %2053 = vmatprep.subr.mxu0 0.0
    %2054 = vmatpush1.msra.mxu0 0.0
    %2055 = vmatprep.subr.mxu0 0.0
    %2056 = vmatpush1.msra.mxu0 0.0
    %2057 = vmatprep.subr.mxu0 0.0
    %2058 = vmatpush1.msra.mxu0 0.0
    %2059 = vmatprep.subr.mxu0 0.0
    %2060 = vmatpush1.msra.mxu0 0.0
    %2061 = vmatprep.subr.mxu0 0.0
    %2062 = vmatpush1.msra.mxu0 0.0
    %2063 = vmatprep.subr.mxu0 0.0
    %2064 = vmatpush1.msra.mxu0 0.0
    %2065 = vmatprep.subr.mxu0 0.0
    %2066 = vmatpush1.msra.mxu0 0.0
    %2067 = vmatprep.subr.mxu0 0.0
    %2068 = vmatpush1.msra.mxu0 0.0
    %2069 = vmatprep.subr.mxu0 0.0
    %2070 = vmatpush1.msra.mxu0 0.0
    %2071 = vmatprep.subr.mxu0 0.0
    %2072 = vmatpush1.msra.mxu0 0.0
    %2073 = vmatprep.subr.mxu0 0.0
    %2074 = vmatpush1.msra.mxu0 0.0
    %2075 = vmatprep.subr.mxu0 0.0
    %2076 = vmatpush1.msra.mxu0 0.0
    %2077 = vmatprep.subr.mxu0 0.0
    %2078 = vmatpush1.msra.mxu0 0.0
    %2079 = vmatprep.subr.mxu0 0.0
    %2080 = vmatpush1.msra.mxu0 0.0
    %2081 = vmatprep.subr.mxu0 0.0
    %2082 = vmatpush1.msra.mxu0 0.0
    %2083 = vmatprep.subr.mxu0 0.0
    %2084 = vmatpush1.msra.mxu0 0.0
    %2085 = vmatprep.subr.mxu0 0.0
    %2086 = vmatpush1.msra.mxu0 0.0
    %2087 = vmatprep.subr.mxu0 0.0
    %2088 = vmatpush1.msra.mxu0 0.0
    %2089 = vmatprep.subr.mxu0 0.0
    %2090 = vmatpush1.msra.mxu0 0.0
    %2091 = vmatprep.subr.mxu0 0.0
    %2092 = vmatpush1.msra.mxu0 0.0
    %2093 = vmatprep.subr.mxu0 0.0
    %2094 = vmatpush1.msra.mxu0 0.0
    %2095 = vmatprep.subr.mxu0 0.0
    %2096 = vmatpush1.msra.mxu0 0.0
    %2097 = vmatprep.mubr.f32.mxu0 0.0
    %2098 = vmatmul.mubr.f32.gmra.mrb[0].mxu0 %v2031
    %v2099 = vpop.f32.mrb[0].mxu0
    %v2100 = vadd.f32 %v540, %v2099
    %v2101 = vpop.f32.mrb[0].mxu0
    %2102 = vdwg.mxu0
    %v2103 = vxor.u32 %v2100, 2147483648
    %v2104 = vmul.f32 %v2103, 1.442695
    %v2105 = vpow.pop %v2104
    %v2106 = vadd.f32 %v2105, 1.0
    %v2107 = vrcp.pop %v2106
    %v2108 = vmul.f32 1.0, %v2107
    %v2109 = vtanh.pop %v2100
    %v2110 = vmul.f32 %v2108, %v1906
    %2112 = vrot.lane.b32.xlu0 %v2109, 32
    %v2113 = vpop.permute.xlu0 %2112
    %v2115 = vmul.f32 %v2108, %v2113
    %2117 = vrot.lane.b32.xlu0 %v2115, 32
    %v2118 = vpop.permute.xlu0 %2117
    %v2120 = vadd.f32 %v2110, %v2118
    %v2121 = vtanh.pop %v2120
    %2123 = vrot.lane.b32.xlu0 %v2121, 32
    %v2124 = vpop.permute.xlu0 %2123
    %v2126 = vmul.f32 %v2108, %v2124
    %v2127 = vld [vmem:[%s10] sm:$0xff]
    %v2128 = vld [vmem:[%s10 + $0x8] sm:$0xff]
    %v2129 = vld [vmem:[%s10 + $0x10] sm:$0xff]
    %v2130 = vld [vmem:[%s10 + $0x18] sm:$0xff]
    %v2131 = vld [vmem:[%s11] sm:$0x1]
    %v2133 = vlaneseq
    %v2134 = vshrl.u32 %v2133, 7
    %v2135 = vsub.s32 0, %v2134
    %v2136 = vrot.slane %v2131, %v2135
    %2139 = vrot.lane.b32.xlu0 %v2126, 64
    %v2140 = vpop.permute.xlu0 %2139
    %v2141 = vsel %vm432, %v2140, 0
    %2143 = vmatprep.subr.mxu0 0.0
    %2144 = vmatpush1.msra.mxu0 %v2127
    %2145 = vmatprep.subr.mxu0 0.0
    %2146 = vmatpush1.msra.mxu0 %v2128
    %2147 = vmatprep.subr.mxu0 0.0
    %2148 = vmatpush1.msra.mxu0 %v2129
    %2149 = vmatprep.subr.mxu0 0.0
    %2150 = vmatpush1.msra.mxu0 %v2130
    %2151 = vmatprep.subr.mxu0 0.0
    %2152 = vmatpush1.msra.mxu0 0.0
    %2153 = vmatprep.subr.mxu0 0.0
    %2154 = vmatpush1.msra.mxu0 0.0
    %2155 = vmatprep.subr.mxu0 0.0
    %2156 = vmatpush1.msra.mxu0 0.0
    %2157 = vmatprep.subr.mxu0 0.0
    %2158 = vmatpush1.msra.mxu0 0.0
    %2159 = vmatprep.subr.mxu0 0.0
    %2160 = vmatpush1.msra.mxu0 0.0
    %2161 = vmatprep.subr.mxu0 0.0
    %2162 = vmatpush1.msra.mxu0 0.0
    %2163 = vmatprep.subr.mxu0 0.0
    %2164 = vmatpush1.msra.mxu0 0.0
    %2165 = vmatprep.subr.mxu0 0.0
    %2166 = vmatpush1.msra.mxu0 0.0
    %2167 = vmatprep.subr.mxu0 0.0
    %2168 = vmatpush1.msra.mxu0 0.0
    %2169 = vmatprep.subr.mxu0 0.0
    %2170 = vmatpush1.msra.mxu0 0.0
    %2171 = vmatprep.subr.mxu0 0.0
    %2172 = vmatpush1.msra.mxu0 0.0
    %2173 = vmatprep.subr.mxu0 0.0
    %2174 = vmatpush1.msra.mxu0 0.0
    %2175 = vmatprep.subr.mxu0 0.0
    %2176 = vmatpush1.msra.mxu0 0.0
    %2177 = vmatprep.subr.mxu0 0.0
    %2178 = vmatpush1.msra.mxu0 0.0
    %2179 = vmatprep.subr.mxu0 0.0
    %2180 = vmatpush1.msra.mxu0 0.0
    %2181 = vmatprep.subr.mxu0 0.0
    %2182 = vmatpush1.msra.mxu0 0.0
    %2183 = vmatprep.subr.mxu0 0.0
    %2184 = vmatpush1.msra.mxu0 0.0
    %2185 = vmatprep.subr.mxu0 0.0
    %2186 = vmatpush1.msra.mxu0 0.0
    %2187 = vmatprep.subr.mxu0 0.0
    %2188 = vmatpush1.msra.mxu0 0.0
    %2189 = vmatprep.subr.mxu0 0.0
    %2190 = vmatpush1.msra.mxu0 0.0
    %2191 = vmatprep.subr.mxu0 0.0
    %2192 = vmatpush1.msra.mxu0 0.0
    %2193 = vmatprep.subr.mxu0 0.0
    %2194 = vmatpush1.msra.mxu0 0.0
    %2195 = vmatprep.subr.mxu0 0.0
    %2196 = vmatpush1.msra.mxu0 0.0
    %2197 = vmatprep.subr.mxu0 0.0
    %2198 = vmatpush1.msra.mxu0 0.0
    %2199 = vmatprep.subr.mxu0 0.0
    %2200 = vmatpush1.msra.mxu0 0.0
    %2201 = vmatprep.subr.mxu0 0.0
    %2202 = vmatpush1.msra.mxu0 0.0
    %2203 = vmatprep.subr.mxu0 0.0
    %2204 = vmatpush1.msra.mxu0 0.0
    %2205 = vmatprep.subr.mxu0 0.0
    %2206 = vmatpush1.msra.mxu0 0.0
    %2207 = vmatprep.mubr.f32.mxu0 0.0
    %2208 = vmatmul.mubr.f32.gmra.mrb[0].mxu0 %v2141
    %v2209 = vpop.f32.mrb[0].mxu0
    %v2210 = vadd.f32 %v2136, %v2209
    %v2211 = vpop.f32.mrb[0].mxu0
    %2212 = vdwg.mxu0
    %v2213 = vmax.f32 %v2210, 0.0
    %v2214 = vld [vmem:[%s12] sm:$0xff]
    %v2215 = vld [vmem:[%s12 + $0x8] sm:$0xff]
    %v2216 = vld [vmem:[%s12 + $0x10] sm:$0xff]
    %v2217 = vld [vmem:[%s12 + $0x18] sm:$0xff]
    %v2218 = vld [vmem:[%s12 + $0x20] sm:$0xff]
    %v2219 = vld [vmem:[%s12 + $0x28] sm:$0xff]
    %v2220 = vld [vmem:[%s12 + $0x30] sm:$0xff]
    %v2221 = vld [vmem:[%s12 + $0x38] sm:$0xff]
    %v2222 = vld [vmem:[%s13] sm:$0x1]
    %v2224 = vlaneseq
    %v2225 = vshrl.u32 %v2224, 7
    %v2226 = vsub.s32 0, %v2225
    %v2227 = vrot.slane %v2222, %v2226
    %v2230 = vsel %vm542, %v2213, 0
    %2232 = vmatprep.subr.mxu0 0.0
    %2233 = vmatpush1.msra.mxu0 %v2214
    %2234 = vmatprep.subr.mxu0 0.0
    %2235 = vmatpush1.msra.mxu0 %v2215
    %2236 = vmatprep.subr.mxu0 0.0
    %2237 = vmatpush1.msra.mxu0 %v2216
    %2238 = vmatprep.subr.mxu0 0.0
    %2239 = vmatpush1.msra.mxu0 %v2217
    %2240 = vmatprep.subr.mxu0 0.0
    %2241 = vmatpush1.msra.mxu0 %v2218
    %2242 = vmatprep.subr.mxu0 0.0
    %2243 = vmatpush1.msra.mxu0 %v2219
    %2244 = vmatprep.subr.mxu0 0.0
    %2245 = vmatpush1.msra.mxu0 %v2220
    %2246 = vmatprep.subr.mxu0 0.0
    %2247 = vmatpush1.msra.mxu0 %v2221
    %2248 = vmatprep.subr.mxu0 0.0
    %2249 = vmatpush1.msra.mxu0 0.0
    %2250 = vmatprep.subr.mxu0 0.0
    %2251 = vmatpush1.msra.mxu0 0.0
    %2252 = vmatprep.subr.mxu0 0.0
    %2253 = vmatpush1.msra.mxu0 0.0
    %2254 = vmatprep.subr.mxu0 0.0
    %2255 = vmatpush1.msra.mxu0 0.0
    %2256 = vmatprep.subr.mxu0 0.0
    %2257 = vmatpush1.msra.mxu0 0.0
    %2258 = vmatprep.subr.mxu0 0.0
    %2259 = vmatpush1.msra.mxu0 0.0
    %2260 = vmatprep.subr.mxu0 0.0
    %2261 = vmatpush1.msra.mxu0 0.0
    %2262 = vmatprep.subr.mxu0 0.0
    %2263 = vmatpush1.msra.mxu0 0.0
    %2264 = vmatprep.subr.mxu0 0.0
    %2265 = vmatpush1.msra.mxu0 0.0
    %2266 = vmatprep.subr.mxu0 0.0
    %2267 = vmatpush1.msra.mxu0 0.0
    %2268 = vmatprep.subr.mxu0 0.0
    %2269 = vmatpush1.msra.mxu0 0.0
    %2270 = vmatprep.subr.mxu0 0.0
    %2271 = vmatpush1.msra.mxu0 0.0
    %2272 = vmatprep.subr.mxu0 0.0
    %2273 = vmatpush1.msra.mxu0 0.0
    %2274 = vmatprep.subr.mxu0 0.0
    %2275 = vmatpush1.msra.mxu0 0.0
    %2276 = vmatprep.subr.mxu0 0.0
    %2277 = vmatpush1.msra.mxu0 0.0
    %2278 = vmatprep.subr.mxu0 0.0
    %2279 = vmatpush1.msra.mxu0 0.0
    %2280 = vmatprep.subr.mxu0 0.0
    %2281 = vmatpush1.msra.mxu0 0.0
    %2282 = vmatprep.subr.mxu0 0.0
    %2283 = vmatpush1.msra.mxu0 0.0
    %2284 = vmatprep.subr.mxu0 0.0
    %2285 = vmatpush1.msra.mxu0 0.0
    %2286 = vmatprep.subr.mxu0 0.0
    %2287 = vmatpush1.msra.mxu0 0.0
    %2288 = vmatprep.subr.mxu0 0.0
    %2289 = vmatpush1.msra.mxu0 0.0
    %2290 = vmatprep.subr.mxu0 0.0
    %2291 = vmatpush1.msra.mxu0 0.0
    %2292 = vmatprep.subr.mxu0 0.0
    %2293 = vmatpush1.msra.mxu0 0.0
    %2294 = vmatprep.subr.mxu0 0.0
    %2295 = vmatpush1.msra.mxu0 0.0
    %2296 = vmatprep.mubr.f32.mxu0 0.0
    %2297 = vmatmul.mubr.f32.gmra.mrb[0].mxu0 %v2230
    %v2298 = vpop.f32.mrb[0].mxu0
    %v2299 = vadd.f32 %v2227, %v2298
    %v2300 = vpop.f32.mrb[0].mxu0
    %2301 = vdwg.mxu0
    %v2302 = vld [vmem:[%s2] sm:$0x3]
    %2303 = vset.pattern.permute.xlu0 0
    %2304 = vperm.xlu0 %2303, %v2302
    %v2305 = vpop.permute.xlu0 %2304
    %vm2306 = vcmp.eq.s32.totalorder %v80, %v2305
    %v2307 = vsel %vm2306, 1, 0
    %v2308 = vcvt.s32.f32 %v2307
    %v2309 = vld [vmem:[%s14] sm:$0xff]
    %v2310 = vld [vmem:[%s14 + $0x8] sm:$0xff]
    %v2311 = vld [vmem:[%s14 + $0x10] sm:$0xf]
    %v2312 = vld [vmem:[%s3] sm:$0x3]
    %v2313 = vld [vmem:[%s15] sm:$0xff]
    %vm2314 = vcmask 64512
    %v2316 = vsel %vm2314, %v2312, 0
    %2318 = vmatprep.subr.mxu0 0.0
    %2319 = vmatpush1.msra.mxu0 %v2313
    %2320 = vmatprep.subr.mxu0 0.0
    %2321 = vmatpush1.msra.mxu0 0.0
    %2322 = vmatprep.subr.mxu0 0.0
    %2323 = vmatpush1.msra.mxu0 0.0
    %2324 = vmatprep.subr.mxu0 0.0
    %2325 = vmatpush1.msra.mxu0 0.0
    %2326 = vmatprep.subr.mxu0 0.0
    %2327 = vmatpush1.msra.mxu0 0.0
    %2328 = vmatprep.subr.mxu0 0.0
    %2329 = vmatpush1.msra.mxu0 0.0
    %2330 = vmatprep.subr.mxu0 0.0
    %2331 = vmatpush1.msra.mxu0 0.0
    %2332 = vmatprep.subr.mxu0 0.0
    %2333 = vmatpush1.msra.mxu0 0.0
    %2334 = vmatprep.subr.mxu0 0.0
    %2335 = vmatpush1.msra.mxu0 0.0
    %2336 = vmatprep.subr.mxu0 0.0
    %2337 = vmatpush1.msra.mxu0 0.0
    %2338 = vmatprep.subr.mxu0 0.0
    %2339 = vmatpush1.msra.mxu0 0.0
    %2340 = vmatprep.subr.mxu0 0.0
    %2341 = vmatpush1.msra.mxu0 0.0
    %2342 = vmatprep.subr.mxu0 0.0
    %2343 = vmatpush1.msra.mxu0 0.0
    %2344 = vmatprep.subr.mxu0 0.0
    %2345 = vmatpush1.msra.mxu0 0.0
    %2346 = vmatprep.subr.mxu0 0.0
    %2347 = vmatpush1.msra.mxu0 0.0
    %2348 = vmatprep.subr.mxu0 0.0
    %2349 = vmatpush1.msra.mxu0 0.0
    %2350 = vmatprep.subr.mxu0 0.0
    %2351 = vmatpush1.msra.mxu0 0.0
    %2352 = vmatprep.subr.mxu0 0.0
    %2353 = vmatpush1.msra.mxu0 0.0
    %2354 = vmatprep.subr.mxu0 0.0
    %2355 = vmatpush1.msra.mxu0 0.0
    %2356 = vmatprep.subr.mxu0 0.0
    %2357 = vmatpush1.msra.mxu0 0.0
    %2358 = vmatprep.subr.mxu0 0.0
    %2359 = vmatpush1.msra.mxu0 0.0
    %2360 = vmatprep.subr.mxu0 0.0
    %2361 = vmatpush1.msra.mxu0 0.0
    %2362 = vmatprep.subr.mxu0 0.0
    %2363 = vmatpush1.msra.mxu0 0.0
    %2364 = vmatprep.subr.mxu0 0.0
    %2365 = vmatpush1.msra.mxu0 0.0
    %2366 = vmatprep.subr.mxu0 0.0
    %2367 = vmatpush1.msra.mxu0 0.0
    %2368 = vmatprep.subr.mxu0 0.0
    %2369 = vmatpush1.msra.mxu0 0.0
    %2370 = vmatprep.subr.mxu0 0.0
    %2371 = vmatpush1.msra.mxu0 0.0
    %2372 = vmatprep.subr.mxu0 0.0
    %2373 = vmatpush1.msra.mxu0 0.0
    %2374 = vmatprep.subr.mxu0 0.0
    %2375 = vmatpush1.msra.mxu0 0.0
    %2376 = vmatprep.subr.mxu0 0.0
    %2377 = vmatpush1.msra.mxu0 0.0
    %2378 = vmatprep.subr.mxu0 0.0
    %2379 = vmatpush1.msra.mxu0 0.0
    %2380 = vmatprep.subr.mxu0 0.0
    %2381 = vmatpush1.msra.mxu0 0.0
    %2382 = vmatprep.mubr.f32.mxu0 0.0
    %2383 = vmatmul.mubr.f32.gmra.mrb[0].mxu0 %v2316
    %v2384 = vpop.f32.mrb[0].mxu0
    %v2385 = vadd.f32 0.0, %v2384
    %v2386 = vpop.f32.mrb[0].mxu0
    %2387 = vdwg.mxu0
    %vm2388 = vcmask 162816
    %v2390 = vsel %vm2388, %v2308, 0
    %vm2392 = vcmask 1043456
    %v2394 = vsel %vm2392, %v2311, 0
    %2396 = vmatprep.subr.mxu0 0.0
    %2397 = vmatpush1.msra.mxu0 %v2309
    %2398 = vmatprep.subr.mxu0 0.0
    %2399 = vmatpush1.msra.mxu0 %v2310
    %2400 = vmatprep.subr.mxu0 0.0
    %2401 = vmatpush1.msra.mxu0 %v2394
    %2402 = vmatprep.subr.mxu0 0.0
    %2403 = vmatpush1.msra.mxu0 0.0
    %2404 = vmatprep.subr.mxu0 0.0
    %2405 = vmatpush1.msra.mxu0 0.0
    %2406 = vmatprep.subr.mxu0 0.0
    %2407 = vmatpush1.msra.mxu0 0.0
    %2408 = vmatprep.subr.mxu0 0.0
    %2409 = vmatpush1.msra.mxu0 0.0
    %2410 = vmatprep.subr.mxu0 0.0
    %2411 = vmatpush1.msra.mxu0 0.0
    %2412 = vmatprep.subr.mxu0 0.0
    %2413 = vmatpush1.msra.mxu0 0.0
    %2414 = vmatprep.subr.mxu0 0.0
    %2415 = vmatpush1.msra.mxu0 0.0
    %2416 = vmatprep.subr.mxu0 0.0
    %2417 = vmatpush1.msra.mxu0 0.0
    %2418 = vmatprep.subr.mxu0 0.0
    %2419 = vmatpush1.msra.mxu0 0.0
    %2420 = vmatprep.subr.mxu0 0.0
    %2421 = vmatpush1.msra.mxu0 0.0
    %2422 = vmatprep.subr.mxu0 0.0
    %2423 = vmatpush1.msra.mxu0 0.0
    %2424 = vmatprep.subr.mxu0 0.0
    %2425 = vmatpush1.msra.mxu0 0.0
    %2426 = vmatprep.subr.mxu0 0.0
    %2427 = vmatpush1.msra.mxu0 0.0
    %2428 = vmatprep.subr.mxu0 0.0
    %2429 = vmatpush1.msra.mxu0 0.0
    %2430 = vmatprep.subr.mxu0 0.0
    %2431 = vmatpush1.msra.mxu0 0.0
    %2432 = vmatprep.subr.mxu0 0.0
    %2433 = vmatpush1.msra.mxu0 0.0
    %2434 = vmatprep.subr.mxu0 0.0
    %2435 = vmatpush1.msra.mxu0 0.0
    %2436 = vmatprep.subr.mxu0 0.0
    %2437 = vmatpush1.msra.mxu0 0.0
    %2438 = vmatprep.subr.mxu0 0.0
    %2439 = vmatpush1.msra.mxu0 0.0
    %2440 = vmatprep.subr.mxu0 0.0
    %2441 = vmatpush1.msra.mxu0 0.0
    %2442 = vmatprep.subr.mxu0 0.0
    %2443 = vmatpush1.msra.mxu0 0.0
    %2444 = vmatprep.subr.mxu0 0.0
    %2445 = vmatpush1.msra.mxu0 0.0
    %2446 = vmatprep.subr.mxu0 0.0
    %2447 = vmatpush1.msra.mxu0 0.0
    %2448 = vmatprep.subr.mxu0 0.0
    %2449 = vmatpush1.msra.mxu0 0.0
    %2450 = vmatprep.subr.mxu0 0.0
    %2451 = vmatpush1.msra.mxu0 0.0
    %2452 = vmatprep.subr.mxu0 0.0
    %2453 = vmatpush1.msra.mxu0 0.0
    %2454 = vmatprep.subr.mxu0 0.0
    %2455 = vmatpush1.msra.mxu0 0.0
    %2456 = vmatprep.subr.mxu0 0.0
    %2457 = vmatpush1.msra.mxu0 0.0
    %2458 = vmatprep.subr.mxu0 0.0
    %2459 = vmatpush1.msra.mxu0 0.0
    %2460 = vmatprep.mubr.f32.mxu0 0.0
    %2461 = vmatmul.mubr.f32.gmra.mrb[0].mxu0 %v2390
    %v2462 = vpop.f32.mrb[0].mxu0
    %v2463 = vadd.f32 %v2385, %v2462
    %v2464 = vpop.f32.mrb[0].mxu0
    %2465 = vdwg.mxu0
    %v2466 = vld [vmem:[%s16] sm:$0x1]
    %v2468 = vlaneseq
    %v2469 = vshrl.u32 %v2468, 7
    %v2470 = vsub.s32 0, %v2469
    %v2471 = vrot.slane %v2466, %v2470
    %v2473 = vadd.f32 %v2463, %v2471
    %v2474 = vmax.f32 %v2473, 0.0
    %v2475 = vld [vmem:[%s17] sm:$0xff]
    %v2476 = vld [vmem:[%s17 + $0x8] sm:$0xff]
    %v2477 = vld [vmem:[%s17 + $0x10] sm:$0xff]
    %v2478 = vld [vmem:[%s17 + $0x18] sm:$0xff]
    %v2479 = vld [vmem:[%s17 + $0x20] sm:$0xff]
    %v2480 = vld [vmem:[%s17 + $0x28] sm:$0xff]
    %v2481 = vld [vmem:[%s18] sm:$0x1]
    %v2483 = vlaneseq
    %v2484 = vshrl.u32 %v2483, 7
    %v2485 = vsub.s32 0, %v2484
    %v2486 = vrot.slane %v2481, %v2485
    %vm2488 = vcmask 392192
    %v2490 = vsel %vm2488, %v2474, 0
    %2492 = vmatprep.subr.mxu0 0.0
    %2493 = vmatpush1.msra.mxu0 %v2475
    %2494 = vmatprep.subr.mxu0 0.0
    %2495 = vmatpush1.msra.mxu0 %v2476
    %2496 = vmatprep.subr.mxu0 0.0
    %2497 = vmatpush1.msra.mxu0 %v2477
    %2498 = vmatprep.subr.mxu0 0.0
    %2499 = vmatpush1.msra.mxu0 %v2478
    %2500 = vmatprep.subr.mxu0 0.0
    %2501 = vmatpush1.msra.mxu0 %v2479
    %2502 = vmatprep.subr.mxu0 0.0
    %2503 = vmatpush1.msra.mxu0 %v2480
    %2504 = vmatprep.subr.mxu0 0.0
    %2505 = vmatpush1.msra.mxu0 0.0
    %2506 = vmatprep.subr.mxu0 0.0
    %2507 = vmatpush1.msra.mxu0 0.0
    %2508 = vmatprep.subr.mxu0 0.0
    %2509 = vmatpush1.msra.mxu0 0.0
    %2510 = vmatprep.subr.mxu0 0.0
    %2511 = vmatpush1.msra.mxu0 0.0
    %2512 = vmatprep.subr.mxu0 0.0
    %2513 = vmatpush1.msra.mxu0 0.0
    %2514 = vmatprep.subr.mxu0 0.0
    %2515 = vmatpush1.msra.mxu0 0.0
    %2516 = vmatprep.subr.mxu0 0.0
    %2517 = vmatpush1.msra.mxu0 0.0
    %2518 = vmatprep.subr.mxu0 0.0
    %2519 = vmatpush1.msra.mxu0 0.0
    %2520 = vmatprep.subr.mxu0 0.0
    %2521 = vmatpush1.msra.mxu0 0.0
    %2522 = vmatprep.subr.mxu0 0.0
    %2523 = vmatpush1.msra.mxu0 0.0
    %2524 = vmatprep.subr.mxu0 0.0
    %2525 = vmatpush1.msra.mxu0 0.0
    %2526 = vmatprep.subr.mxu0 0.0
    %2527 = vmatpush1.msra.mxu0 0.0
    %2528 = vmatprep.subr.mxu0 0.0
    %2529 = vmatpush1.msra.mxu0 0.0
    %2530 = vmatprep.subr.mxu0 0.0
    %2531 = vmatpush1.msra.mxu0 0.0
    %2532 = vmatprep.subr.mxu0 0.0
    %2533 = vmatpush1.msra.mxu0 0.0
    %2534 = vmatprep.subr.mxu0 0.0
    %2535 = vmatpush1.msra.mxu0 0.0
    %2536 = vmatprep.subr.mxu0 0.0
    %2537 = vmatpush1.msra.mxu0 0.0
    %2538 = vmatprep.subr.mxu0 0.0
    %2539 = vmatpush1.msra.mxu0 0.0
    %2540 = vmatprep.subr.mxu0 0.0
    %2541 = vmatpush1.msra.mxu0 0.0
    %2542 = vmatprep.subr.mxu0 0.0
    %2543 = vmatpush1.msra.mxu0 0.0
    %2544 = vmatprep.subr.mxu0 0.0
    %2545 = vmatpush1.msra.mxu0 0.0
    %2546 = vmatprep.subr.mxu0 0.0
    %2547 = vmatpush1.msra.mxu0 0.0
    %2548 = vmatprep.subr.mxu0 0.0
    %2549 = vmatpush1.msra.mxu0 0.0
    %2550 = vmatprep.subr.mxu0 0.0
    %2551 = vmatpush1.msra.mxu0 0.0
    %2552 = vmatprep.subr.mxu0 0.0
    %2553 = vmatpush1.msra.mxu0 0.0
    %2554 = vmatprep.subr.mxu0 0.0
    %2555 = vmatpush1.msra.mxu0 0.0
    %2556 = vmatprep.mubr.f32.mxu0 0.0
    %2557 = vmatmul.mubr.f32.gmra.mrb[0].mxu0 %v2490
    %v2558 = vpop.f32.mrb[0].mxu0
    %v2559 = vadd.f32 %v2486, %v2558
    %v2560 = vpop.f32.mrb[0].mxu0
    %2561 = vdwg.mxu0
    %v2562 = vld [vmem:[%s19] sm:$0xff]
    %v2563 = vld [vmem:[%s19 + $0x8] sm:$0xff]
    %v2564 = vld [vmem:[%s19 + $0x10] sm:$0xff]
    %v2565 = vld [vmem:[%s19 + $0x18] sm:$0xff]
    %v2566 = vld [vmem:[%s20] sm:$0xff]
    %v2567 = vld [vmem:[%s20 + $0x8] sm:$0xff]
    %v2568 = vld [vmem:[%s20 + $0x10] sm:$0xff]
    %v2569 = vld [vmem:[%s20 + $0x18] sm:$0xff]
    %v2571 = vsel %vm432, %v2299, 0
    %2573 = vmatprep.subr.mxu0 0.0
    %2574 = vmatpush1.msra.mxu0 %v2566
    %2575 = vmatprep.subr.mxu0 0.0
    %2576 = vmatpush1.msra.mxu0 %v2567
    %2577 = vmatprep.subr.mxu0 0.0
    %2578 = vmatpush1.msra.mxu0 %v2568
    %2579 = vmatprep.subr.mxu0 0.0
    %2580 = vmatpush1.msra.mxu0 %v2569
    %2581 = vmatprep.subr.mxu0 0.0
    %2582 = vmatpush1.msra.mxu0 0.0
    %2583 = vmatprep.subr.mxu0 0.0
    %2584 = vmatpush1.msra.mxu0 0.0
    %2585 = vmatprep.subr.mxu0 0.0
    %2586 = vmatpush1.msra.mxu0 0.0
    %2587 = vmatprep.subr.mxu0 0.0
    %2588 = vmatpush1.msra.mxu0 0.0
    %2589 = vmatprep.subr.mxu0 0.0
    %2590 = vmatpush1.msra.mxu0 0.0
    %2591 = vmatprep.subr.mxu0 0.0
    %2592 = vmatpush1.msra.mxu0 0.0
    %2593 = vmatprep.subr.mxu0 0.0
    %2594 = vmatpush1.msra.mxu0 0.0
    %2595 = vmatprep.subr.mxu0 0.0
    %2596 = vmatpush1.msra.mxu0 0.0
    %2597 = vmatprep.subr.mxu0 0.0
    %2598 = vmatpush1.msra.mxu0 0.0
    %2599 = vmatprep.subr.mxu0 0.0
    %2600 = vmatpush1.msra.mxu0 0.0
    %2601 = vmatprep.subr.mxu0 0.0
    %2602 = vmatpush1.msra.mxu0 0.0
    %2603 = vmatprep.subr.mxu0 0.0
    %2604 = vmatpush1.msra.mxu0 0.0
    %2605 = vmatprep.subr.mxu0 0.0
    %2606 = vmatpush1.msra.mxu0 0.0
    %2607 = vmatprep.subr.mxu0 0.0
    %2608 = vmatpush1.msra.mxu0 0.0
    %2609 = vmatprep.subr.mxu0 0.0
    %2610 = vmatpush1.msra.mxu0 0.0
    %2611 = vmatprep.subr.mxu0 0.0
    %2612 = vmatpush1.msra.mxu0 0.0
    %2613 = vmatprep.subr.mxu0 0.0
    %2614 = vmatpush1.msra.mxu0 0.0
    %2615 = vmatprep.subr.mxu0 0.0
    %2616 = vmatpush1.msra.mxu0 0.0
    %2617 = vmatprep.subr.mxu0 0.0
    %2618 = vmatpush1.msra.mxu0 0.0
    %2619 = vmatprep.subr.mxu0 0.0
    %2620 = vmatpush1.msra.mxu0 0.0
    %2621 = vmatprep.subr.mxu0 0.0
    %2622 = vmatpush1.msra.mxu0 0.0
    %2623 = vmatprep.subr.mxu0 0.0
    %2624 = vmatpush1.msra.mxu0 0.0
    %2625 = vmatprep.subr.mxu0 0.0
    %2626 = vmatpush1.msra.mxu0 0.0
    %2627 = vmatprep.subr.mxu0 0.0
    %2628 = vmatpush1.msra.mxu0 0.0
    %2629 = vmatprep.subr.mxu0 0.0
    %2630 = vmatpush1.msra.mxu0 0.0
    %2631 = vmatprep.subr.mxu0 0.0
    %2632 = vmatpush1.msra.mxu0 0.0
    %2633 = vmatprep.subr.mxu0 0.0
    %2634 = vmatpush1.msra.mxu0 0.0
    %2635 = vmatprep.subr.mxu0 0.0
    %2636 = vmatpush1.msra.mxu0 0.0
    %2637 = vmatprep.mubr.f32.mxu0 0.0
    %2638 = vmatmul.mubr.f32.gmra.mrb[0].mxu0 %v2571
    %v2639 = vpop.f32.mrb[0].mxu0
    %v2640 = vadd.f32 0.0, %v2639
    %v2641 = vpop.f32.mrb[0].mxu0
    %2642 = vdwg.mxu0
    %v2644 = vsel %vm432, %v2559, 0
    %2646 = vmatprep.subr.mxu0 0.0
    %2647 = vmatpush1.msra.mxu0 %v2562
    %2648 = vmatprep.subr.mxu0 0.0
    %2649 = vmatpush1.msra.mxu0 %v2563
    %2650 = vmatprep.subr.mxu0 0.0
    %2651 = vmatpush1.msra.mxu0 %v2564
    %2652 = vmatprep.subr.mxu0 0.0
    %2653 = vmatpush1.msra.mxu0 %v2565
    %2654 = vmatprep.subr.mxu0 0.0
    %2655 = vmatpush1.msra.mxu0 0.0
    %2656 = vmatprep.subr.mxu0 0.0
    %2657 = vmatpush1.msra.mxu0 0.0
    %2658 = vmatprep.subr.mxu0 0.0
    %2659 = vmatpush1.msra.mxu0 0.0
    %2660 = vmatprep.subr.mxu0 0.0
    %2661 = vmatpush1.msra.mxu0 0.0
    %2662 = vmatprep.subr.mxu0 0.0
    %2663 = vmatpush1.msra.mxu0 0.0
    %2664 = vmatprep.subr.mxu0 0.0
    %2665 = vmatpush1.msra.mxu0 0.0
    %2666 = vmatprep.subr.mxu0 0.0
    %2667 = vmatpush1.msra.mxu0 0.0
    %2668 = vmatprep.subr.mxu0 0.0
    %2669 = vmatpush1.msra.mxu0 0.0
    %2670 = vmatprep.subr.mxu0 0.0
    %2671 = vmatpush1.msra.mxu0 0.0
    %2672 = vmatprep.subr.mxu0 0.0
    %2673 = vmatpush1.msra.mxu0 0.0
    %2674 = vmatprep.subr.mxu0 0.0
    %2675 = vmatpush1.msra.mxu0 0.0
    %2676 = vmatprep.subr.mxu0 0.0
    %2677 = vmatpush1.msra.mxu0 0.0
    %2678 = vmatprep.subr.mxu0 0.0
    %2679 = vmatpush1.msra.mxu0 0.0
    %2680 = vmatprep.subr.mxu0 0.0
    %2681 = vmatpush1.msra.mxu0 0.0
    %2682 = vmatprep.subr.mxu0 0.0
    %2683 = vmatpush1.msra.mxu0 0.0
    %2684 = vmatprep.subr.mxu0 0.0
    %2685 = vmatpush1.msra.mxu0 0.0
    %2686 = vmatprep.subr.mxu0 0.0
    %2687 = vmatpush1.msra.mxu0 0.0
    %2688 = vmatprep.subr.mxu0 0.0
    %2689 = vmatpush1.msra.mxu0 0.0
    %2690 = vmatprep.subr.mxu0 0.0
    %2691 = vmatpush1.msra.mxu0 0.0
    %2692 = vmatprep.subr.mxu0 0.0
    %2693 = vmatpush1.msra.mxu0 0.0
    %2694 = vmatprep.subr.mxu0 0.0
    %2695 = vmatpush1.msra.mxu0 0.0
    %2696 = vmatprep.subr.mxu0 0.0
    %2697 = vmatpush1.msra.mxu0 0.0
    %2698 = vmatprep.subr.mxu0 0.0
    %2699 = vmatpush1.msra.mxu0 0.0
    %2700 = vmatprep.subr.mxu0 0.0
    %2701 = vmatpush1.msra.mxu0 0.0
    %2702 = vmatprep.subr.mxu0 0.0
    %2703 = vmatpush1.msra.mxu0 0.0
    %2704 = vmatprep.subr.mxu0 0.0
    %2705 = vmatpush1.msra.mxu0 0.0
    %2706 = vmatprep.subr.mxu0 0.0
    %2707 = vmatpush1.msra.mxu0 0.0
    %2708 = vmatprep.subr.mxu0 0.0
    %2709 = vmatpush1.msra.mxu0 0.0
    %2710 = vmatprep.mubr.f32.mxu0 0.0
    %2711 = vmatmul.mubr.f32.gmra.mrb[0].mxu0 %v2644
    %v2712 = vpop.f32.mrb[0].mxu0
    %v2713 = vadd.f32 %v2640, %v2712
    %v2714 = vpop.f32.mrb[0].mxu0
    %2715 = vdwg.mxu0
    %v2716 = vld [vmem:[%s21] sm:$0x1]
    %v2718 = vlaneseq
    %v2719 = vshrl.u32 %v2718, 7
    %v2720 = vsub.s32 0, %v2719
    %v2721 = vrot.slane %v2716, %v2720
    %v2723 = vadd.f32 %v2713, %v2721
    %v2724 = vmax.f32 %v2723, 0.0
    %v2725 = vld [vmem:[%s22] sm:$0xff]
    %v2726 = vld [vmem:[%s22 + $0x8] sm:$0xff]
    %v2727 = vld [vmem:[%s22 + $0x10] sm:$0xff]
    %v2728 = vld [vmem:[%s22 + $0x18] sm:$0xff]
    %v2729 = vld [vmem:[%s22 + $0x20] sm:$0xff]
    %v2730 = vld [vmem:[%s22 + $0x28] sm:$0xff]
    %v2731 = vld [vmem:[%s22 + $0x30] sm:$0xff]
    %v2732 = vld [vmem:[%s22 + $0x38] sm:$0xff]
    %v2733 = vld [vmem:[%s22 + $0x40] sm:$0xff]
    %v2734 = vld [vmem:[%s22 + $0x48] sm:$0xff]
    %v2735 = vld [vmem:[%s22 + $0x50] sm:$0xff]
    %v2736 = vld [vmem:[%s22 + $0x58] sm:$0xff]
    %v2737 = vld [vmem:[%s22 + $0x60] sm:$0xff]
    %v2738 = vld [vmem:[%s22 + $0x68] sm:$0xff]
    %v2739 = vld [vmem:[%s22 + $0x70] sm:$0xff]
    %v2740 = vld [vmem:[%s22 + $0x78] sm:$0xff]
    %v2741 = vld [vmem:[%s23] sm:$0x1]
    %v2743 = vlaneseq
    %v2744 = vshrl.u32 %v2743, 7
    %v2745 = vsub.s32 0, %v2744
    %v2746 = vrot.slane %v2741, %v2745
    %2748 = vmatprep.subr.mxu0 0.0
    %2749 = vmatpush1.msra.mxu0 %v2725
    %2750 = vmatprep.subr.mxu0 0.0
    %2751 = vmatpush1.msra.mxu0 %v2726
    %2752 = vmatprep.subr.mxu0 0.0
    %2753 = vmatpush1.msra.mxu0 %v2727
    %2754 = vmatprep.subr.mxu0 0.0
    %2755 = vmatpush1.msra.mxu0 %v2728
    %2756 = vmatprep.subr.mxu0 0.0
    %2757 = vmatpush1.msra.mxu0 %v2729
    %2758 = vmatprep.subr.mxu0 0.0
    %2759 = vmatpush1.msra.mxu0 %v2730
    %2760 = vmatprep.subr.mxu0 0.0
    %2761 = vmatpush1.msra.mxu0 %v2731
    %2762 = vmatprep.subr.mxu0 0.0
    %2763 = vmatpush1.msra.mxu0 %v2732
    %2764 = vmatprep.subr.mxu0 0.0
    %2765 = vmatpush1.msra.mxu0 %v2733
    %2766 = vmatprep.subr.mxu0 0.0
    %2767 = vmatpush1.msra.mxu0 %v2734
    %2768 = vmatprep.subr.mxu0 0.0
    %2769 = vmatpush1.msra.mxu0 %v2735
    %2770 = vmatprep.subr.mxu0 0.0
    %2771 = vmatpush1.msra.mxu0 %v2736
    %2772 = vmatprep.subr.mxu0 0.0
    %2773 = vmatpush1.msra.mxu0 %v2737
    %2774 = vmatprep.subr.mxu0 0.0
    %2775 = vmatpush1.msra.mxu0 %v2738
    %2776 = vmatprep.subr.mxu0 0.0
    %2777 = vmatpush1.msra.mxu0 %v2739
    %2778 = vmatprep.subr.mxu0 0.0
    %2779 = vmatpush1.msra.mxu0 %v2740
    %2780 = vmatprep.subr.mxu0 0.0
    %2781 = vmatpush1.msra.mxu0 0.0
    %2782 = vmatprep.subr.mxu0 0.0
    %2783 = vmatpush1.msra.mxu0 0.0
    %2784 = vmatprep.subr.mxu0 0.0
    %2785 = vmatpush1.msra.mxu0 0.0
    %2786 = vmatprep.subr.mxu0 0.0
    %2787 = vmatpush1.msra.mxu0 0.0
    %2788 = vmatprep.subr.mxu0 0.0
    %2789 = vmatpush1.msra.mxu0 0.0
    %2790 = vmatprep.subr.mxu0 0.0
    %2791 = vmatpush1.msra.mxu0 0.0
    %2792 = vmatprep.subr.mxu0 0.0
    %2793 = vmatpush1.msra.mxu0 0.0
    %2794 = vmatprep.subr.mxu0 0.0
    %2795 = vmatpush1.msra.mxu0 0.0
    %2796 = vmatprep.subr.mxu0 0.0
    %2797 = vmatpush1.msra.mxu0 0.0
    %2798 = vmatprep.subr.mxu0 0.0
    %2799 = vmatpush1.msra.mxu0 0.0
    %2800 = vmatprep.subr.mxu0 0.0
    %2801 = vmatpush1.msra.mxu0 0.0
    %2802 = vmatprep.subr.mxu0 0.0
    %2803 = vmatpush1.msra.mxu0 0.0
    %2804 = vmatprep.subr.mxu0 0.0
    %2805 = vmatpush1.msra.mxu0 0.0
    %2806 = vmatprep.subr.mxu0 0.0
    %2807 = vmatpush1.msra.mxu0 0.0
    %2808 = vmatprep.subr.mxu0 0.0
    %2809 = vmatpush1.msra.mxu0 0.0
    %2810 = vmatprep.subr.mxu0 0.0
    %2811 = vmatpush1.msra.mxu0 0.0
    %2812 = vmatprep.mubr.f32.mxu0 0.0
    %2813 = vmatmul.mubr.f32.gmra.mrb[0].mxu0 %v2724
    %v2814 = vpop.f32.mrb[0].mxu0
    %v2815 = vadd.f32 %v2746, %v2814
    %v2816 = vpop.f32.mrb[0].mxu0
    %2817 = vdwg.mxu0
    %vm2818 = vcmask 58368
    %2819 = vst.msk [vmem:[#allocation2] sm:$0x3] %vm2818, %v2815
    // Predicated region
    $region98: #{tpu_custom_call.1} parent=1 // pred_check
      _
    $region99: #{tpu_custom_call.1} parent=1 // pred_check_branch
      %2821 = sbr.rel (0) target = $region101
    $region100: #{tpu_custom_call.1} parent=1 // pred_region
      %s2823 = ssub.s32 32, 32
      %2824 = vsyncadd [#allocation3], %s2823
      %s2826 = sshll.u32 [#allocation2], 4
      %s2827 = int_to_ptr.vmem [resolvable:$true] %s2826
      %2829 = dma.vmem_to_hbm [thread:$0]  %s2827, 32, %s24, [#allocation3]
    $region101: #{tpu_custom_call.1} parent=1 // pred_fallthru
      _
    // Predicated region
    $region102: #{tpu_custom_call.1} parent=1 // pred_check
      _
    $region103: #{tpu_custom_call.1} parent=1 // pred_check_branch
      %2831 = sbr.rel (0) target = $region105
    $region104: #{tpu_custom_call.1} parent=1 // pred_region
      %2832 = dma.done [#allocation3], 32
    $region105: #{tpu_custom_call.1} parent=1 // pred_fallthru
      _
    %2833 = vsyncpa [#allocation3], 1

</llo_original>
